<compile_context>
chip_gen: v7x
topology: tpu7x:2x2x1
jax: 0.10.0
libtpu: 0.0.40
codegen_flags: <defaults>
</compile_context>

<pallas_src>
import math
import jax
import jax.numpy as jnp
from jax import lax
from jax.experimental import pallas as pl
from jax.experimental.pallas import tpu as pltpu  # noqa: F401  (TPU backend)

# ---------------- config (small synthetic shapes consistent with the module) ----
EMB_DIM = 32          # args.embed_dim
NHEAD = 2             # args.nhead
ENC_LAYERS = 2        # args.encoder_layers
FFN_DIM = 64          # nn.TransformerEncoderLayer default is 2048; small synthetic value
VOC = (20, 16, 24)    # voc_size = (diagnoses, procedures, medications)
N_DIS = 4             # diseases per admission (fixed so the batch is rectangular)
N_PRO = 5             # procedures per admission
BATCH = 2
L_DIS = N_DIS + 1     # [CLS, d...]
L_PRO = N_PRO + 1     # [SEP, p...]
SEQ_LEN = L_DIS + L_PRO
LN_EPS = 1e-5
V_PAD = 128           # lane-dense padded width for the cls head / DDI matrix

NUM_FIXED_INPUTS = 14
PARAMS_PER_LAYER = 12


# ---------------- fused Pallas kernel --------------------------------------------

def _layer_norm(x, gamma, beta):
    mu = jnp.mean(x, axis=-1, keepdims=True)
    var = jnp.mean(jnp.square(x - mu), axis=-1, keepdims=True)
    return (x - mu) * lax.rsqrt(var + LN_EPS) * gamma + beta


def _make_fused_kernel(n_layers, n_heads):
    """Single-invocation kernel: whole forward pass, everything resident in VMEM."""

    def kernel(*refs):
        (x0_ref, dmask_ref, seg_ref,
         pdw_ref, pdb_ref, pd0_ref,
         ppw_ref, ppb_ref, pp0_ref,
         bias_ref, sel_ref, clsw_ref, clsb_ref, ddi_ref) = refs[:NUM_FIXED_INPUTS]
        layer_refs = refs[NUM_FIXED_INPUTS:NUM_FIXED_INPUTS + PARAMS_PER_LAYER * n_layers]
        res_ref, neg_ref = refs[NUM_FIXED_INPUTS + PARAMS_PER_LAYER * n_layers:]

        x0 = x0_ref[...]                                  # (B*L, D) raw token embeddings
        BL, D = x0.shape
        Dh = D // n_heads

        # --- learnable positional encoding (row-0 broadcast quirk), both encoders
        #     computed on the full slab, then selected per row (dis vs pro block).
        y_dis = jnp.maximum(
            jnp.dot(x0, pdw_ref[...], preferred_element_type=jnp.float32) + pdb_ref[...],
            0.0) + pd0_ref[...]
        y_pro = jnp.maximum(
            jnp.dot(x0, ppw_ref[...], preferred_element_type=jnp.float32) + ppb_ref[...],
            0.0) + pp0_ref[...]
        x = jnp.where(dmask_ref[...] > 0.5, y_dis, y_pro) + seg_ref[...]   # + segment emb

        attn_bias = bias_ref[...]    # (H, BL, BL): 0 within an admission, -1e9 across

        # --- transformer encoder stack (post-LN, ReLU), fully unrolled ---
        for li in range(n_layers):
            (w_in, b_in, w_o, b_o, g1, be1, w1, b1, w2, b2, g2, be2) = (
                r[...] for r in layer_refs[PARAMS_PER_LAYER * li:PARAMS_PER_LAYER * (li + 1)])

            # QKV projection on all B*L rows at once (1/sqrt(Dh) pre-folded into Q cols).
            qkv = jnp.dot(x, w_in, preferred_element_type=jnp.float32) + b_in   # (BL, 3D)
            q = jnp.stack([qkv[:, h * Dh:(h + 1) * Dh] for h in range(n_heads)], axis=0)
            k = jnp.stack([qkv[:, D + h * Dh:D + (h + 1) * Dh] for h in range(n_heads)], axis=0)
            v = jnp.stack([qkv[:, 2 * D + h * Dh:2 * D + (h + 1) * Dh] for h in range(n_heads)],
                          axis=0)                                                # (H, BL, Dh)

            # batched attention over heads; block-diagonal bias keeps admissions separate
            s = jnp.einsum('hqd,hkd->hqk', q, k, preferred_element_type=jnp.float32)
            s = s + attn_bias
            s = s - jnp.max(s, axis=-1, keepdims=True)
            p = jnp.exp(s)
            p = p * pl.reciprocal(jnp.sum(p, axis=-1, keepdims=True), approx=True)
            o = jnp.einsum('hqk,hkd->hqd', p, v, preferred_element_type=jnp.float32)
            attn = jnp.concatenate([o[h] for h in range(n_heads)], axis=-1)      # (BL, D)
            attn = jnp.dot(attn, w_o, preferred_element_type=jnp.float32) + b_o

            # residual + LN1, FFN, residual + LN2 (post-LN, ReLU)
            y = _layer_norm(x + attn, g1, be1)
            h1 = jnp.maximum(jnp.dot(y, w1, preferred_element_type=jnp.float32) + b1, 0.0)
            ff = jnp.dot(h1, w2, preferred_element_type=jnp.float32) + b2
            x = _layer_norm(y + ff, g2, be2)

        # --- CLS rows (one per admission) via a tiny selection matmul ---
        pr = jnp.dot(sel_ref[...], x, preferred_element_type=jnp.float32)        # (B, D)

        # --- cls_final (lane-dense, 128-wide padded) + DDI interaction term ---
        logits = jnp.dot(pr, clsw_ref[...], preferred_element_type=jnp.float32) + clsb_ref[...]
        res_ref[...] = logits                                                    # (B, 128)
        prob = 1.0 / (1.0 + jnp.exp(-logits))                                    # sigmoid
        # sum((prob^T prob) * ddi) == sum((prob @ ddi) * prob); padded cols/rows are zero,
        # so the 0.5-sigmoid values in padded lanes contribute nothing.
        t = jnp.dot(prob, ddi_ref[...], preferred_element_type=jnp.float32)
        neg_ref[...] = 0.0005 * jnp.sum(t * prob, keepdims=True)                 # (1, 1)

    return kernel


# ---------------- parameter init (deterministic, synthetic) ----------------------

def init_params(key):
    ks = jax.random.split(key, 48)
    it = iter(ks)

    def u(shape, a=0.1):   # uniform(-a, a) like init_weights()
        return jax.random.uniform(next(it), shape, jnp.float32, -a, a)

    def n(shape, s=0.05):  # small normal for the other weights
        return s * jax.random.normal(next(it), shape, jnp.float32)

    D = EMB_DIM
    V = VOC[2]
    params = {
        'diag_emb': u((VOC[0], D)),
        'proc_emb': u((VOC[1], D)),
        'special_emb': u((2, D)),        # [CLS, SEP]
        'segment_emb': u((2, D)),
        # LearnablePositionalEncoding (only row 0 of the position table is used)
        'pos_dis_emb0': n((1, D)),
        'pos_dis_w': n((D, D)),          # (in, out)
        'pos_dis_b': n((1, D)),
        'pos_pro_emb0': n((1, D)),
        'pos_pro_w': n((D, D)),
        'pos_pro_b': n((1, D)),
    }

    # cls_final, zero-padded to 128 output lanes (lane-dense store; padding is inert).
    cls_w = n((D, V))
    cls_b = n((1, V))
    params['cls_w_pad'] = jnp.zeros((D, V_PAD), jnp.float32).at[:, :V].set(cls_w)
    params['cls_b_pad'] = jnp.zeros((1, V_PAD), jnp.float32).at[:, :V].set(cls_b)

    scale = 1.0 / math.sqrt(D // NHEAD)
    layers = []
    for _ in range(ENC_LAYERS):
        w_in = n((D, 3 * D))                         # in_proj weight^T
        b_in = n((1, 3 * D))                         # in_proj bias
        # one-time transform: fold the 1/sqrt(Dh) attention scale into Q projection
        w_in = w_in.at[:, :D].multiply(scale)
        b_in = b_in.at[:, :D].multiply(scale)
        layers.append((
            w_in, b_in,
            n((D, D)),                               # out_proj weight^T
            n((1, D)),                               # out_proj bias
            jnp.ones((1, D), jnp.float32),           # norm1 gamma
            jnp.zeros((1, D), jnp.float32),          # norm1 beta
            n((D, FFN_DIM)),                         # linear1 weight^T
            n((1, FFN_DIM)),                         # linear1 bias
            n((FFN_DIM, D)),                         # linear2 weight^T
            n((1, D)),                               # linear2 bias
            jnp.ones((1, D), jnp.float32),           # norm2 gamma
            jnp.zeros((1, D), jnp.float32),          # norm2 beta
        ))
    params['layers'] = layers

    ddi = (jax.random.uniform(next(it), (V, V)) < 0.1).astype(jnp.float32)
    ddi = jnp.maximum(ddi, ddi.T)                    # symmetric DDI adjacency
    params['ddi_pad'] = jnp.zeros((V_PAD, V_PAD), jnp.float32).at[:V, :V].set(ddi)
    return params


# ---------------- RAREMed forward (mode='fine-tune') ------------------------------

def raremed_forward(dis_idx, pro_idx, params):
    D = EMB_DIM
    B = dis_idx.shape[0]
    L = SEQ_LEN
    BL = B * L

    # --- sequence assembly (plain-JAX glue: gathers + concatenation), flattened ---
    cls_tok = jnp.broadcast_to(params['special_emb'][0][None, None, :], (B, 1, D))
    sep_tok = jnp.broadcast_to(params['special_emb'][1][None, None, :], (B, 1, D))
    dis_emb = params['diag_emb'][dis_idx]                      # (B, N_DIS, D)
    pro_emb = params['proc_emb'][pro_idx]                      # (B, N_PRO, D)
    x0 = jnp.concatenate([cls_tok, dis_emb, sep_tok, pro_emb], axis=1)  # (B, L, D)
    x0 = x0.reshape(BL, D)                                     # flatten batch into rows

    # --- per-row metadata (tiny constants, folded by jit) ---
    pos_in_seq = jnp.arange(BL, dtype=jnp.int32) % L
    dis_mask = (pos_in_seq < L_DIS).astype(jnp.float32)[:, None]        # dis vs pro pos-enc
    seg_ids = jnp.where(pos_in_seq < (N_DIS + 2), 0, 1)                 # segment ids
    seg_flat = params['segment_emb'][seg_ids]                           # (BL, D)
    adm_id = jnp.arange(BL, dtype=jnp.int32) // L
    bias2d = jnp.where(adm_id[:, None] == adm_id[None, :], 0.0, -1e9).astype(jnp.float32)
    attn_bias = jnp.broadcast_to(bias2d[None], (NHEAD, BL, BL))         # block-diag bias
    sel = jax.nn.one_hot(jnp.arange(B) * L, BL, dtype=jnp.float32)      # CLS-row selector

    layer_flat = [p for lp in params['layers'] for p in lp]

    # --- single fused kernel: everything lives in VMEM, no grid ---
    res_pad, neg = pl.pallas_call(
        _make_fused_kernel(ENC_LAYERS, NHEAD),
        out_shape=(jax.ShapeDtypeStruct((B, V_PAD), jnp.float32),
                   jax.ShapeDtypeStruct((1, 1), jnp.float32)),
    )(x0, dis_mask, seg_flat,
      params['pos_dis_w'], params['pos_dis_b'], params['pos_dis_emb0'],
      params['pos_pro_w'], params['pos_pro_b'], params['pos_pro_emb0'],
      attn_bias, sel,
      params['cls_w_pad'], params['cls_b_pad'], params['ddi_pad'],
      *layer_flat)

    result = res_pad[:, :VOC[2]]       # slice lane-dense padded logits back to V
    return result, neg[0, 0]


# TODO(synk): dropout layers (positional encoding, transformer) are identity here
#             (eval-mode forward); training-mode stochastic dropout not implemented.
# TODO(synk): ragged per-admission code lists are modeled as a fixed rectangular
#             (N_DIS, N_PRO) batch; true variable-length admissions would need padding masks.

if __name__ == "__main__":
    key = jax.random.PRNGKey(0)
    pkey, dkey, qkey = jax.random.split(key, 3)
    params = init_params(pkey)
    # synthetic admissions: (B, N_DIS) disease codes, (B, N_PRO) procedure codes
    dis_idx = jax.random.randint(dkey, (BATCH, N_DIS), 0, VOC[0])
    pro_idx = jax.random.randint(qkey, (BATCH, N_PRO), 0, VOC[1])

    fwd = jax.jit(raremed_forward)
    result, batch_neg = fwd(dis_idx, pro_idx, params)
    jax.block_until_ready((result, batch_neg))
    assert result.shape == (BATCH, VOC[2])
    assert batch_neg.shape == ()
    print("KERNEL_OK")
</pallas_src>

<mosaic_0001>
module attributes {stable_mosaic.version = 11 : i64} {
  func.func @kernel(%arg0: memref<22x32xf32, #tpu.memory_space<vmem>>, %arg1: memref<22x1xf32, #tpu.memory_space<vmem>>, %arg2: memref<22x32xf32, #tpu.memory_space<vmem>>, %arg3: memref<32x32xf32, #tpu.memory_space<vmem>>, %arg4: memref<1x32xf32, #tpu.memory_space<vmem>>, %arg5: memref<1x32xf32, #tpu.memory_space<vmem>>, %arg6: memref<32x32xf32, #tpu.memory_space<vmem>>, %arg7: memref<1x32xf32, #tpu.memory_space<vmem>>, %arg8: memref<1x32xf32, #tpu.memory_space<vmem>>, %arg9: memref<2x22x22xf32, #tpu.memory_space<vmem>>, %arg10: memref<2x22xf32, #tpu.memory_space<vmem>>, %arg11: memref<32x128xf32, #tpu.memory_space<vmem>>, %arg12: memref<1x128xf32, #tpu.memory_space<vmem>>, %arg13: memref<128x128xf32, #tpu.memory_space<vmem>>, %arg14: memref<32x96xf32, #tpu.memory_space<vmem>>, %arg15: memref<1x96xf32, #tpu.memory_space<vmem>>, %arg16: memref<32x32xf32, #tpu.memory_space<vmem>>, %arg17: memref<1x32xf32, #tpu.memory_space<vmem>>, %arg18: memref<1x32xf32, #tpu.memory_space<vmem>>, %arg19: memref<1x32xf32, #tpu.memory_space<vmem>>, %arg20: memref<32x64xf32, #tpu.memory_space<vmem>>, %arg21: memref<1x64xf32, #tpu.memory_space<vmem>>, %arg22: memref<64x32xf32, #tpu.memory_space<vmem>>, %arg23: memref<1x32xf32, #tpu.memory_space<vmem>>, %arg24: memref<1x32xf32, #tpu.memory_space<vmem>>, %arg25: memref<1x32xf32, #tpu.memory_space<vmem>>, %arg26: memref<32x96xf32, #tpu.memory_space<vmem>>, %arg27: memref<1x96xf32, #tpu.memory_space<vmem>>, %arg28: memref<32x32xf32, #tpu.memory_space<vmem>>, %arg29: memref<1x32xf32, #tpu.memory_space<vmem>>, %arg30: memref<1x32xf32, #tpu.memory_space<vmem>>, %arg31: memref<1x32xf32, #tpu.memory_space<vmem>>, %arg32: memref<32x64xf32, #tpu.memory_space<vmem>>, %arg33: memref<1x64xf32, #tpu.memory_space<vmem>>, %arg34: memref<64x32xf32, #tpu.memory_space<vmem>>, %arg35: memref<1x32xf32, #tpu.memory_space<vmem>>, %arg36: memref<1x32xf32, #tpu.memory_space<vmem>>, %arg37: memref<1x32xf32, #tpu.memory_space<vmem>>, %arg38: memref<2x128xf32, #tpu.memory_space<vmem>>, %arg39: memref<1x1xf32, #tpu.memory_space<vmem>>) attributes {dimension_semantics = [], scalar_prefetch = 0 : i64, scratch_operands = 0 : i64, tpu.core_type = #tpu.core_type<tc>} {
    %c0 = arith.constant 0 : index
    %c0_0 = arith.constant 0 : index
    %0 = vector.load %arg0[%c0, %c0_0] : memref<22x32xf32, #tpu.memory_space<vmem>>, vector<22x32xf32>
    %c0_1 = arith.constant 0 : index
    %c0_2 = arith.constant 0 : index
    %1 = vector.load %arg3[%c0_1, %c0_2] : memref<32x32xf32, #tpu.memory_space<vmem>>, vector<32x32xf32>
    %cst = arith.constant dense<0.000000e+00> : vector<22x32xf32>
    %2 = tpu.matmul %0, %1, %cst {dimension_numbers = #tpu.dot_dimension_numbers<[1], [0], [0], [1], [0, 0, 1, 1], [], []>} : vector<22x32xf32>, vector<32x32xf32>, vector<22x32xf32> -> vector<22x32xf32>
    %c0_3 = arith.constant 0 : index
    %c0_4 = arith.constant 0 : index
    %3 = vector.load %arg4[%c0_3, %c0_4] : memref<1x32xf32, #tpu.memory_space<vmem>>, vector<1x32xf32>
    %4 = vector.broadcast %3 : vector<1x32xf32> to vector<22x32xf32>
    %5 = arith.addf %2, %4 : vector<22x32xf32>
    %cst_5 = arith.constant 0.000000e+00 : f32
    %6 = vector.broadcast %cst_5 : f32 to vector<22x32xf32>
    %7 = arith.maximumf %5, %6 : vector<22x32xf32>
    %c0_6 = arith.constant 0 : index
    %c0_7 = arith.constant 0 : index
    %8 = vector.load %arg5[%c0_6, %c0_7] : memref<1x32xf32, #tpu.memory_space<vmem>>, vector<1x32xf32>
    %9 = vector.broadcast %8 : vector<1x32xf32> to vector<22x32xf32>
    %10 = arith.addf %7, %9 : vector<22x32xf32>
    %c0_8 = arith.constant 0 : index
    %c0_9 = arith.constant 0 : index
    %11 = vector.load %arg6[%c0_8, %c0_9] : memref<32x32xf32, #tpu.memory_space<vmem>>, vector<32x32xf32>
    %cst_10 = arith.constant dense<0.000000e+00> : vector<22x32xf32>
    %12 = tpu.matmul %0, %11, %cst_10 {dimension_numbers = #tpu.dot_dimension_numbers<[1], [0], [0], [1], [0, 0, 1, 1], [], []>} : vector<22x32xf32>, vector<32x32xf32>, vector<22x32xf32> -> vector<22x32xf32>
    %c0_11 = arith.constant 0 : index
    %c0_12 = arith.constant 0 : index
    %13 = vector.load %arg7[%c0_11, %c0_12] : memref<1x32xf32, #tpu.memory_space<vmem>>, vector<1x32xf32>
    %14 = vector.broadcast %13 : vector<1x32xf32> to vector<22x32xf32>
    %15 = arith.addf %12, %14 : vector<22x32xf32>
    %cst_13 = arith.constant 0.000000e+00 : f32
    %16 = vector.broadcast %cst_13 : f32 to vector<22x32xf32>
    %17 = arith.maximumf %15, %16 : vector<22x32xf32>
    %c0_14 = arith.constant 0 : index
    %c0_15 = arith.constant 0 : index
    %18 = vector.load %arg8[%c0_14, %c0_15] : memref<1x32xf32, #tpu.memory_space<vmem>>, vector<1x32xf32>
    %19 = vector.broadcast %18 : vector<1x32xf32> to vector<22x32xf32>
    %20 = arith.addf %17, %19 : vector<22x32xf32>
    %c0_16 = arith.constant 0 : index
    %c0_17 = arith.constant 0 : index
    %21 = vector.load %arg1[%c0_16, %c0_17] : memref<22x1xf32, #tpu.memory_space<vmem>>, vector<22x1xf32>
    %cst_18 = arith.constant 5.000000e-01 : f32
    %22 = vector.broadcast %cst_18 : f32 to vector<22x1xf32>
    %23 = arith.cmpf ogt, %21, %22 : vector<22x1xf32>
    %24 = vector.shape_cast %23 : vector<22x1xi1> to vector<22x1xi1>
    %25 = vector.broadcast %24 : vector<22x1xi1> to vector<22x32xi1>
    %26 = arith.select %25, %10, %20 : vector<22x32xi1>, vector<22x32xf32>
    %c0_19 = arith.constant 0 : index
    %c0_20 = arith.constant 0 : index
    %27 = vector.load %arg2[%c0_19, %c0_20] : memref<22x32xf32, #tpu.memory_space<vmem>>, vector<22x32xf32>
    %28 = arith.addf %26, %27 : vector<22x32xf32>
    %c0_21 = arith.constant 0 : index
    %c0_22 = arith.constant 0 : index
    %c0_23 = arith.constant 0 : index
    %29 = vector.load %arg9[%c0_21, %c0_22, %c0_23] : memref<2x22x22xf32, #tpu.memory_space<vmem>>, vector<2x22x22xf32>
    %c0_24 = arith.constant 0 : index
    %c0_25 = arith.constant 0 : index
    %30 = vector.load %arg14[%c0_24, %c0_25] : memref<32x96xf32, #tpu.memory_space<vmem>>, vector<32x96xf32>
    %c0_26 = arith.constant 0 : index
    %c0_27 = arith.constant 0 : index
    %31 = vector.load %arg15[%c0_26, %c0_27] : memref<1x96xf32, #tpu.memory_space<vmem>>, vector<1x96xf32>
    %c0_28 = arith.constant 0 : index
    %c0_29 = arith.constant 0 : index
    %32 = vector.load %arg16[%c0_28, %c0_29] : memref<32x32xf32, #tpu.memory_space<vmem>>, vector<32x32xf32>
    %c0_30 = arith.constant 0 : index
    %c0_31 = arith.constant 0 : index
    %33 = vector.load %arg17[%c0_30, %c0_31] : memref<1x32xf32, #tpu.memory_space<vmem>>, vector<1x32xf32>
    %c0_32 = arith.constant 0 : index
    %c0_33 = arith.constant 0 : index
    %34 = vector.load %arg18[%c0_32, %c0_33] : memref<1x32xf32, #tpu.memory_space<vmem>>, vector<1x32xf32>
    %c0_34 = arith.constant 0 : index
    %c0_35 = arith.constant 0 : index
    %35 = vector.load %arg19[%c0_34, %c0_35] : memref<1x32xf32, #tpu.memory_space<vmem>>, vector<1x32xf32>
    %c0_36 = arith.constant 0 : index
    %c0_37 = arith.constant 0 : index
    %36 = vector.load %arg20[%c0_36, %c0_37] : memref<32x64xf32, #tpu.memory_space<vmem>>, vector<32x64xf32>
    %c0_38 = arith.constant 0 : index
    %c0_39 = arith.constant 0 : index
    %37 = vector.load %arg21[%c0_38, %c0_39] : memref<1x64xf32, #tpu.memory_space<vmem>>, vector<1x64xf32>
    %c0_40 = arith.constant 0 : index
    %c0_41 = arith.constant 0 : index
    %38 = vector.load %arg22[%c0_40, %c0_41] : memref<64x32xf32, #tpu.memory_space<vmem>>, vector<64x32xf32>
    %c0_42 = arith.constant 0 : index
    %c0_43 = arith.constant 0 : index
    %39 = vector.load %arg23[%c0_42, %c0_43] : memref<1x32xf32, #tpu.memory_space<vmem>>, vector<1x32xf32>
    %c0_44 = arith.constant 0 : index
    %c0_45 = arith.constant 0 : index
    %40 = vector.load %arg24[%c0_44, %c0_45] : memref<1x32xf32, #tpu.memory_space<vmem>>, vector<1x32xf32>
    %c0_46 = arith.constant 0 : index
    %c0_47 = arith.constant 0 : index
    %41 = vector.load %arg25[%c0_46, %c0_47] : memref<1x32xf32, #tpu.memory_space<vmem>>, vector<1x32xf32>
    %cst_48 = arith.constant dense<0.000000e+00> : vector<22x96xf32>
    %42 = tpu.matmul %28, %30, %cst_48 {dimension_numbers = #tpu.dot_dimension_numbers<[1], [0], [0], [1], [0, 0, 1, 1], [], []>} : vector<22x32xf32>, vector<32x96xf32>, vector<22x96xf32> -> vector<22x96xf32>
    %43 = vector.broadcast %31 : vector<1x96xf32> to vector<22x96xf32>
    %44 = arith.addf %42, %43 : vector<22x96xf32>
    %45 = vector.extract_strided_slice %44 {offsets = [0, 0], sizes = [22, 16], strides = [1, 1]} : vector<22x96xf32> to vector<22x16xf32>
    %46 = vector.extract_strided_slice %44 {offsets = [0, 16], sizes = [22, 16], strides = [1, 1]} : vector<22x96xf32> to vector<22x16xf32>
    %47 = vector.shape_cast %45 : vector<22x16xf32> to vector<1x22x16xf32>
    %48 = vector.shape_cast %46 : vector<22x16xf32> to vector<1x22x16xf32>
    %49 = tpu.concatenate %47, %48 in 0 : vector<1x22x16xf32>, vector<1x22x16xf32> -> vector<2x22x16xf32>
    %50 = vector.extract_strided_slice %44 {offsets = [0, 32], sizes = [22, 16], strides = [1, 1]} : vector<22x96xf32> to vector<22x16xf32>
    %51 = vector.extract_strided_slice %44 {offsets = [0, 48], sizes = [22, 16], strides = [1, 1]} : vector<22x96xf32> to vector<22x16xf32>
    %52 = vector.shape_cast %50 : vector<22x16xf32> to vector<1x22x16xf32>
    %53 = vector.shape_cast %51 : vector<22x16xf32> to vector<1x22x16xf32>
    %54 = tpu.concatenate %52, %53 in 0 : vector<1x22x16xf32>, vector<1x22x16xf32> -> vector<2x22x16xf32>
    %55 = vector.extract_strided_slice %44 {offsets = [0, 64], sizes = [22, 16], strides = [1, 1]} : vector<22x96xf32> to vector<22x16xf32>
    %56 = vector.extract_strided_slice %44 {offsets = [0, 80], sizes = [22, 16], strides = [1, 1]} : vector<22x96xf32> to vector<22x16xf32>
    %57 = vector.shape_cast %55 : vector<22x16xf32> to vector<1x22x16xf32>
    %58 = vector.shape_cast %56 : vector<22x16xf32> to vector<1x22x16xf32>
    %59 = tpu.concatenate %57, %58 in 0 : vector<1x22x16xf32>, vector<1x22x16xf32> -> vector<2x22x16xf32>
    "tpu.trace_start"() <{level = 10 : i32, message = "hqd,hkd->hqk"}> : () -> ()
    %cst_49 = arith.constant dense<0.000000e+00> : vector<2x22x22xf32>
    %60 = tpu.matmul %49, %54, %cst_49 {dimension_numbers = #tpu.dot_dimension_numbers<[2], [2], [1], [1], [0, 0, 0, 1, 1, 1], [0], [0]>} : vector<2x22x16xf32>, vector<2x22x16xf32>, vector<2x22x22xf32> -> vector<2x22x22xf32>
    "tpu.trace_stop"() : () -> ()
    %61 = arith.addf %60, %29 : vector<2x22x22xf32>
    %cst_50 = arith.constant dense<0xFF800000> : vector<2x22xf32>
    %62 = vector.multi_reduction <maximumf>, %61, %cst_50 [2] : vector<2x22x22xf32> to vector<2x22xf32>
    %63 = vector.shape_cast %62 : vector<2x22xf32> to vector<2x22x1xf32>
    %64 = vector.broadcast %63 : vector<2x22x1xf32> to vector<2x22x22xf32>
    %65 = arith.subf %61, %64 : vector<2x22x22xf32>
    %66 = math.exp %65 : vector<2x22x22xf32>
    %cst_51 = arith.constant dense<0.000000e+00> : vector<2x22xf32>
    %67 = vector.multi_reduction <add>, %66, %cst_51 [2] : vector<2x22x22xf32> to vector<2x22xf32>
    %68 = vector.shape_cast %67 : vector<2x22xf32> to vector<2x22x1xf32>
    %69 = tpu.reciprocal %68 {approx = true} : vector<2x22x1xf32> -> vector<2x22x1xf32>
    %70 = vector.broadcast %69 : vector<2x22x1xf32> to vector<2x22x22xf32>
    %71 = arith.mulf %66, %70 : vector<2x22x22xf32>
    "tpu.trace_start"() <{level = 10 : i32, message = "hqk,hkd->hqd"}> : () -> ()
    %cst_52 = arith.constant dense<0.000000e+00> : vector<2x22x16xf32>
    %72 = tpu.matmul %71, %59, %cst_52 {dimension_numbers = #tpu.dot_dimension_numbers<[2], [1], [1], [2], [0, 0, 0, 1, 1, 2], [0], [0]>} : vector<2x22x22xf32>, vector<2x22x16xf32>, vector<2x22x16xf32> -> vector<2x22x16xf32>
    "tpu.trace_stop"() : () -> ()
    %73 = vector.extract_strided_slice %72 {offsets = [0, 0, 0], sizes = [1, 22, 16], strides = [1, 1, 1]} : vector<2x22x16xf32> to vector<1x22x16xf32>
    %74 = vector.shape_cast %73 : vector<1x22x16xf32> to vector<22x16xf32>
    %75 = vector.extract_strided_slice %72 {offsets = [1, 0, 0], sizes = [1, 22, 16], strides = [1, 1, 1]} : vector<2x22x16xf32> to vector<1x22x16xf32>
    %76 = vector.shape_cast %75 : vector<1x22x16xf32> to vector<22x16xf32>
    %77 = tpu.concatenate %74, %76 in 1 : vector<22x16xf32>, vector<22x16xf32> -> vector<22x32xf32>
    %cst_53 = arith.constant dense<0.000000e+00> : vector<22x32xf32>
    %78 = tpu.matmul %77, %32, %cst_53 {dimension_numbers = #tpu.dot_dimension_numbers<[1], [0], [0], [1], [0, 0, 1, 1], [], []>} : vector<22x32xf32>, vector<32x32xf32>, vector<22x32xf32> -> vector<22x32xf32>
    %79 = vector.broadcast %33 : vector<1x32xf32> to vector<22x32xf32>
    %80 = arith.addf %78, %79 : vector<22x32xf32>
    %81 = arith.addf %28, %80 : vector<22x32xf32>
    %cst_54 = arith.constant dense<0.000000e+00> : vector<22xf32>
    %82 = vector.multi_reduction <add>, %81, %cst_54 [1] : vector<22x32xf32> to vector<22xf32>
    %83 = vector.shape_cast %82 : vector<22xf32> to vector<22x1xf32>
    %cst_55 = arith.constant 3.200000e+01 : f32
    %84 = vector.broadcast %cst_55 : f32 to vector<22x1xf32>
    %85 = arith.divf %83, %84 : vector<22x1xf32>
    %86 = vector.broadcast %85 : vector<22x1xf32> to vector<22x32xf32>
    %87 = arith.subf %81, %86 : vector<22x32xf32>
    %88 = arith.mulf %87, %87 : vector<22x32xf32>
    %cst_56 = arith.constant dense<0.000000e+00> : vector<22xf32>
    %89 = vector.multi_reduction <add>, %88, %cst_56 [1] : vector<22x32xf32> to vector<22xf32>
    %90 = vector.shape_cast %89 : vector<22xf32> to vector<22x1xf32>
    %cst_57 = arith.constant 3.200000e+01 : f32
    %91 = vector.broadcast %cst_57 : f32 to vector<22x1xf32>
    %92 = arith.divf %90, %91 : vector<22x1xf32>
    %93 = vector.broadcast %85 : vector<22x1xf32> to vector<22x32xf32>
    %94 = arith.subf %81, %93 : vector<22x32xf32>
    %cst_58 = arith.constant 9.99999974E-6 : f32
    %95 = vector.broadcast %cst_58 : f32 to vector<22x1xf32>
    %96 = arith.addf %92, %95 : vector<22x1xf32>
    %97 = math.rsqrt %96 : vector<22x1xf32>
    %98 = vector.broadcast %97 : vector<22x1xf32> to vector<22x32xf32>
    %99 = arith.mulf %94, %98 : vector<22x32xf32>
    %100 = vector.broadcast %34 : vector<1x32xf32> to vector<22x32xf32>
    %101 = arith.mulf %99, %100 : vector<22x32xf32>
    %102 = vector.broadcast %35 : vector<1x32xf32> to vector<22x32xf32>
    %103 = arith.addf %101, %102 : vector<22x32xf32>
    %cst_59 = arith.constant dense<0.000000e+00> : vector<22x64xf32>
    %104 = tpu.matmul %103, %36, %cst_59 {dimension_numbers = #tpu.dot_dimension_numbers<[1], [0], [0], [1], [0, 0, 1, 1], [], []>} : vector<22x32xf32>, vector<32x64xf32>, vector<22x64xf32> -> vector<22x64xf32>
    %105 = vector.broadcast %37 : vector<1x64xf32> to vector<22x64xf32>
    %106 = arith.addf %104, %105 : vector<22x64xf32>
    %cst_60 = arith.constant 0.000000e+00 : f32
    %107 = vector.broadcast %cst_60 : f32 to vector<22x64xf32>
    %108 = arith.maximumf %106, %107 : vector<22x64xf32>
    %cst_61 = arith.constant dense<0.000000e+00> : vector<22x32xf32>
    %109 = tpu.matmul %108, %38, %cst_61 {dimension_numbers = #tpu.dot_dimension_numbers<[1], [0], [0], [1], [0, 0, 1, 1], [], []>} : vector<22x64xf32>, vector<64x32xf32>, vector<22x32xf32> -> vector<22x32xf32>
    %110 = vector.broadcast %39 : vector<1x32xf32> to vector<22x32xf32>
    %111 = arith.addf %109, %110 : vector<22x32xf32>
    %112 = arith.addf %103, %111 : vector<22x32xf32>
    %cst_62 = arith.constant dense<0.000000e+00> : vector<22xf32>
    %113 = vector.multi_reduction <add>, %112, %cst_62 [1] : vector<22x32xf32> to vector<22xf32>
    %114 = vector.shape_cast %113 : vector<22xf32> to vector<22x1xf32>
    %cst_63 = arith.constant 3.200000e+01 : f32
    %115 = vector.broadcast %cst_63 : f32 to vector<22x1xf32>
    %116 = arith.divf %114, %115 : vector<22x1xf32>
    %117 = vector.broadcast %116 : vector<22x1xf32> to vector<22x32xf32>
    %118 = arith.subf %112, %117 : vector<22x32xf32>
    %119 = arith.mulf %118, %118 : vector<22x32xf32>
    %cst_64 = arith.constant dense<0.000000e+00> : vector<22xf32>
    %120 = vector.multi_reduction <add>, %119, %cst_64 [1] : vector<22x32xf32> to vector<22xf32>
    %121 = vector.shape_cast %120 : vector<22xf32> to vector<22x1xf32>
    %cst_65 = arith.constant 3.200000e+01 : f32
    %122 = vector.broadcast %cst_65 : f32 to vector<22x1xf32>
    %123 = arith.divf %121, %122 : vector<22x1xf32>
    %124 = vector.broadcast %116 : vector<22x1xf32> to vector<22x32xf32>
    %125 = arith.subf %112, %124 : vector<22x32xf32>
    %cst_66 = arith.constant 9.99999974E-6 : f32
    %126 = vector.broadcast %cst_66 : f32 to vector<22x1xf32>
    %127 = arith.addf %123, %126 : vector<22x1xf32>
    %128 = math.rsqrt %127 : vector<22x1xf32>
    %129 = vector.broadcast %128 : vector<22x1xf32> to vector<22x32xf32>
    %130 = arith.mulf %125, %129 : vector<22x32xf32>
    %131 = vector.broadcast %40 : vector<1x32xf32> to vector<22x32xf32>
    %132 = arith.mulf %130, %131 : vector<22x32xf32>
    %133 = vector.broadcast %41 : vector<1x32xf32> to vector<22x32xf32>
    %134 = arith.addf %132, %133 : vector<22x32xf32>
    %c0_67 = arith.constant 0 : index
    %c0_68 = arith.constant 0 : index
    %135 = vector.load %arg26[%c0_67, %c0_68] : memref<32x96xf32, #tpu.memory_space<vmem>>, vector<32x96xf32>
    %c0_69 = arith.constant 0 : index
    %c0_70 = arith.constant 0 : index
    %136 = vector.load %arg27[%c0_69, %c0_70] : memref<1x96xf32, #tpu.memory_space<vmem>>, vector<1x96xf32>
    %c0_71 = arith.constant 0 : index
    %c0_72 = arith.constant 0 : index
    %137 = vector.load %arg28[%c0_71, %c0_72] : memref<32x32xf32, #tpu.memory_space<vmem>>, vector<32x32xf32>
    %c0_73 = arith.constant 0 : index
    %c0_74 = arith.constant 0 : index
    %138 = vector.load %arg29[%c0_73, %c0_74] : memref<1x32xf32, #tpu.memory_space<vmem>>, vector<1x32xf32>
    %c0_75 = arith.constant 0 : index
    %c0_76 = arith.constant 0 : index
    %139 = vector.load %arg30[%c0_75, %c0_76] : memref<1x32xf32, #tpu.memory_space<vmem>>, vector<1x32xf32>
    %c0_77 = arith.constant 0 : index
    %c0_78 = arith.constant 0 : index
    %140 = vector.load %arg31[%c0_77, %c0_78] : memref<1x32xf32, #tpu.memory_space<vmem>>, vector<1x32xf32>
    %c0_79 = arith.constant 0 : index
    %c0_80 = arith.constant 0 : index
    %141 = vector.load %arg32[%c0_79, %c0_80] : memref<32x64xf32, #tpu.memory_space<vmem>>, vector<32x64xf32>
    %c0_81 = arith.constant 0 : index
    %c0_82 = arith.constant 0 : index
    %142 = vector.load %arg33[%c0_81, %c0_82] : memref<1x64xf32, #tpu.memory_space<vmem>>, vector<1x64xf32>
    %c0_83 = arith.constant 0 : index
    %c0_84 = arith.constant 0 : index
    %143 = vector.load %arg34[%c0_83, %c0_84] : memref<64x32xf32, #tpu.memory_space<vmem>>, vector<64x32xf32>
    %c0_85 = arith.constant 0 : index
    %c0_86 = arith.constant 0 : index
    %144 = vector.load %arg35[%c0_85, %c0_86] : memref<1x32xf32, #tpu.memory_space<vmem>>, vector<1x32xf32>
    %c0_87 = arith.constant 0 : index
    %c0_88 = arith.constant 0 : index
    %145 = vector.load %arg36[%c0_87, %c0_88] : memref<1x32xf32, #tpu.memory_space<vmem>>, vector<1x32xf32>
    %c0_89 = arith.constant 0 : index
    %c0_90 = arith.constant 0 : index
    %146 = vector.load %arg37[%c0_89, %c0_90] : memref<1x32xf32, #tpu.memory_space<vmem>>, vector<1x32xf32>
    %cst_91 = arith.constant dense<0.000000e+00> : vector<22x96xf32>
    %147 = tpu.matmul %134, %135, %cst_91 {dimension_numbers = #tpu.dot_dimension_numbers<[1], [0], [0], [1], [0, 0, 1, 1], [], []>} : vector<22x32xf32>, vector<32x96xf32>, vector<22x96xf32> -> vector<22x96xf32>
    %148 = vector.broadcast %136 : vector<1x96xf32> to vector<22x96xf32>
    %149 = arith.addf %147, %148 : vector<22x96xf32>
    %150 = vector.extract_strided_slice %149 {offsets = [0, 0], sizes = [22, 16], strides = [1, 1]} : vector<22x96xf32> to vector<22x16xf32>
    %151 = vector.extract_strided_slice %149 {offsets = [0, 16], sizes = [22, 16], strides = [1, 1]} : vector<22x96xf32> to vector<22x16xf32>
    %152 = vector.shape_cast %150 : vector<22x16xf32> to vector<1x22x16xf32>
    %153 = vector.shape_cast %151 : vector<22x16xf32> to vector<1x22x16xf32>
    %154 = tpu.concatenate %152, %153 in 0 : vector<1x22x16xf32>, vector<1x22x16xf32> -> vector<2x22x16xf32>
    %155 = vector.extract_strided_slice %149 {offsets = [0, 32], sizes = [22, 16], strides = [1, 1]} : vector<22x96xf32> to vector<22x16xf32>
    %156 = vector.extract_strided_slice %149 {offsets = [0, 48], sizes = [22, 16], strides = [1, 1]} : vector<22x96xf32> to vector<22x16xf32>
    %157 = vector.shape_cast %155 : vector<22x16xf32> to vector<1x22x16xf32>
    %158 = vector.shape_cast %156 : vector<22x16xf32> to vector<1x22x16xf32>
    %159 = tpu.concatenate %157, %158 in 0 : vector<1x22x16xf32>, vector<1x22x16xf32> -> vector<2x22x16xf32>
    %160 = vector.extract_strided_slice %149 {offsets = [0, 64], sizes = [22, 16], strides = [1, 1]} : vector<22x96xf32> to vector<22x16xf32>
    %161 = vector.extract_strided_slice %149 {offsets = [0, 80], sizes = [22, 16], strides = [1, 1]} : vector<22x96xf32> to vector<22x16xf32>
    %162 = vector.shape_cast %160 : vector<22x16xf32> to vector<1x22x16xf32>
    %163 = vector.shape_cast %161 : vector<22x16xf32> to vector<1x22x16xf32>
    %164 = tpu.concatenate %162, %163 in 0 : vector<1x22x16xf32>, vector<1x22x16xf32> -> vector<2x22x16xf32>
    "tpu.trace_start"() <{level = 10 : i32, message = "hqd,hkd->hqk"}> : () -> ()
    %cst_92 = arith.constant dense<0.000000e+00> : vector<2x22x22xf32>
    %165 = tpu.matmul %154, %159, %cst_92 {dimension_numbers = #tpu.dot_dimension_numbers<[2], [2], [1], [1], [0, 0, 0, 1, 1, 1], [0], [0]>} : vector<2x22x16xf32>, vector<2x22x16xf32>, vector<2x22x22xf32> -> vector<2x22x22xf32>
    "tpu.trace_stop"() : () -> ()
    %166 = arith.addf %165, %29 : vector<2x22x22xf32>
    %cst_93 = arith.constant dense<0xFF800000> : vector<2x22xf32>
    %167 = vector.multi_reduction <maximumf>, %166, %cst_93 [2] : vector<2x22x22xf32> to vector<2x22xf32>
    %168 = vector.shape_cast %167 : vector<2x22xf32> to vector<2x22x1xf32>
    %169 = vector.broadcast %168 : vector<2x22x1xf32> to vector<2x22x22xf32>
    %170 = arith.subf %166, %169 : vector<2x22x22xf32>
    %171 = math.exp %170 : vector<2x22x22xf32>
    %cst_94 = arith.constant dense<0.000000e+00> : vector<2x22xf32>
    %172 = vector.multi_reduction <add>, %171, %cst_94 [2] : vector<2x22x22xf32> to vector<2x22xf32>
    %173 = vector.shape_cast %172 : vector<2x22xf32> to vector<2x22x1xf32>
    %174 = tpu.reciprocal %173 {approx = true} : vector<2x22x1xf32> -> vector<2x22x1xf32>
    %175 = vector.broadcast %174 : vector<2x22x1xf32> to vector<2x22x22xf32>
    %176 = arith.mulf %171, %175 : vector<2x22x22xf32>
    "tpu.trace_start"() <{level = 10 : i32, message = "hqk,hkd->hqd"}> : () -> ()
    %cst_95 = arith.constant dense<0.000000e+00> : vector<2x22x16xf32>
    %177 = tpu.matmul %176, %164, %cst_95 {dimension_numbers = #tpu.dot_dimension_numbers<[2], [1], [1], [2], [0, 0, 0, 1, 1, 2], [0], [0]>} : vector<2x22x22xf32>, vector<2x22x16xf32>, vector<2x22x16xf32> -> vector<2x22x16xf32>
    "tpu.trace_stop"() : () -> ()
    %178 = vector.extract_strided_slice %177 {offsets = [0, 0, 0], sizes = [1, 22, 16], strides = [1, 1, 1]} : vector<2x22x16xf32> to vector<1x22x16xf32>
    %179 = vector.shape_cast %178 : vector<1x22x16xf32> to vector<22x16xf32>
    %180 = vector.extract_strided_slice %177 {offsets = [1, 0, 0], sizes = [1, 22, 16], strides = [1, 1, 1]} : vector<2x22x16xf32> to vector<1x22x16xf32>
    %181 = vector.shape_cast %180 : vector<1x22x16xf32> to vector<22x16xf32>
    %182 = tpu.concatenate %179, %181 in 1 : vector<22x16xf32>, vector<22x16xf32> -> vector<22x32xf32>
    %cst_96 = arith.constant dense<0.000000e+00> : vector<22x32xf32>
    %183 = tpu.matmul %182, %137, %cst_96 {dimension_numbers = #tpu.dot_dimension_numbers<[1], [0], [0], [1], [0, 0, 1, 1], [], []>} : vector<22x32xf32>, vector<32x32xf32>, vector<22x32xf32> -> vector<22x32xf32>
    %184 = vector.broadcast %138 : vector<1x32xf32> to vector<22x32xf32>
    %185 = arith.addf %183, %184 : vector<22x32xf32>
    %186 = arith.addf %134, %185 : vector<22x32xf32>
    %cst_97 = arith.constant dense<0.000000e+00> : vector<22xf32>
    %187 = vector.multi_reduction <add>, %186, %cst_97 [1] : vector<22x32xf32> to vector<22xf32>
    %188 = vector.shape_cast %187 : vector<22xf32> to vector<22x1xf32>
    %cst_98 = arith.constant 3.200000e+01 : f32
    %189 = vector.broadcast %cst_98 : f32 to vector<22x1xf32>
    %190 = arith.divf %188, %189 : vector<22x1xf32>
    %191 = vector.broadcast %190 : vector<22x1xf32> to vector<22x32xf32>
    %192 = arith.subf %186, %191 : vector<22x32xf32>
    %193 = arith.mulf %192, %192 : vector<22x32xf32>
    %cst_99 = arith.constant dense<0.000000e+00> : vector<22xf32>
    %194 = vector.multi_reduction <add>, %193, %cst_99 [1] : vector<22x32xf32> to vector<22xf32>
    %195 = vector.shape_cast %194 : vector<22xf32> to vector<22x1xf32>
    %cst_100 = arith.constant 3.200000e+01 : f32
    %196 = vector.broadcast %cst_100 : f32 to vector<22x1xf32>
    %197 = arith.divf %195, %196 : vector<22x1xf32>
    %198 = vector.broadcast %190 : vector<22x1xf32> to vector<22x32xf32>
    %199 = arith.subf %186, %198 : vector<22x32xf32>
    %cst_101 = arith.constant 9.99999974E-6 : f32
    %200 = vector.broadcast %cst_101 : f32 to vector<22x1xf32>
    %201 = arith.addf %197, %200 : vector<22x1xf32>
    %202 = math.rsqrt %201 : vector<22x1xf32>
    %203 = vector.broadcast %202 : vector<22x1xf32> to vector<22x32xf32>
    %204 = arith.mulf %199, %203 : vector<22x32xf32>
    %205 = vector.broadcast %139 : vector<1x32xf32> to vector<22x32xf32>
    %206 = arith.mulf %204, %205 : vector<22x32xf32>
    %207 = vector.broadcast %140 : vector<1x32xf32> to vector<22x32xf32>
    %208 = arith.addf %206, %207 : vector<22x32xf32>
    %cst_102 = arith.constant dense<0.000000e+00> : vector<22x64xf32>
    %209 = tpu.matmul %208, %141, %cst_102 {dimension_numbers = #tpu.dot_dimension_numbers<[1], [0], [0], [1], [0, 0, 1, 1], [], []>} : vector<22x32xf32>, vector<32x64xf32>, vector<22x64xf32> -> vector<22x64xf32>
    %210 = vector.broadcast %142 : vector<1x64xf32> to vector<22x64xf32>
    %211 = arith.addf %209, %210 : vector<22x64xf32>
    %cst_103 = arith.constant 0.000000e+00 : f32
    %212 = vector.broadcast %cst_103 : f32 to vector<22x64xf32>
    %213 = arith.maximumf %211, %212 : vector<22x64xf32>
    %cst_104 = arith.constant dense<0.000000e+00> : vector<22x32xf32>
    %214 = tpu.matmul %213, %143, %cst_104 {dimension_numbers = #tpu.dot_dimension_numbers<[1], [0], [0], [1], [0, 0, 1, 1], [], []>} : vector<22x64xf32>, vector<64x32xf32>, vector<22x32xf32> -> vector<22x32xf32>
    %215 = vector.broadcast %144 : vector<1x32xf32> to vector<22x32xf32>
    %216 = arith.addf %214, %215 : vector<22x32xf32>
    %217 = arith.addf %208, %216 : vector<22x32xf32>
    %cst_105 = arith.constant dense<0.000000e+00> : vector<22xf32>
    %218 = vector.multi_reduction <add>, %217, %cst_105 [1] : vector<22x32xf32> to vector<22xf32>
    %219 = vector.shape_cast %218 : vector<22xf32> to vector<22x1xf32>
    %cst_106 = arith.constant 3.200000e+01 : f32
    %220 = vector.broadcast %cst_106 : f32 to vector<22x1xf32>
    %221 = arith.divf %219, %220 : vector<22x1xf32>
    %222 = vector.broadcast %221 : vector<22x1xf32> to vector<22x32xf32>
    %223 = arith.subf %217, %222 : vector<22x32xf32>
    %224 = arith.mulf %223, %223 : vector<22x32xf32>
    %cst_107 = arith.constant dense<0.000000e+00> : vector<22xf32>
    %225 = vector.multi_reduction <add>, %224, %cst_107 [1] : vector<22x32xf32> to vector<22xf32>
    %226 = vector.shape_cast %225 : vector<22xf32> to vector<22x1xf32>
    %cst_108 = arith.constant 3.200000e+01 : f32
    %227 = vector.broadcast %cst_108 : f32 to vector<22x1xf32>
    %228 = arith.divf %226, %227 : vector<22x1xf32>
    %229 = vector.broadcast %221 : vector<22x1xf32> to vector<22x32xf32>
    %230 = arith.subf %217, %229 : vector<22x32xf32>
    %cst_109 = arith.constant 9.99999974E-6 : f32
    %231 = vector.broadcast %cst_109 : f32 to vector<22x1xf32>
    %232 = arith.addf %228, %231 : vector<22x1xf32>
    %233 = math.rsqrt %232 : vector<22x1xf32>
    %234 = vector.broadcast %233 : vector<22x1xf32> to vector<22x32xf32>
    %235 = arith.mulf %230, %234 : vector<22x32xf32>
    %236 = vector.broadcast %145 : vector<1x32xf32> to vector<22x32xf32>
    %237 = arith.mulf %235, %236 : vector<22x32xf32>
    %238 = vector.broadcast %146 : vector<1x32xf32> to vector<22x32xf32>
    %239 = arith.addf %237, %238 : vector<22x32xf32>
    %c0_110 = arith.constant 0 : index
    %c0_111 = arith.constant 0 : index
    %240 = vector.load %arg10[%c0_110, %c0_111] : memref<2x22xf32, #tpu.memory_space<vmem>>, vector<2x22xf32>
    %cst_112 = arith.constant dense<0.000000e+00> : vector<2x32xf32>
    %241 = tpu.matmul %240, %239, %cst_112 {dimension_numbers = #tpu.dot_dimension_numbers<[1], [0], [0], [1], [0, 0, 1, 1], [], []>} : vector<2x22xf32>, vector<22x32xf32>, vector<2x32xf32> -> vector<2x32xf32>
    %c0_113 = arith.constant 0 : index
    %c0_114 = arith.constant 0 : index
    %242 = vector.load %arg11[%c0_113, %c0_114] : memref<32x128xf32, #tpu.memory_space<vmem>>, vector<32x128xf32>
    %cst_115 = arith.constant dense<0.000000e+00> : vector<2x128xf32>
    %243 = tpu.matmul %241, %242, %cst_115 {dimension_numbers = #tpu.dot_dimension_numbers<[1], [0], [0], [1], [0, 0, 1, 1], [], []>} : vector<2x32xf32>, vector<32x128xf32>, vector<2x128xf32> -> vector<2x128xf32>
    %c0_116 = arith.constant 0 : index
    %c0_117 = arith.constant 0 : index
    %244 = vector.load %arg12[%c0_116, %c0_117] : memref<1x128xf32, #tpu.memory_space<vmem>>, vector<1x128xf32>
    %245 = vector.broadcast %244 : vector<1x128xf32> to vector<2x128xf32>
    %246 = arith.addf %243, %245 : vector<2x128xf32>
    %c0_118 = arith.constant 0 : index
    %c0_119 = arith.constant 0 : index
    %247 = vector.load %arg38[%c0_118, %c0_119] : memref<2x128xf32, #tpu.memory_space<vmem>>, vector<2x128xf32>
    tpu.vector_store %arg38[%c0_118, %c0_119], %246 {strides = array<i32>} : memref<2x128xf32, #tpu.memory_space<vmem>>, vector<2x128xf32>,
    %cst_120 = arith.constant 0.000000e+00 : f32
    %248 = vector.broadcast %cst_120 : f32 to vector<2x128xf32>
    %249 = arith.subf %248, %246 : vector<2x128xf32>
    %250 = math.exp %249 : vector<2x128xf32>
    %cst_121 = arith.constant 1.000000e+00 : f32
    %251 = vector.broadcast %cst_121 : f32 to vector<2x128xf32>
    %252 = arith.addf %251, %250 : vector<2x128xf32>
    %cst_122 = arith.constant 1.000000e+00 : f32
    %253 = vector.broadcast %cst_122 : f32 to vector<2x128xf32>
    %254 = arith.divf %253, %252 : vector<2x128xf32>
    %c0_123 = arith.constant 0 : index
    %c0_124 = arith.constant 0 : index
    %255 = vector.load %arg13[%c0_123, %c0_124] : memref<128x128xf32, #tpu.memory_space<vmem>>, vector<128x128xf32>
    %cst_125 = arith.constant dense<0.000000e+00> : vector<2x128xf32>
    %256 = tpu.matmul %254, %255, %cst_125 {dimension_numbers = #tpu.dot_dimension_numbers<[1], [0], [0], [1], [0, 0, 1, 1], [], []>} : vector<2x128xf32>, vector<128x128xf32>, vector<2x128xf32> -> vector<2x128xf32>
    %257 = arith.mulf %256, %254 : vector<2x128xf32>
    %258 = vector.shape_cast %257 : vector<2x128xf32> to vector<1x2x128xf32>
    %cst_126 = arith.constant dense<0.000000e+00> : vector<1xf32>
    %259 = vector.multi_reduction <add>, %258, %cst_126 [1, 2] : vector<1x2x128xf32> to vector<1xf32>
    %260 = vector.shape_cast %259 : vector<1xf32> to vector<1x1x1xf32>
    %261 = vector.extract %260[0, 0, 0] : f32 from vector<1x1x1xf32>
    %262 = vector.broadcast %261 : f32 to vector<1x1xf32>
    %cst_127 = arith.constant 5.000000e-04 : f32
    %263 = vector.broadcast %cst_127 : f32 to vector<1x1xf32>
    %264 = arith.mulf %263, %262 : vector<1x1xf32>
    %c0_128 = arith.constant 0 : index
    %c0_129 = arith.constant 0 : index
    %265 = vector.load %arg39[%c0_128, %c0_129] : memref<1x1xf32, #tpu.memory_space<vmem>>, vector<1x1xf32>
    tpu.vector_store %arg39[%c0_128, %c0_129], %264 {strides = array<i32>} : memref<1x1xf32, #tpu.memory_space<vmem>>, vector<1x1xf32>,
    return
  }
}

</mosaic_0001>

<llo_original>
// kernel: raremed_forward.1
$region0: #{raremed_forward.1}
  #allocation0 [shape = 'u32[]', space=smem, size = 0x4, offset = 0x4, fixed_abs, tag = 'smem constant byte address 0x4 - core index']
  #allocation1 [shape = 'u32[144,128]{1,0:T(1,128)}', space=vmem, size = 0x12000, scoped, tag = 'internal scratch']
  %s0 = inlined_call_operand.smem [shape: u32[40], index: -1, kind: input, shape index: {}]
  %s1 = sld [smem:[%s0]]
  %s2 = scalar_lea.smem %s0, 1
  %s3 = sld [smem:[%s2]]
  %s4 = scalar_lea.smem %s0, 2
  %s5 = sld [smem:[%s4]]
  %s6 = scalar_lea.smem %s0, 3
  %s7 = sld [smem:[%s6]]
  %s8 = scalar_lea.smem %s0, 4
  %s9 = sld [smem:[%s8]]
  %s10 = scalar_lea.smem %s0, 5
  %s11 = sld [smem:[%s10]]
  %s12 = scalar_lea.smem %s0, 6
  %s13 = sld [smem:[%s12]]
  %s14 = scalar_lea.smem %s0, 7
  %s15 = sld [smem:[%s14]]
  %s16 = scalar_lea.smem %s0, 8
  %s17 = sld [smem:[%s16]]
  %s18 = scalar_lea.smem %s0, 9
  %s19 = sld [smem:[%s18]]
  %s20 = scalar_lea.smem %s0, 10
  %s21 = sld [smem:[%s20]]
  %s22 = scalar_lea.smem %s0, 11
  %s23 = sld [smem:[%s22]]
  %s24 = scalar_lea.smem %s0, 12
  %s25 = sld [smem:[%s24]]
  %s26 = scalar_lea.smem %s0, 13
  %s27 = sld [smem:[%s26]]
  %s28 = scalar_lea.smem %s0, 14
  %s29 = sld [smem:[%s28]]
  %s30 = scalar_lea.smem %s0, 15
  %s31 = sld [smem:[%s30]]
  %s32 = scalar_lea.smem %s0, 16
  %s33 = sld [smem:[%s32]]
  %s34 = scalar_lea.smem %s0, 17
  %s35 = sld [smem:[%s34]]
  %s36 = scalar_lea.smem %s0, 18
  %s37 = sld [smem:[%s36]]
  %s38 = scalar_lea.smem %s0, 19
  %s39 = sld [smem:[%s38]]
  %s40 = scalar_lea.smem %s0, 20
  %s41 = sld [smem:[%s40]]
  %s42 = scalar_lea.smem %s0, 21
  %s43 = sld [smem:[%s42]]
  %s44 = scalar_lea.smem %s0, 22
  %s45 = sld [smem:[%s44]]
  %s46 = scalar_lea.smem %s0, 23
  %s47 = sld [smem:[%s46]]
  %s48 = scalar_lea.smem %s0, 24
  %s49 = sld [smem:[%s48]]
  %s50 = scalar_lea.smem %s0, 25
  %s51 = sld [smem:[%s50]]
  %s52 = scalar_lea.smem %s0, 26
  %s53 = sld [smem:[%s52]]
  %s54 = scalar_lea.smem %s0, 27
  %s55 = sld [smem:[%s54]]
  %s56 = scalar_lea.smem %s0, 28
  %s57 = sld [smem:[%s56]]
  %s58 = scalar_lea.smem %s0, 29
  %s59 = sld [smem:[%s58]]
  %s60 = scalar_lea.smem %s0, 30
  %s61 = sld [smem:[%s60]]
  %s62 = scalar_lea.smem %s0, 31
  %s63 = sld [smem:[%s62]]
  %s64 = scalar_lea.smem %s0, 32
  %s65 = sld [smem:[%s64]]
  %s66 = scalar_lea.smem %s0, 33
  %s67 = sld [smem:[%s66]]
  %s68 = scalar_lea.smem %s0, 34
  %s69 = sld [smem:[%s68]]
  %s70 = scalar_lea.smem %s0, 35
  %s71 = sld [smem:[%s70]]
  %s72 = scalar_lea.smem %s0, 36
  %s73 = sld [smem:[%s72]]
  %s74 = scalar_lea.smem %s0, 37
  %s75 = sld [smem:[%s74]]
  %s76 = scalar_lea.smem %s0, 38
  %s77 = sld [smem:[%s76]]
  %s78 = scalar_lea.smem %s0, 39
  %s79 = sld [smem:[%s78]]
  %80 = xla_tuple %s77, %s79
  %s81 = sld [smem:[#allocation0]]
  $region170: #{raremed_forward.1} parent=0
    _
  %s83 = ssub.s32 1, %s81
  %s84 = scalar_select 0, %s83, %s81
  $region1: #{raremed_forward.1} parent=0
    #allocation2 [shape = 'u8[1024]{0}', space=vmem, size = 0x400, scoped, tag = 'output window, operand 0, single buffered']
    #allocation3 [shape = 's32[1]{0}', space=sflag, size = 0x4, scoped, tag = 'scoped memory for raremed_forward.1']
    #allocation4 [shape = 'u8[512]{0}', space=vmem, size = 0x400, scoped, tag = 'output window, operand 1, single buffered']
    #allocation5 [shape = 's32[1]{0}', space=sflag, size = 0x4, scoped, tag = 'scoped memory for raremed_forward.1']
    %85 = vsyncpa [#allocation3], 0
    %86 = vsyncpa [#allocation5], 0
    // Predicated region
    $region2: #{raremed_forward.1} parent=1 // pred_check
      _
    $region3: #{raremed_forward.1} parent=1 // pred_check_branch
      %88 = sbr.rel (0) target = $region5
    $region4: #{raremed_forward.1} parent=1 // pred_region
      _
    $region5: #{raremed_forward.1} parent=1 // pred_fallthru
      _
    // Predicated region
    $region6: #{raremed_forward.1} parent=1 // pred_check
      _
    $region7: #{raremed_forward.1} parent=1 // pred_check_branch
      %90 = sbr.rel (0) target = $region9
    $region8: #{raremed_forward.1} parent=1 // pred_region
      _
    $region9: #{raremed_forward.1} parent=1 // pred_fallthru
      _
    // Predicated region
    $region10: #{raremed_forward.1} parent=1 // pred_check
      _
    $region11: #{raremed_forward.1} parent=1 // pred_check_branch
      %92 = sbr.rel (0) target = $region13
    $region12: #{raremed_forward.1} parent=1 // pred_region
      _
    $region13: #{raremed_forward.1} parent=1 // pred_fallthru
      _
    // Predicated region
    $region14: #{raremed_forward.1} parent=1 // pred_check
      _
    $region15: #{raremed_forward.1} parent=1 // pred_check_branch
      %94 = sbr.rel (0) target = $region17
    $region16: #{raremed_forward.1} parent=1 // pred_region
      _
    $region17: #{raremed_forward.1} parent=1 // pred_fallthru
      _
    // Predicated region
    $region18: #{raremed_forward.1} parent=1 // pred_check
      _
    $region19: #{raremed_forward.1} parent=1 // pred_check_branch
      %96 = sbr.rel (0) target = $region21
    $region20: #{raremed_forward.1} parent=1 // pred_region
      _
    $region21: #{raremed_forward.1} parent=1 // pred_fallthru
      _
    // Predicated region
    $region22: #{raremed_forward.1} parent=1 // pred_check
      _
    $region23: #{raremed_forward.1} parent=1 // pred_check_branch
      %98 = sbr.rel (0) target = $region25
    $region24: #{raremed_forward.1} parent=1 // pred_region
      _
    $region25: #{raremed_forward.1} parent=1 // pred_fallthru
      _
    // Predicated region
    $region26: #{raremed_forward.1} parent=1 // pred_check
      _
    $region27: #{raremed_forward.1} parent=1 // pred_check_branch
      %100 = sbr.rel (0) target = $region29
    $region28: #{raremed_forward.1} parent=1 // pred_region
      _
    $region29: #{raremed_forward.1} parent=1 // pred_fallthru
      _
    // Predicated region
    $region30: #{raremed_forward.1} parent=1 // pred_check
      _
    $region31: #{raremed_forward.1} parent=1 // pred_check_branch
      %102 = sbr.rel (0) target = $region33
    $region32: #{raremed_forward.1} parent=1 // pred_region
      _
    $region33: #{raremed_forward.1} parent=1 // pred_fallthru
      _
    // Predicated region
    $region34: #{raremed_forward.1} parent=1 // pred_check
      _
    $region35: #{raremed_forward.1} parent=1 // pred_check_branch
      %104 = sbr.rel (0) target = $region37
    $region36: #{raremed_forward.1} parent=1 // pred_region
      _
    $region37: #{raremed_forward.1} parent=1 // pred_fallthru
      _
    // Predicated region
    $region38: #{raremed_forward.1} parent=1 // pred_check
      _
    $region39: #{raremed_forward.1} parent=1 // pred_check_branch
      %106 = sbr.rel (0) target = $region41
    $region40: #{raremed_forward.1} parent=1 // pred_region
      _
    $region41: #{raremed_forward.1} parent=1 // pred_fallthru
      _
    // Predicated region
    $region42: #{raremed_forward.1} parent=1 // pred_check
      _
    $region43: #{raremed_forward.1} parent=1 // pred_check_branch
      %108 = sbr.rel (0) target = $region45
    $region44: #{raremed_forward.1} parent=1 // pred_region
      _
    $region45: #{raremed_forward.1} parent=1 // pred_fallthru
      _
    // Predicated region
    $region46: #{raremed_forward.1} parent=1 // pred_check
      _
    $region47: #{raremed_forward.1} parent=1 // pred_check_branch
      %110 = sbr.rel (0) target = $region49
    $region48: #{raremed_forward.1} parent=1 // pred_region
      _
    $region49: #{raremed_forward.1} parent=1 // pred_fallthru
      _
    // Predicated region
    $region50: #{raremed_forward.1} parent=1 // pred_check
      _
    $region51: #{raremed_forward.1} parent=1 // pred_check_branch
      %112 = sbr.rel (0) target = $region53
    $region52: #{raremed_forward.1} parent=1 // pred_region
      _
    $region53: #{raremed_forward.1} parent=1 // pred_fallthru
      _
    // Predicated region
    $region54: #{raremed_forward.1} parent=1 // pred_check
      _
    $region55: #{raremed_forward.1} parent=1 // pred_check_branch
      %114 = sbr.rel (0) target = $region57
    $region56: #{raremed_forward.1} parent=1 // pred_region
      _
    $region57: #{raremed_forward.1} parent=1 // pred_fallthru
      _
    // Predicated region
    $region58: #{raremed_forward.1} parent=1 // pred_check
      _
    $region59: #{raremed_forward.1} parent=1 // pred_check_branch
      %116 = sbr.rel (0) target = $region61
    $region60: #{raremed_forward.1} parent=1 // pred_region
      _
    $region61: #{raremed_forward.1} parent=1 // pred_fallthru
      _
    // Predicated region
    $region62: #{raremed_forward.1} parent=1 // pred_check
      _
    $region63: #{raremed_forward.1} parent=1 // pred_check_branch
      %118 = sbr.rel (0) target = $region65
    $region64: #{raremed_forward.1} parent=1 // pred_region
      _
    $region65: #{raremed_forward.1} parent=1 // pred_fallthru
      _
    // Predicated region
    $region66: #{raremed_forward.1} parent=1 // pred_check
      _
    $region67: #{raremed_forward.1} parent=1 // pred_check_branch
      %120 = sbr.rel (0) target = $region69
    $region68: #{raremed_forward.1} parent=1 // pred_region
      _
    $region69: #{raremed_forward.1} parent=1 // pred_fallthru
      _
    // Predicated region
    $region70: #{raremed_forward.1} parent=1 // pred_check
      _
    $region71: #{raremed_forward.1} parent=1 // pred_check_branch
      %122 = sbr.rel (0) target = $region73
    $region72: #{raremed_forward.1} parent=1 // pred_region
      _
    $region73: #{raremed_forward.1} parent=1 // pred_fallthru
      _
    // Predicated region
    $region74: #{raremed_forward.1} parent=1 // pred_check
      _
    $region75: #{raremed_forward.1} parent=1 // pred_check_branch
      %124 = sbr.rel (0) target = $region77
    $region76: #{raremed_forward.1} parent=1 // pred_region
      _
    $region77: #{raremed_forward.1} parent=1 // pred_fallthru
      _
    // Predicated region
    $region78: #{raremed_forward.1} parent=1 // pred_check
      _
    $region79: #{raremed_forward.1} parent=1 // pred_check_branch
      %126 = sbr.rel (0) target = $region81
    $region80: #{raremed_forward.1} parent=1 // pred_region
      _
    $region81: #{raremed_forward.1} parent=1 // pred_fallthru
      _
    // Predicated region
    $region82: #{raremed_forward.1} parent=1 // pred_check
      _
    $region83: #{raremed_forward.1} parent=1 // pred_check_branch
      %128 = sbr.rel (0) target = $region85
    $region84: #{raremed_forward.1} parent=1 // pred_region
      _
    $region85: #{raremed_forward.1} parent=1 // pred_fallthru
      _
    // Predicated region
    $region86: #{raremed_forward.1} parent=1 // pred_check
      _
    $region87: #{raremed_forward.1} parent=1 // pred_check_branch
      %130 = sbr.rel (0) target = $region89
    $region88: #{raremed_forward.1} parent=1 // pred_region
      _
    $region89: #{raremed_forward.1} parent=1 // pred_fallthru
      _
    // Predicated region
    $region90: #{raremed_forward.1} parent=1 // pred_check
      _
    $region91: #{raremed_forward.1} parent=1 // pred_check_branch
      %132 = sbr.rel (0) target = $region93
    $region92: #{raremed_forward.1} parent=1 // pred_region
      _
    $region93: #{raremed_forward.1} parent=1 // pred_fallthru
      _
    // Predicated region
    $region94: #{raremed_forward.1} parent=1 // pred_check
      _
    $region95: #{raremed_forward.1} parent=1 // pred_check_branch
      %134 = sbr.rel (0) target = $region97
    $region96: #{raremed_forward.1} parent=1 // pred_region
      _
    $region97: #{raremed_forward.1} parent=1 // pred_fallthru
      _
    // Predicated region
    $region98: #{raremed_forward.1} parent=1 // pred_check
      _
    $region99: #{raremed_forward.1} parent=1 // pred_check_branch
      %136 = sbr.rel (0) target = $region101
    $region100: #{raremed_forward.1} parent=1 // pred_region
      _
    $region101: #{raremed_forward.1} parent=1 // pred_fallthru
      _
    // Predicated region
    $region102: #{raremed_forward.1} parent=1 // pred_check
      _
    $region103: #{raremed_forward.1} parent=1 // pred_check_branch
      %138 = sbr.rel (0) target = $region105
    $region104: #{raremed_forward.1} parent=1 // pred_region
      _
    $region105: #{raremed_forward.1} parent=1 // pred_fallthru
      _
    // Predicated region
    $region106: #{raremed_forward.1} parent=1 // pred_check
      _
    $region107: #{raremed_forward.1} parent=1 // pred_check_branch
      %140 = sbr.rel (0) target = $region109
    $region108: #{raremed_forward.1} parent=1 // pred_region
      _
    $region109: #{raremed_forward.1} parent=1 // pred_fallthru
      _
    // Predicated region
    $region110: #{raremed_forward.1} parent=1 // pred_check
      _
    $region111: #{raremed_forward.1} parent=1 // pred_check_branch
      %142 = sbr.rel (0) target = $region113
    $region112: #{raremed_forward.1} parent=1 // pred_region
      _
    $region113: #{raremed_forward.1} parent=1 // pred_fallthru
      _
    // Predicated region
    $region114: #{raremed_forward.1} parent=1 // pred_check
      _
    $region115: #{raremed_forward.1} parent=1 // pred_check_branch
      %144 = sbr.rel (0) target = $region117
    $region116: #{raremed_forward.1} parent=1 // pred_region
      _
    $region117: #{raremed_forward.1} parent=1 // pred_fallthru
      _
    // Predicated region
    $region118: #{raremed_forward.1} parent=1 // pred_check
      _
    $region119: #{raremed_forward.1} parent=1 // pred_check_branch
      %146 = sbr.rel (0) target = $region121
    $region120: #{raremed_forward.1} parent=1 // pred_region
      _
    $region121: #{raremed_forward.1} parent=1 // pred_fallthru
      _
    // Predicated region
    $region122: #{raremed_forward.1} parent=1 // pred_check
      _
    $region123: #{raremed_forward.1} parent=1 // pred_check_branch
      %148 = sbr.rel (0) target = $region125
    $region124: #{raremed_forward.1} parent=1 // pred_region
      _
    $region125: #{raremed_forward.1} parent=1 // pred_fallthru
      _
    // Predicated region
    $region126: #{raremed_forward.1} parent=1 // pred_check
      _
    $region127: #{raremed_forward.1} parent=1 // pred_check_branch
      %150 = sbr.rel (0) target = $region129
    $region128: #{raremed_forward.1} parent=1 // pred_region
      _
    $region129: #{raremed_forward.1} parent=1 // pred_fallthru
      _
    // Predicated region
    $region130: #{raremed_forward.1} parent=1 // pred_check
      _
    $region131: #{raremed_forward.1} parent=1 // pred_check_branch
      %152 = sbr.rel (0) target = $region133
    $region132: #{raremed_forward.1} parent=1 // pred_region
      _
    $region133: #{raremed_forward.1} parent=1 // pred_fallthru
      _
    // Predicated region
    $region134: #{raremed_forward.1} parent=1 // pred_check
      _
    $region135: #{raremed_forward.1} parent=1 // pred_check_branch
      %154 = sbr.rel (0) target = $region137
    $region136: #{raremed_forward.1} parent=1 // pred_region
      _
    $region137: #{raremed_forward.1} parent=1 // pred_fallthru
      _
    // Predicated region
    $region138: #{raremed_forward.1} parent=1 // pred_check
      _
    $region139: #{raremed_forward.1} parent=1 // pred_check_branch
      %156 = sbr.rel (0) target = $region141
    $region140: #{raremed_forward.1} parent=1 // pred_region
      _
    $region141: #{raremed_forward.1} parent=1 // pred_fallthru
      _
    // Predicated region
    $region142: #{raremed_forward.1} parent=1 // pred_check
      _
    $region143: #{raremed_forward.1} parent=1 // pred_check_branch
      %158 = sbr.rel (0) target = $region145
    $region144: #{raremed_forward.1} parent=1 // pred_region
      _
    $region145: #{raremed_forward.1} parent=1 // pred_fallthru
      _
    // Predicated region
    $region146: #{raremed_forward.1} parent=1 // pred_check
      _
    $region147: #{raremed_forward.1} parent=1 // pred_check_branch
      %160 = sbr.rel (0) target = $region149
    $region148: #{raremed_forward.1} parent=1 // pred_region
      _
    $region149: #{raremed_forward.1} parent=1 // pred_fallthru
      _
    // Predicated region
    $region150: #{raremed_forward.1} parent=1 // pred_check
      _
    $region151: #{raremed_forward.1} parent=1 // pred_check_branch
      %162 = sbr.rel (0) target = $region153
    $region152: #{raremed_forward.1} parent=1 // pred_region
      _
    $region153: #{raremed_forward.1} parent=1 // pred_fallthru
      _
    %v163 = vld [vmem:[%s1] sm:$0xff]
    %v164 = vld [vmem:[%s1 + $0x8] sm:$0xff]
    %v165 = vld [vmem:[%s1 + $0x10] sm:$0x3f]
    %v166 = vld [vmem:[%s7] sm:$0xff]
    %v167 = vld [vmem:[%s7 + $0x8] sm:$0xff]
    %v168 = vld [vmem:[%s7 + $0x10] sm:$0xff]
    %v169 = vld [vmem:[%s7 + $0x18] sm:$0xff]
    %v170 = vld [vmem:[%s9] sm:$0x1]
    %v172 = vlaneseq
    %v173 = vshrl.u32 %v172, 7
    %v174 = vsub.s32 0, %v173
    %v175 = vrot.slane %v170, %v174
    %vm177 = vcmask 261120
    %v179 = vsel %vm177, %v163, 0
    %v182 = vsel %vm177, %v164, 0
    %v185 = vsel %vm177, %v165, 0
    %187 = vmatprep.subr.mxu0 0.0
    %188 = vmatpush1.msra.mxu0 %v166
    %189 = vmatprep.subr.mxu0 0.0
    %190 = vmatpush1.msra.mxu0 %v167
    %191 = vmatprep.subr.mxu0 0.0
    %192 = vmatpush1.msra.mxu0 %v168
    %193 = vmatprep.subr.mxu0 0.0
    %194 = vmatpush1.msra.mxu0 %v169
    %195 = vmatprep.subr.mxu0 0.0
    %196 = vmatpush1.msra.mxu0 0.0
    %197 = vmatprep.subr.mxu0 0.0
    %198 = vmatpush1.msra.mxu0 0.0
    %199 = vmatprep.subr.mxu0 0.0
    %200 = vmatpush1.msra.mxu0 0.0
    %201 = vmatprep.subr.mxu0 0.0
    %202 = vmatpush1.msra.mxu0 0.0
    %203 = vmatprep.subr.mxu0 0.0
    %204 = vmatpush1.msra.mxu0 0.0
    %205 = vmatprep.subr.mxu0 0.0
    %206 = vmatpush1.msra.mxu0 0.0
    %207 = vmatprep.subr.mxu0 0.0
    %208 = vmatpush1.msra.mxu0 0.0
    %209 = vmatprep.subr.mxu0 0.0
    %210 = vmatpush1.msra.mxu0 0.0
    %211 = vmatprep.subr.mxu0 0.0
    %212 = vmatpush1.msra.mxu0 0.0
    %213 = vmatprep.subr.mxu0 0.0
    %214 = vmatpush1.msra.mxu0 0.0
    %215 = vmatprep.subr.mxu0 0.0
    %216 = vmatpush1.msra.mxu0 0.0
    %217 = vmatprep.subr.mxu0 0.0
    %218 = vmatpush1.msra.mxu0 0.0
    %219 = vmatprep.subr.mxu0 0.0
    %220 = vmatpush1.msra.mxu0 0.0
    %221 = vmatprep.subr.mxu0 0.0
    %222 = vmatpush1.msra.mxu0 0.0
    %223 = vmatprep.subr.mxu0 0.0
    %224 = vmatpush1.msra.mxu0 0.0
    %225 = vmatprep.subr.mxu0 0.0
    %226 = vmatpush1.msra.mxu0 0.0
    %227 = vmatprep.subr.mxu0 0.0
    %228 = vmatpush1.msra.mxu0 0.0
    %229 = vmatprep.subr.mxu0 0.0
    %230 = vmatpush1.msra.mxu0 0.0
    %231 = vmatprep.subr.mxu0 0.0
    %232 = vmatpush1.msra.mxu0 0.0
    %233 = vmatprep.subr.mxu0 0.0
    %234 = vmatpush1.msra.mxu0 0.0
    %235 = vmatprep.subr.mxu0 0.0
    %236 = vmatpush1.msra.mxu0 0.0
    %237 = vmatprep.subr.mxu0 0.0
    %238 = vmatpush1.msra.mxu0 0.0
    %239 = vmatprep.subr.mxu0 0.0
    %240 = vmatpush1.msra.mxu0 0.0
    %241 = vmatprep.subr.mxu0 0.0
    %242 = vmatpush1.msra.mxu0 0.0
    %243 = vmatprep.subr.mxu0 0.0
    %244 = vmatpush1.msra.mxu0 0.0
    %245 = vmatprep.subr.mxu0 0.0
    %246 = vmatpush1.msra.mxu0 0.0
    %247 = vmatprep.subr.mxu0 0.0
    %248 = vmatpush1.msra.mxu0 0.0
    %249 = vmatprep.subr.mxu0 0.0
    %250 = vmatpush1.msra.mxu0 0.0
    %251 = vmatprep.mubr.f32.mxu0 0.0
    %252 = vmatmul.mubr.f32.gmra.mrb[0].mxu0 %v179
    %v253 = vpop.f32.mrb[0].mxu0
    %v254 = vadd.f32 %v175, %v253
    %v255 = vpop.f32.mrb[0].mxu0
    %256 = vmatprep.mubr.f32.mxu0 0.0
    %257 = vmatmul.mubr.f32.gmra.mrb[0].mxu0 %v182
    %v258 = vpop.f32.mrb[0].mxu0
    %v259 = vadd.f32 %v175, %v258
    %v260 = vpop.f32.mrb[0].mxu0
    %261 = vmatprep.mubr.f32.mxu0 0.0
    %262 = vmatmul.mubr.f32.gmra.mrb[0].mxu0 %v185
    %v263 = vpop.f32.mrb[0].mxu0
    %v264 = vadd.f32 %v175, %v263
    %v265 = vpop.f32.mrb[0].mxu0
    %266 = vdwg.mxu0
    %v267 = vmax.f32 %v254, 0.0
    %v268 = vmax.f32 %v259, 0.0
    %v269 = vmax.f32 %v264, 0.0
    %v270 = vld [vmem:[%s11] sm:$0x1]
    %v272 = vlaneseq
    %v273 = vshrl.u32 %v272, 7
    %v274 = vsub.s32 0, %v273
    %v275 = vrot.slane %v270, %v274
    %v277 = vadd.f32 %v267, %v275
    %v278 = vadd.f32 %v268, %v275
    %v279 = vadd.f32 %v269, %v275
    %v280 = vld [vmem:[%s13] sm:$0xff]
    %v281 = vld [vmem:[%s13 + $0x8] sm:$0xff]
    %v282 = vld [vmem:[%s13 + $0x10] sm:$0xff]
    %v283 = vld [vmem:[%s13 + $0x18] sm:$0xff]
    %v284 = vld [vmem:[%s15] sm:$0x1]
    %v286 = vlaneseq
    %v287 = vshrl.u32 %v286, 7
    %v288 = vsub.s32 0, %v287
    %v289 = vrot.slane %v284, %v288
    %291 = vmatprep.subr.mxu0 0.0
    %292 = vmatpush1.msra.mxu0 %v280
    %293 = vmatprep.subr.mxu0 0.0
    %294 = vmatpush1.msra.mxu0 %v281
    %295 = vmatprep.subr.mxu0 0.0
    %296 = vmatpush1.msra.mxu0 %v282
    %297 = vmatprep.subr.mxu0 0.0
    %298 = vmatpush1.msra.mxu0 %v283
    %299 = vmatprep.subr.mxu0 0.0
    %300 = vmatpush1.msra.mxu0 0.0
    %301 = vmatprep.subr.mxu0 0.0
    %302 = vmatpush1.msra.mxu0 0.0
    %303 = vmatprep.subr.mxu0 0.0
    %304 = vmatpush1.msra.mxu0 0.0
    %305 = vmatprep.subr.mxu0 0.0
    %306 = vmatpush1.msra.mxu0 0.0
    %307 = vmatprep.subr.mxu0 0.0
    %308 = vmatpush1.msra.mxu0 0.0
    %309 = vmatprep.subr.mxu0 0.0
    %310 = vmatpush1.msra.mxu0 0.0
    %311 = vmatprep.subr.mxu0 0.0
    %312 = vmatpush1.msra.mxu0 0.0
    %313 = vmatprep.subr.mxu0 0.0
    %314 = vmatpush1.msra.mxu0 0.0
    %315 = vmatprep.subr.mxu0 0.0
    %316 = vmatpush1.msra.mxu0 0.0
    %317 = vmatprep.subr.mxu0 0.0
    %318 = vmatpush1.msra.mxu0 0.0
    %319 = vmatprep.subr.mxu0 0.0
    %320 = vmatpush1.msra.mxu0 0.0
    %321 = vmatprep.subr.mxu0 0.0
    %322 = vmatpush1.msra.mxu0 0.0
    %323 = vmatprep.subr.mxu0 0.0
    %324 = vmatpush1.msra.mxu0 0.0
    %325 = vmatprep.subr.mxu0 0.0
    %326 = vmatpush1.msra.mxu0 0.0
    %327 = vmatprep.subr.mxu0 0.0
    %328 = vmatpush1.msra.mxu0 0.0
    %329 = vmatprep.subr.mxu0 0.0
    %330 = vmatpush1.msra.mxu0 0.0
    %331 = vmatprep.subr.mxu0 0.0
    %332 = vmatpush1.msra.mxu0 0.0
    %333 = vmatprep.subr.mxu0 0.0
    %334 = vmatpush1.msra.mxu0 0.0
    %335 = vmatprep.subr.mxu0 0.0
    %336 = vmatpush1.msra.mxu0 0.0
    %337 = vmatprep.subr.mxu0 0.0
    %338 = vmatpush1.msra.mxu0 0.0
    %339 = vmatprep.subr.mxu0 0.0
    %340 = vmatpush1.msra.mxu0 0.0
    %341 = vmatprep.subr.mxu0 0.0
    %342 = vmatpush1.msra.mxu0 0.0
    %343 = vmatprep.subr.mxu0 0.0
    %344 = vmatpush1.msra.mxu0 0.0
    %345 = vmatprep.subr.mxu0 0.0
    %346 = vmatpush1.msra.mxu0 0.0
    %347 = vmatprep.subr.mxu0 0.0
    %348 = vmatpush1.msra.mxu0 0.0
    %349 = vmatprep.subr.mxu0 0.0
    %350 = vmatpush1.msra.mxu0 0.0
    %351 = vmatprep.subr.mxu0 0.0
    %352 = vmatpush1.msra.mxu0 0.0
    %353 = vmatprep.subr.mxu0 0.0
    %354 = vmatpush1.msra.mxu0 0.0
    %355 = vmatprep.mubr.f32.mxu0 0.0
    %356 = vmatmul.mubr.f32.gmra.mrb[0].mxu0 %v179
    %v357 = vpop.f32.mrb[0].mxu0
    %v358 = vadd.f32 %v289, %v357
    %v359 = vpop.f32.mrb[0].mxu0
    %360 = vmatprep.mubr.f32.mxu0 0.0
    %361 = vmatmul.mubr.f32.gmra.mrb[0].mxu0 %v182
    %v362 = vpop.f32.mrb[0].mxu0
    %v363 = vadd.f32 %v289, %v362
    %v364 = vpop.f32.mrb[0].mxu0
    %365 = vmatprep.mubr.f32.mxu0 0.0
    %366 = vmatmul.mubr.f32.gmra.mrb[0].mxu0 %v185
    %v367 = vpop.f32.mrb[0].mxu0
    %v368 = vadd.f32 %v289, %v367
    %v369 = vpop.f32.mrb[0].mxu0
    %370 = vdwg.mxu0
    %v371 = vmax.f32 %v358, 0.0
    %v372 = vmax.f32 %v363, 0.0
    %v373 = vmax.f32 %v368, 0.0
    %v374 = vld [vmem:[%s17] sm:$0x1]
    %v376 = vlaneseq
    %v377 = vshrl.u32 %v376, 7
    %v378 = vsub.s32 0, %v377
    %v379 = vrot.slane %v374, %v378
    %v381 = vadd.f32 %v371, %v379
    %v382 = vadd.f32 %v372, %v379
    %v383 = vadd.f32 %v373, %v379
    %v384 = vld [vmem:[%s3] sm:$0xff]
    %v385 = vld [vmem:[%s3 + $0x8] sm:$0xff]
    %v386 = vld [vmem:[%s3 + $0x10] sm:$0x3f]
    %vm387 = vcmp.gt.f32.partialorder %v384, 0.5
    %vm388 = vcmp.gt.f32.partialorder %v385, 0.5
    %vm389 = vcmp.gt.f32.partialorder %v386, 0.5
    %v390 = vsel %vm387, 1, 0
    %v391 = vsel %vm388, 1, 0
    %v392 = vsel %vm389, 1, 0
    %393 = vset.pattern.permute.xlu0 0
    %394 = vperm.xlu0 %393, %v390
    %v395 = vpop.permute.xlu0 %394
    %396 = vset.pattern.permute.xlu0 0
    %397 = vperm.xlu0 %396, %v391
    %v398 = vpop.permute.xlu0 %397
    %399 = vset.pattern.permute.xlu0 0
    %400 = vperm.xlu0 %399, %v392
    %v401 = vpop.permute.xlu0 %400
    %vm402 = vcmp.eq.s32.totalorder %v395, 1
    %vm403 = vcmp.eq.s32.totalorder %v398, 1
    %vm404 = vcmp.eq.s32.totalorder %v401, 1
    %v405 = vsel %vm402, %v277, %v381
    %v406 = vsel %vm403, %v278, %v382
    %v407 = vsel %vm404, %v279, %v383
    %v408 = vld [vmem:[%s5] sm:$0xff]
    %v409 = vld [vmem:[%s5 + $0x8] sm:$0xff]
    %v410 = vld [vmem:[%s5 + $0x10] sm:$0x3f]
    %v411 = vadd.f32 %v405, %v408
    %v412 = vadd.f32 %v406, %v409
    %v413 = vadd.f32 %v407, %v410
    %v414 = vld [vmem:[%s19] sm:$0xff]
    %v415 = vld [vmem:[%s19 + $0x8] sm:$0xff]
    %v416 = vld [vmem:[%s19 + $0x10] sm:$0x3f]
    %v417 = vld [vmem:[%s19 + $0x18] sm:$0xff]
    %v418 = vld [vmem:[%s19 + $0x20] sm:$0xff]
    %v419 = vld [vmem:[%s19 + $0x28] sm:$0x3f]
    %v420 = vld [vmem:[%s29] sm:$0xff]
    %v421 = vld [vmem:[%s29 + $0x8] sm:$0xff]
    %v422 = vld [vmem:[%s29 + $0x10] sm:$0xff]
    %v423 = vld [vmem:[%s29 + $0x18] sm:$0xff]
    %v424 = vld [vmem:[%s31] sm:$0x1]
    %v425 = vld [vmem:[%s33] sm:$0xff]
    %v426 = vld [vmem:[%s33 + $0x8] sm:$0xff]
    %v427 = vld [vmem:[%s33 + $0x10] sm:$0xff]
    %v428 = vld [vmem:[%s33 + $0x18] sm:$0xff]
    %v429 = vld [vmem:[%s35] sm:$0x1]
    %v430 = vld [vmem:[%s37] sm:$0x1]
    %v431 = vld [vmem:[%s39] sm:$0x1]
    %v432 = vld [vmem:[%s41] sm:$0xff]
    %v433 = vld [vmem:[%s41 + $0x8] sm:$0xff]
    %v434 = vld [vmem:[%s41 + $0x10] sm:$0xff]
    %v435 = vld [vmem:[%s41 + $0x18] sm:$0xff]
    %v436 = vld [vmem:[%s43] sm:$0x1]
    %v437 = vld [vmem:[%s45] sm:$0xff]
    %v438 = vld [vmem:[%s45 + $0x8] sm:$0xff]
    %v439 = vld [vmem:[%s45 + $0x10] sm:$0xff]
    %v440 = vld [vmem:[%s45 + $0x18] sm:$0xff]
    %v441 = vld [vmem:[%s45 + $0x20] sm:$0xff]
    %v442 = vld [vmem:[%s45 + $0x28] sm:$0xff]
    %v443 = vld [vmem:[%s45 + $0x30] sm:$0xff]
    %v444 = vld [vmem:[%s45 + $0x38] sm:$0xff]
    %v445 = vld [vmem:[%s47] sm:$0x1]
    %v446 = vld [vmem:[%s49] sm:$0x1]
    %v447 = vld [vmem:[%s51] sm:$0x1]
    %v449 = vlaneseq
    %v450 = vshrl.u32 %v449, 7
    %v451 = vsub.s32 0, %v450
    %v452 = vrot.slane %v424, %v451
    %v455 = vsel %vm177, %v411, 0
    %v458 = vsel %vm177, %v412, 0
    %v461 = vsel %vm177, %v413, 0
    %463 = vmatprep.subr.mxu0 0.0
    %464 = vmatpush1.msra.mxu0 %v420
    %465 = vmatprep.subr.mxu0 0.0
    %466 = vmatpush1.msra.mxu0 %v421
    %467 = vmatprep.subr.mxu0 0.0
    %468 = vmatpush1.msra.mxu0 %v422
    %469 = vmatprep.subr.mxu0 0.0
    %470 = vmatpush1.msra.mxu0 %v423
    %471 = vmatprep.subr.mxu0 0.0
    %472 = vmatpush1.msra.mxu0 0.0
    %473 = vmatprep.subr.mxu0 0.0
    %474 = vmatpush1.msra.mxu0 0.0
    %475 = vmatprep.subr.mxu0 0.0
    %476 = vmatpush1.msra.mxu0 0.0
    %477 = vmatprep.subr.mxu0 0.0
    %478 = vmatpush1.msra.mxu0 0.0
    %479 = vmatprep.subr.mxu0 0.0
    %480 = vmatpush1.msra.mxu0 0.0
    %481 = vmatprep.subr.mxu0 0.0
    %482 = vmatpush1.msra.mxu0 0.0
    %483 = vmatprep.subr.mxu0 0.0
    %484 = vmatpush1.msra.mxu0 0.0
    %485 = vmatprep.subr.mxu0 0.0
    %486 = vmatpush1.msra.mxu0 0.0
    %487 = vmatprep.subr.mxu0 0.0
    %488 = vmatpush1.msra.mxu0 0.0
    %489 = vmatprep.subr.mxu0 0.0
    %490 = vmatpush1.msra.mxu0 0.0
    %491 = vmatprep.subr.mxu0 0.0
    %492 = vmatpush1.msra.mxu0 0.0
    %493 = vmatprep.subr.mxu0 0.0
    %494 = vmatpush1.msra.mxu0 0.0
    %495 = vmatprep.subr.mxu0 0.0
    %496 = vmatpush1.msra.mxu0 0.0
    %497 = vmatprep.subr.mxu0 0.0
    %498 = vmatpush1.msra.mxu0 0.0
    %499 = vmatprep.subr.mxu0 0.0
    %500 = vmatpush1.msra.mxu0 0.0
    %501 = vmatprep.subr.mxu0 0.0
    %502 = vmatpush1.msra.mxu0 0.0
    %503 = vmatprep.subr.mxu0 0.0
    %504 = vmatpush1.msra.mxu0 0.0
    %505 = vmatprep.subr.mxu0 0.0
    %506 = vmatpush1.msra.mxu0 0.0
    %507 = vmatprep.subr.mxu0 0.0
    %508 = vmatpush1.msra.mxu0 0.0
    %509 = vmatprep.subr.mxu0 0.0
    %510 = vmatpush1.msra.mxu0 0.0
    %511 = vmatprep.subr.mxu0 0.0
    %512 = vmatpush1.msra.mxu0 0.0
    %513 = vmatprep.subr.mxu0 0.0
    %514 = vmatpush1.msra.mxu0 0.0
    %515 = vmatprep.subr.mxu0 0.0
    %516 = vmatpush1.msra.mxu0 0.0
    %517 = vmatprep.subr.mxu0 0.0
    %518 = vmatpush1.msra.mxu0 0.0
    %519 = vmatprep.subr.mxu0 0.0
    %520 = vmatpush1.msra.mxu0 0.0
    %521 = vmatprep.subr.mxu0 0.0
    %522 = vmatpush1.msra.mxu0 0.0
    %523 = vmatprep.subr.mxu0 0.0
    %524 = vmatpush1.msra.mxu0 0.0
    %525 = vmatprep.subr.mxu0 0.0
    %526 = vmatpush1.msra.mxu0 0.0
    %527 = vmatprep.mubr.f32.mxu0 0.0
    %528 = vmatmul.mubr.f32.gmra.mrb[0].mxu0 %v455
    %v529 = vpop.f32.mrb[0].mxu0
    %v530 = vadd.f32 %v452, %v529
    %v531 = vpop.f32.mrb[0].mxu0
    %532 = vmatprep.mubr.f32.mxu0 0.0
    %533 = vmatmul.mubr.f32.gmra.mrb[0].mxu0 %v458
    %v534 = vpop.f32.mrb[0].mxu0
    %v535 = vadd.f32 %v452, %v534
    %v536 = vpop.f32.mrb[0].mxu0
    %537 = vmatprep.mubr.f32.mxu0 0.0
    %538 = vmatmul.mubr.f32.gmra.mrb[0].mxu0 %v461
    %v539 = vpop.f32.mrb[0].mxu0
    %v540 = vadd.f32 %v452, %v539
    %v541 = vpop.f32.mrb[0].mxu0
    %542 = vdwg.mxu0
    %546 = vrot.lane.b32.xlu0 %v530, 112
    %v547 = vpop.permute.xlu0 %546
    %548 = vrot.lane.b32.xlu0 %v535, 112
    %v549 = vpop.permute.xlu0 %548
    %550 = vrot.lane.b32.xlu0 %v540, 112
    %v551 = vpop.permute.xlu0 %550
    %552 = vrot.lane.b32.xlu0 %v530, 96
    %v553 = vpop.permute.xlu0 %552
    %554 = vrot.lane.b32.xlu0 %v535, 96
    %v555 = vpop.permute.xlu0 %554
    %556 = vrot.lane.b32.xlu0 %v540, 96
    %v557 = vpop.permute.xlu0 %556
    %vm558 = vcmask 130048
    %v559 = vsel %vm558, %v530, 0
    %v561 = vsel %vm558, %v535, 0
    %v563 = vsel %vm558, %v540, 0
    %v565 = vsel %vm558, %v553, 0
    %v567 = vsel %vm558, %v555, 0
    %v569 = vsel %vm558, %v557, 0
    %571 = vmatprep.subr.mxu0 0.0
    %572 = vmatpush1.xpose.msra.mxu0 %v565
    %573 = vmatprep.subr.mxu0 0.0
    %574 = vmatpush1.xpose.msra.mxu0 %v567
    %575 = vmatprep.subr.mxu0 0.0
    %576 = vmatpush1.xpose.msra.mxu0 %v569
    %577 = vmatprep.subr.mxu0 0.0
    %578 = vmatpush1.xpose.msra.mxu0 0.0
    %579 = vmatprep.subr.mxu0 0.0
    %580 = vmatpush1.xpose.msra.mxu0 0.0
    %581 = vmatprep.subr.mxu0 0.0
    %582 = vmatpush1.xpose.msra.mxu0 0.0
    %583 = vmatprep.subr.mxu0 0.0
    %584 = vmatpush1.xpose.msra.mxu0 0.0
    %585 = vmatprep.subr.mxu0 0.0
    %586 = vmatpush1.xpose.msra.mxu0 0.0
    %587 = vmatprep.subr.mxu0 0.0
    %588 = vmatpush1.xpose.msra.mxu0 0.0
    %589 = vmatprep.subr.mxu0 0.0
    %590 = vmatpush1.xpose.msra.mxu0 0.0
    %591 = vmatprep.subr.mxu0 0.0
    %592 = vmatpush1.xpose.msra.mxu0 0.0
    %593 = vmatprep.subr.mxu0 0.0
    %594 = vmatpush1.xpose.msra.mxu0 0.0
    %595 = vmatprep.subr.mxu0 0.0
    %596 = vmatpush1.xpose.msra.mxu0 0.0
    %597 = vmatprep.subr.mxu0 0.0
    %598 = vmatpush1.xpose.msra.mxu0 0.0
    %599 = vmatprep.subr.mxu0 0.0
    %600 = vmatpush1.xpose.msra.mxu0 0.0
    %601 = vmatprep.subr.mxu0 0.0
    %602 = vmatpush1.xpose.msra.mxu0 0.0
    %603 = vmatprep.subr.mxu0 0.0
    %604 = vmatpush1.xpose.msra.mxu0 0.0
    %605 = vmatprep.subr.mxu0 0.0
    %606 = vmatpush1.xpose.msra.mxu0 0.0
    %607 = vmatprep.subr.mxu0 0.0
    %608 = vmatpush1.xpose.msra.mxu0 0.0
    %609 = vmatprep.subr.mxu0 0.0
    %610 = vmatpush1.xpose.msra.mxu0 0.0
    %611 = vmatprep.subr.mxu0 0.0
    %612 = vmatpush1.xpose.msra.mxu0 0.0
    %613 = vmatprep.subr.mxu0 0.0
    %614 = vmatpush1.xpose.msra.mxu0 0.0
    %615 = vmatprep.subr.mxu0 0.0
    %616 = vmatpush1.xpose.msra.mxu0 0.0
    %617 = vmatprep.subr.mxu0 0.0
    %618 = vmatpush1.xpose.msra.mxu0 0.0
    %619 = vmatprep.subr.mxu0 0.0
    %620 = vmatpush1.xpose.msra.mxu0 0.0
    %621 = vmatprep.subr.mxu0 0.0
    %622 = vmatpush1.xpose.msra.mxu0 0.0
    %623 = vmatprep.subr.mxu0 0.0
    %624 = vmatpush1.xpose.msra.mxu0 0.0
    %625 = vmatprep.subr.mxu0 0.0
    %626 = vmatpush1.xpose.msra.mxu0 0.0
    %627 = vmatprep.subr.mxu0 0.0
    %628 = vmatpush1.xpose.msra.mxu0 0.0
    %629 = vmatprep.subr.mxu0 0.0
    %630 = vmatpush1.xpose.msra.mxu0 0.0
    %631 = vmatprep.subr.mxu0 0.0
    %632 = vmatpush1.xpose.msra.mxu0 0.0
    %633 = vmatprep.subr.mxu0 0.0
    %634 = vmatpush1.xpose.msra.mxu0 0.0
    %635 = vmatprep.mubr.f32.mxu0 0.0
    %636 = vmatmul.mubr.f32.gmra.mrb[0].mxu0 %v559
    %v637 = vpop.f32.mrb[0].mxu0
    %v638 = vadd.f32 %v414, %v637
    %v639 = vpop.f32.mrb[0].mxu0
    %640 = vmatprep.mubr.f32.mxu0 0.0
    %641 = vmatmul.mubr.f32.gmra.mrb[0].mxu0 %v561
    %v642 = vpop.f32.mrb[0].mxu0
    %v643 = vadd.f32 %v415, %v642
    %v644 = vpop.f32.mrb[0].mxu0
    %645 = vmatprep.mubr.f32.mxu0 0.0
    %646 = vmatmul.mubr.f32.gmra.mrb[0].mxu0 %v563
    %v647 = vpop.f32.mrb[0].mxu0
    %v648 = vadd.f32 %v416, %v647
    %v649 = vpop.f32.mrb[0].mxu0
    %650 = vdwg.mxu0
    %651 = vrot.lane.b32.xlu0 %v547, 96
    %v652 = vpop.permute.xlu0 %651
    %653 = vrot.lane.b32.xlu0 %v549, 96
    %v654 = vpop.permute.xlu0 %653
    %655 = vrot.lane.b32.xlu0 %v551, 96
    %v656 = vpop.permute.xlu0 %655
    %v657 = vsel %vm558, %v547, 0
    %v659 = vsel %vm558, %v549, 0
    %v661 = vsel %vm558, %v551, 0
    %v663 = vsel %vm558, %v652, 0
    %v665 = vsel %vm558, %v654, 0
    %v667 = vsel %vm558, %v656, 0
    %669 = vmatprep.subr.mxu0 0.0
    %670 = vmatpush1.xpose.msra.mxu0 %v663
    %671 = vmatprep.subr.mxu0 0.0
    %672 = vmatpush1.xpose.msra.mxu0 %v665
    %673 = vmatprep.subr.mxu0 0.0
    %674 = vmatpush1.xpose.msra.mxu0 %v667
    %675 = vmatprep.subr.mxu0 0.0
    %676 = vmatpush1.xpose.msra.mxu0 0.0
    %677 = vmatprep.subr.mxu0 0.0
    %678 = vmatpush1.xpose.msra.mxu0 0.0
    %679 = vmatprep.subr.mxu0 0.0
    %680 = vmatpush1.xpose.msra.mxu0 0.0
    %681 = vmatprep.subr.mxu0 0.0
    %682 = vmatpush1.xpose.msra.mxu0 0.0
    %683 = vmatprep.subr.mxu0 0.0
    %684 = vmatpush1.xpose.msra.mxu0 0.0
    %685 = vmatprep.subr.mxu0 0.0
    %686 = vmatpush1.xpose.msra.mxu0 0.0
    %687 = vmatprep.subr.mxu0 0.0
    %688 = vmatpush1.xpose.msra.mxu0 0.0
    %689 = vmatprep.subr.mxu0 0.0
    %690 = vmatpush1.xpose.msra.mxu0 0.0
    %691 = vmatprep.subr.mxu0 0.0
    %692 = vmatpush1.xpose.msra.mxu0 0.0
    %693 = vmatprep.subr.mxu0 0.0
    %694 = vmatpush1.xpose.msra.mxu0 0.0
    %695 = vmatprep.subr.mxu0 0.0
    %696 = vmatpush1.xpose.msra.mxu0 0.0
    %697 = vmatprep.subr.mxu0 0.0
    %698 = vmatpush1.xpose.msra.mxu0 0.0
    %699 = vmatprep.subr.mxu0 0.0
    %700 = vmatpush1.xpose.msra.mxu0 0.0
    %701 = vmatprep.subr.mxu0 0.0
    %702 = vmatpush1.xpose.msra.mxu0 0.0
    %703 = vmatprep.subr.mxu0 0.0
    %704 = vmatpush1.xpose.msra.mxu0 0.0
    %705 = vmatprep.subr.mxu0 0.0
    %706 = vmatpush1.xpose.msra.mxu0 0.0
    %707 = vmatprep.subr.mxu0 0.0
    %708 = vmatpush1.xpose.msra.mxu0 0.0
    %709 = vmatprep.subr.mxu0 0.0
    %710 = vmatpush1.xpose.msra.mxu0 0.0
    %711 = vmatprep.subr.mxu0 0.0
    %712 = vmatpush1.xpose.msra.mxu0 0.0
    %713 = vmatprep.subr.mxu0 0.0
    %714 = vmatpush1.xpose.msra.mxu0 0.0
    %715 = vmatprep.subr.mxu0 0.0
    %716 = vmatpush1.xpose.msra.mxu0 0.0
    %717 = vmatprep.subr.mxu0 0.0
    %718 = vmatpush1.xpose.msra.mxu0 0.0
    %719 = vmatprep.subr.mxu0 0.0
    %720 = vmatpush1.xpose.msra.mxu0 0.0
    %721 = vmatprep.subr.mxu0 0.0
    %722 = vmatpush1.xpose.msra.mxu0 0.0
    %723 = vmatprep.subr.mxu0 0.0
    %724 = vmatpush1.xpose.msra.mxu0 0.0
    %725 = vmatprep.subr.mxu0 0.0
    %726 = vmatpush1.xpose.msra.mxu0 0.0
    %727 = vmatprep.subr.mxu0 0.0
    %728 = vmatpush1.xpose.msra.mxu0 0.0
    %729 = vmatprep.subr.mxu0 0.0
    %730 = vmatpush1.xpose.msra.mxu0 0.0
    %731 = vmatprep.subr.mxu0 0.0
    %732 = vmatpush1.xpose.msra.mxu0 0.0
    %733 = vmatprep.mubr.f32.mxu0 0.0
    %734 = vmatmul.mubr.f32.gmra.mrb[0].mxu0 %v657
    %v735 = vpop.f32.mrb[0].mxu0
    %v736 = vadd.f32 %v417, %v735
    %v737 = vpop.f32.mrb[0].mxu0
    %738 = vmatprep.mubr.f32.mxu0 0.0
    %739 = vmatmul.mubr.f32.gmra.mrb[0].mxu0 %v659
    %v740 = vpop.f32.mrb[0].mxu0
    %v741 = vadd.f32 %v418, %v740
    %v742 = vpop.f32.mrb[0].mxu0
    %743 = vmatprep.mubr.f32.mxu0 0.0
    %744 = vmatmul.mubr.f32.gmra.mrb[0].mxu0 %v661
    %v745 = vpop.f32.mrb[0].mxu0
    %v746 = vadd.f32 %v419, %v745
    %v747 = vpop.f32.mrb[0].mxu0
    %748 = vdwg.mxu0
    %vm749 = vcmask 179200
    %v750 = vsel %vm749, %v638, -inf
    %751 = vmax.xlane.f32.xlu0 %v750
    %v752 = vpop.xlane.xlu0 %751
    %v753 = vsel %vm749, %v643, -inf
    %754 = vmax.xlane.f32.xlu0 %v753
    %v755 = vpop.xlane.xlu0 %754
    %vm756 = vcmask 177152
    %v757 = vsel %vm756, %v648, -inf
    %758 = vmax.xlane.f32.xlu0 %v757
    %v759 = vpop.xlane.xlu0 %758
    %v760 = vsel %vm749, %v736, -inf
    %761 = vmax.xlane.f32.xlu0 %v760
    %v762 = vpop.xlane.xlu0 %761
    %v763 = vsel %vm749, %v741, -inf
    %764 = vmax.xlane.f32.xlu0 %v763
    %v765 = vpop.xlane.xlu0 %764
    %v766 = vsel %vm756, %v746, -inf
    %767 = vmax.xlane.f32.xlu0 %v766
    %v768 = vpop.xlane.xlu0 %767
    %v769 = vsub.f32 %v638, %v752
    %v770 = vsub.f32 %v643, %v755
    %v771 = vsub.f32 %v648, %v759
    %v772 = vsub.f32 %v736, %v762
    %v773 = vsub.f32 %v741, %v765
    %v774 = vsub.f32 %v746, %v768
    %v775 = vmul.f32 %v769, 1.442695
    %v776 = vpow.pop %v775
    %v777 = vmul.f32 %v770, 1.442695
    %v778 = vpow.pop %v777
    %v779 = vmul.f32 %v771, 1.442695
    %v780 = vpow.pop %v779
    %v781 = vmul.f32 %v772, 1.442695
    %v782 = vpow.pop %v781
    %v783 = vmul.f32 %v773, 1.442695
    %v784 = vpow.pop %v783
    %v785 = vmul.f32 %v774, 1.442695
    %v786 = vpow.pop %v785
    %v787 = vsel %vm749, %v776, 0.0
    %788 = vadd.xlane.f32.xlu0 %v787
    %v789 = vpop.xlane.xlu0 %788
    %v790 = vsel %vm749, %v778, 0.0
    %791 = vadd.xlane.f32.xlu0 %v790
    %v792 = vpop.xlane.xlu0 %791
    %v793 = vsel %vm756, %v780, 0.0
    %794 = vadd.xlane.f32.xlu0 %v793
    %v795 = vpop.xlane.xlu0 %794
    %v796 = vsel %vm749, %v782, 0.0
    %797 = vadd.xlane.f32.xlu0 %v796
    %v798 = vpop.xlane.xlu0 %797
    %v799 = vsel %vm749, %v784, 0.0
    %800 = vadd.xlane.f32.xlu0 %v799
    %v801 = vpop.xlane.xlu0 %800
    %v802 = vsel %vm756, %v786, 0.0
    %803 = vadd.xlane.f32.xlu0 %v802
    %v804 = vpop.xlane.xlu0 %803
    %v805 = vrcp.pop %v789
    %v806 = vrcp.pop %v792
    %v807 = vrcp.pop %v795
    %v808 = vrcp.pop %v798
    %v809 = vrcp.pop %v801
    %v810 = vrcp.pop %v804
    %v811 = vmul.f32 %v776, %v805
    %v812 = vmul.f32 %v778, %v806
    %v813 = vmul.f32 %v780, %v807
    %v814 = vmul.f32 %v782, %v808
    %v815 = vmul.f32 %v784, %v809
    %v816 = vmul.f32 %v786, %v810
    %817 = vrot.lane.b32.xlu0 %v530, 64
    %v818 = vpop.permute.xlu0 %817
    %819 = vrot.lane.b32.xlu0 %v535, 64
    %v820 = vpop.permute.xlu0 %819
    %821 = vrot.lane.b32.xlu0 %v540, 64
    %v822 = vpop.permute.xlu0 %821
    %v826 = vsel %vm749, %v811, 0
    %v829 = vsel %vm749, %v812, 0
    %v832 = vsel %vm749, %v813, 0
    %vm834 = vcmask 1045504
    %v835 = vsel %vm834, %v822, 0
    %837 = vmatprep.subr.mxu0 0.0
    %838 = vmatpush1.msra.mxu0 %v818
    %839 = vmatprep.subr.mxu0 0.0
    %840 = vmatpush1.msra.mxu0 %v820
    %841 = vmatprep.subr.mxu0 0.0
    %842 = vmatpush1.msra.mxu0 %v835
    %843 = vmatprep.subr.mxu0 0.0
    %844 = vmatpush1.msra.mxu0 0.0
    %845 = vmatprep.subr.mxu0 0.0
    %846 = vmatpush1.msra.mxu0 0.0
    %847 = vmatprep.subr.mxu0 0.0
    %848 = vmatpush1.msra.mxu0 0.0
    %849 = vmatprep.subr.mxu0 0.0
    %850 = vmatpush1.msra.mxu0 0.0
    %851 = vmatprep.subr.mxu0 0.0
    %852 = vmatpush1.msra.mxu0 0.0
    %853 = vmatprep.subr.mxu0 0.0
    %854 = vmatpush1.msra.mxu0 0.0
    %855 = vmatprep.subr.mxu0 0.0
    %856 = vmatpush1.msra.mxu0 0.0
    %857 = vmatprep.subr.mxu0 0.0
    %858 = vmatpush1.msra.mxu0 0.0
    %859 = vmatprep.subr.mxu0 0.0
    %860 = vmatpush1.msra.mxu0 0.0
    %861 = vmatprep.subr.mxu0 0.0
    %862 = vmatpush1.msra.mxu0 0.0
    %863 = vmatprep.subr.mxu0 0.0
    %864 = vmatpush1.msra.mxu0 0.0
    %865 = vmatprep.subr.mxu0 0.0
    %866 = vmatpush1.msra.mxu0 0.0
    %867 = vmatprep.subr.mxu0 0.0
    %868 = vmatpush1.msra.mxu0 0.0
    %869 = vmatprep.subr.mxu0 0.0
    %870 = vmatpush1.msra.mxu0 0.0
    %871 = vmatprep.subr.mxu0 0.0
    %872 = vmatpush1.msra.mxu0 0.0
    %873 = vmatprep.subr.mxu0 0.0
    %874 = vmatpush1.msra.mxu0 0.0
    %875 = vmatprep.subr.mxu0 0.0
    %876 = vmatpush1.msra.mxu0 0.0
    %877 = vmatprep.subr.mxu0 0.0
    %878 = vmatpush1.msra.mxu0 0.0
    %879 = vmatprep.subr.mxu0 0.0
    %880 = vmatpush1.msra.mxu0 0.0
    %881 = vmatprep.subr.mxu0 0.0
    %882 = vmatpush1.msra.mxu0 0.0
    %883 = vmatprep.subr.mxu0 0.0
    %884 = vmatpush1.msra.mxu0 0.0
    %885 = vmatprep.subr.mxu0 0.0
    %886 = vmatpush1.msra.mxu0 0.0
    %887 = vmatprep.subr.mxu0 0.0
    %888 = vmatpush1.msra.mxu0 0.0
    %889 = vmatprep.subr.mxu0 0.0
    %890 = vmatpush1.msra.mxu0 0.0
    %891 = vmatprep.subr.mxu0 0.0
    %892 = vmatpush1.msra.mxu0 0.0
    %893 = vmatprep.subr.mxu0 0.0
    %894 = vmatpush1.msra.mxu0 0.0
    %895 = vmatprep.subr.mxu0 0.0
    %896 = vmatpush1.msra.mxu0 0.0
    %897 = vmatprep.subr.mxu0 0.0
    %898 = vmatpush1.msra.mxu0 0.0
    %899 = vmatprep.subr.mxu0 0.0
    %900 = vmatpush1.msra.mxu0 0.0
    %901 = vmatprep.mubr.f32.mxu0 0.0
    %902 = vmatmul.mubr.f32.gmra.mrb[0].mxu0 %v826
    %v903 = vpop.f32.mrb[0].mxu0
    %v904 = vadd.f32 0.0, %v903
    %v905 = vpop.f32.mrb[0].mxu0
    %906 = vmatprep.mubr.f32.mxu0 0.0
    %907 = vmatmul.mubr.f32.gmra.mrb[0].mxu0 %v829
    %v908 = vpop.f32.mrb[0].mxu0
    %v909 = vadd.f32 0.0, %v908
    %v910 = vpop.f32.mrb[0].mxu0
    %911 = vmatprep.mubr.f32.mxu0 0.0
    %912 = vmatmul.mubr.f32.gmra.mrb[0].mxu0 %v832
    %v913 = vpop.f32.mrb[0].mxu0
    %v914 = vadd.f32 0.0, %v913
    %v915 = vpop.f32.mrb[0].mxu0
    %916 = vdwg.mxu0
    %917 = vrot.lane.b32.xlu0 %v547, 64
    %v918 = vpop.permute.xlu0 %917
    %919 = vrot.lane.b32.xlu0 %v549, 64
    %v920 = vpop.permute.xlu0 %919
    %921 = vrot.lane.b32.xlu0 %v551, 64
    %v922 = vpop.permute.xlu0 %921
    %v926 = vsel %vm749, %v814, 0
    %v929 = vsel %vm749, %v815, 0
    %v932 = vsel %vm749, %v816, 0
    %v934 = vsel %vm834, %v922, 0
    %936 = vmatprep.subr.mxu0 0.0
    %937 = vmatpush1.msra.mxu0 %v918
    %938 = vmatprep.subr.mxu0 0.0
    %939 = vmatpush1.msra.mxu0 %v920
    %940 = vmatprep.subr.mxu0 0.0
    %941 = vmatpush1.msra.mxu0 %v934
    %942 = vmatprep.subr.mxu0 0.0
    %943 = vmatpush1.msra.mxu0 0.0
    %944 = vmatprep.subr.mxu0 0.0
    %945 = vmatpush1.msra.mxu0 0.0
    %946 = vmatprep.subr.mxu0 0.0
    %947 = vmatpush1.msra.mxu0 0.0
    %948 = vmatprep.subr.mxu0 0.0
    %949 = vmatpush1.msra.mxu0 0.0
    %950 = vmatprep.subr.mxu0 0.0
    %951 = vmatpush1.msra.mxu0 0.0
    %952 = vmatprep.subr.mxu0 0.0
    %953 = vmatpush1.msra.mxu0 0.0
    %954 = vmatprep.subr.mxu0 0.0
    %955 = vmatpush1.msra.mxu0 0.0
    %956 = vmatprep.subr.mxu0 0.0
    %957 = vmatpush1.msra.mxu0 0.0
    %958 = vmatprep.subr.mxu0 0.0
    %959 = vmatpush1.msra.mxu0 0.0
    %960 = vmatprep.subr.mxu0 0.0
    %961 = vmatpush1.msra.mxu0 0.0
    %962 = vmatprep.subr.mxu0 0.0
    %963 = vmatpush1.msra.mxu0 0.0
    %964 = vmatprep.subr.mxu0 0.0
    %965 = vmatpush1.msra.mxu0 0.0
    %966 = vmatprep.subr.mxu0 0.0
    %967 = vmatpush1.msra.mxu0 0.0
    %968 = vmatprep.subr.mxu0 0.0
    %969 = vmatpush1.msra.mxu0 0.0
    %970 = vmatprep.subr.mxu0 0.0
    %971 = vmatpush1.msra.mxu0 0.0
    %972 = vmatprep.subr.mxu0 0.0
    %973 = vmatpush1.msra.mxu0 0.0
    %974 = vmatprep.subr.mxu0 0.0
    %975 = vmatpush1.msra.mxu0 0.0
    %976 = vmatprep.subr.mxu0 0.0
    %977 = vmatpush1.msra.mxu0 0.0
    %978 = vmatprep.subr.mxu0 0.0
    %979 = vmatpush1.msra.mxu0 0.0
    %980 = vmatprep.subr.mxu0 0.0
    %981 = vmatpush1.msra.mxu0 0.0
    %982 = vmatprep.subr.mxu0 0.0
    %983 = vmatpush1.msra.mxu0 0.0
    %984 = vmatprep.subr.mxu0 0.0
    %985 = vmatpush1.msra.mxu0 0.0
    %986 = vmatprep.subr.mxu0 0.0
    %987 = vmatpush1.msra.mxu0 0.0
    %988 = vmatprep.subr.mxu0 0.0
    %989 = vmatpush1.msra.mxu0 0.0
    %990 = vmatprep.subr.mxu0 0.0
    %991 = vmatpush1.msra.mxu0 0.0
    %992 = vmatprep.subr.mxu0 0.0
    %993 = vmatpush1.msra.mxu0 0.0
    %994 = vmatprep.subr.mxu0 0.0
    %995 = vmatpush1.msra.mxu0 0.0
    %996 = vmatprep.subr.mxu0 0.0
    %997 = vmatpush1.msra.mxu0 0.0
    %998 = vmatprep.subr.mxu0 0.0
    %999 = vmatpush1.msra.mxu0 0.0
    %1000 = vmatprep.mubr.f32.mxu0 0.0
    %1001 = vmatmul.mubr.f32.gmra.mrb[0].mxu0 %v926
    %v1002 = vpop.f32.mrb[0].mxu0
    %v1003 = vadd.f32 0.0, %v1002
    %v1004 = vpop.f32.mrb[0].mxu0
    %1005 = vmatprep.mubr.f32.mxu0 0.0
    %1006 = vmatmul.mubr.f32.gmra.mrb[0].mxu0 %v929
    %v1007 = vpop.f32.mrb[0].mxu0
    %v1008 = vadd.f32 0.0, %v1007
    %v1009 = vpop.f32.mrb[0].mxu0
    %1010 = vmatprep.mubr.f32.mxu0 0.0
    %1011 = vmatmul.mubr.f32.gmra.mrb[0].mxu0 %v932
    %v1012 = vpop.f32.mrb[0].mxu0
    %v1013 = vadd.f32 0.0, %v1012
    %v1014 = vpop.f32.mrb[0].mxu0
    %1015 = vdwg.mxu0
    %1019 = vrot.lane.b32.xlu0 %v1003, 16
    %v1020 = vpop.permute.xlu0 %1019
    %1021 = vrot.lane.b32.xlu0 %v1008, 16
    %v1022 = vpop.permute.xlu0 %1021
    %1023 = vrot.lane.b32.xlu0 %v1013, 16
    %v1024 = vpop.permute.xlu0 %1023
    %v1028 = vsel %vm558, %v904, %v1020
    %v1029 = vsel %vm558, %v909, %v1022
    %v1030 = vsel %vm558, %v914, %v1024
    %v1032 = vlaneseq
    %v1033 = vshrl.u32 %v1032, 7
    %v1034 = vsub.s32 0, %v1033
    %v1035 = vrot.slane %v429, %v1034
    %v1038 = vsel %vm177, %v1028, 0
    %v1041 = vsel %vm177, %v1029, 0
    %v1044 = vsel %vm177, %v1030, 0
    %1046 = vmatprep.subr.mxu0 0.0
    %1047 = vmatpush1.msra.mxu0 %v425
    %1048 = vmatprep.subr.mxu0 0.0
    %1049 = vmatpush1.msra.mxu0 %v426
    %1050 = vmatprep.subr.mxu0 0.0
    %1051 = vmatpush1.msra.mxu0 %v427
    %1052 = vmatprep.subr.mxu0 0.0
    %1053 = vmatpush1.msra.mxu0 %v428
    %1054 = vmatprep.subr.mxu0 0.0
    %1055 = vmatpush1.msra.mxu0 0.0
    %1056 = vmatprep.subr.mxu0 0.0
    %1057 = vmatpush1.msra.mxu0 0.0
    %1058 = vmatprep.subr.mxu0 0.0
    %1059 = vmatpush1.msra.mxu0 0.0
    %1060 = vmatprep.subr.mxu0 0.0
    %1061 = vmatpush1.msra.mxu0 0.0
    %1062 = vmatprep.subr.mxu0 0.0
    %1063 = vmatpush1.msra.mxu0 0.0
    %1064 = vmatprep.subr.mxu0 0.0
    %1065 = vmatpush1.msra.mxu0 0.0
    %1066 = vmatprep.subr.mxu0 0.0
    %1067 = vmatpush1.msra.mxu0 0.0
    %1068 = vmatprep.subr.mxu0 0.0
    %1069 = vmatpush1.msra.mxu0 0.0
    %1070 = vmatprep.subr.mxu0 0.0
    %1071 = vmatpush1.msra.mxu0 0.0
    %1072 = vmatprep.subr.mxu0 0.0
    %1073 = vmatpush1.msra.mxu0 0.0
    %1074 = vmatprep.subr.mxu0 0.0
    %1075 = vmatpush1.msra.mxu0 0.0
    %1076 = vmatprep.subr.mxu0 0.0
    %1077 = vmatpush1.msra.mxu0 0.0
    %1078 = vmatprep.subr.mxu0 0.0
    %1079 = vmatpush1.msra.mxu0 0.0
    %1080 = vmatprep.subr.mxu0 0.0
    %1081 = vmatpush1.msra.mxu0 0.0
    %1082 = vmatprep.subr.mxu0 0.0
    %1083 = vmatpush1.msra.mxu0 0.0
    %1084 = vmatprep.subr.mxu0 0.0
    %1085 = vmatpush1.msra.mxu0 0.0
    %1086 = vmatprep.subr.mxu0 0.0
    %1087 = vmatpush1.msra.mxu0 0.0
    %1088 = vmatprep.subr.mxu0 0.0
    %1089 = vmatpush1.msra.mxu0 0.0
    %1090 = vmatprep.subr.mxu0 0.0
    %1091 = vmatpush1.msra.mxu0 0.0
    %1092 = vmatprep.subr.mxu0 0.0
    %1093 = vmatpush1.msra.mxu0 0.0
    %1094 = vmatprep.subr.mxu0 0.0
    %1095 = vmatpush1.msra.mxu0 0.0
    %1096 = vmatprep.subr.mxu0 0.0
    %1097 = vmatpush1.msra.mxu0 0.0
    %1098 = vmatprep.subr.mxu0 0.0
    %1099 = vmatpush1.msra.mxu0 0.0
    %1100 = vmatprep.subr.mxu0 0.0
    %1101 = vmatpush1.msra.mxu0 0.0
    %1102 = vmatprep.subr.mxu0 0.0
    %1103 = vmatpush1.msra.mxu0 0.0
    %1104 = vmatprep.subr.mxu0 0.0
    %1105 = vmatpush1.msra.mxu0 0.0
    %1106 = vmatprep.subr.mxu0 0.0
    %1107 = vmatpush1.msra.mxu0 0.0
    %1108 = vmatprep.subr.mxu0 0.0
    %1109 = vmatpush1.msra.mxu0 0.0
    %1110 = vmatprep.mubr.f32.mxu0 0.0
    %1111 = vmatmul.mubr.f32.gmra.mrb[0].mxu0 %v1038
    %v1112 = vpop.f32.mrb[0].mxu0
    %v1113 = vadd.f32 %v1035, %v1112
    %v1114 = vpop.f32.mrb[0].mxu0
    %1115 = vmatprep.mubr.f32.mxu0 0.0
    %1116 = vmatmul.mubr.f32.gmra.mrb[0].mxu0 %v1041
    %v1117 = vpop.f32.mrb[0].mxu0
    %v1118 = vadd.f32 %v1035, %v1117
    %v1119 = vpop.f32.mrb[0].mxu0
    %1120 = vmatprep.mubr.f32.mxu0 0.0
    %1121 = vmatmul.mubr.f32.gmra.mrb[0].mxu0 %v1044
    %v1122 = vpop.f32.mrb[0].mxu0
    %v1123 = vadd.f32 %v1035, %v1122
    %v1124 = vpop.f32.mrb[0].mxu0
    %1125 = vdwg.mxu0
    %v1126 = vadd.f32 %v411, %v1113
    %v1127 = vadd.f32 %v412, %v1118
    %v1128 = vadd.f32 %v413, %v1123
    %v1129 = vsel %vm177, %v1126, 0.0
    %1130 = vadd.xlane.f32.xlu0 %v1129
    %v1131 = vpop.xlane.xlu0 %1130
    %v1132 = vsel %vm177, %v1127, 0.0
    %1133 = vadd.xlane.f32.xlu0 %v1132
    %v1134 = vpop.xlane.xlu0 %1133
    %vm1135 = vcmask 259072
    %v1136 = vsel %vm1135, %v1128, 0.0
    %1137 = vadd.xlane.f32.xlu0 %v1136
    %v1138 = vpop.xlane.xlu0 %1137
    %v1139 = vrcp.pop 32.0
    %v1140 = vmul.f32 %v1131, %v1139
    %v1141 = vmul.f32 %v1134, %v1139
    %v1142 = vmul.f32 %v1138, %v1139
    %v1143 = vsub.f32 %v1126, %v1140
    %v1144 = vsub.f32 %v1127, %v1141
    %v1145 = vsub.f32 %v1128, %v1142
    %v1146 = vmul.f32 %v1143, %v1143
    %v1147 = vmul.f32 %v1144, %v1144
    %v1148 = vmul.f32 %v1145, %v1145
    %v1149 = vsel %vm177, %v1146, 0.0
    %1150 = vadd.xlane.f32.xlu0 %v1149
    %v1151 = vpop.xlane.xlu0 %1150
    %v1152 = vsel %vm177, %v1147, 0.0
    %1153 = vadd.xlane.f32.xlu0 %v1152
    %v1154 = vpop.xlane.xlu0 %1153
    %v1155 = vsel %vm1135, %v1148, 0.0
    %1156 = vadd.xlane.f32.xlu0 %v1155
    %v1157 = vpop.xlane.xlu0 %1156
    %v1158 = vmul.f32 %v1151, %v1139
    %v1159 = vmul.f32 %v1154, %v1139
    %v1160 = vmul.f32 %v1157, %v1139
    %v1161 = vadd.f32 %v1158, 1e-05
    %v1162 = vadd.f32 %v1159, 1e-05
    %v1163 = vadd.f32 %v1160, 1e-05
    %v1164 = vrsqrt.pop %v1161
    %v1165 = vrsqrt.pop %v1162
    %v1166 = vrsqrt.pop %v1163
    %v1167 = vmul.f32 %v1143, %v1164
    %v1168 = vmul.f32 %v1144, %v1165
    %v1169 = vmul.f32 %v1145, %v1166
    %v1171 = vlaneseq
    %v1172 = vshrl.u32 %v1171, 7
    %v1173 = vsub.s32 0, %v1172
    %v1174 = vrot.slane %v430, %v1173
    %v1176 = vmul.f32 %v1167, %v1174
    %v1177 = vmul.f32 %v1168, %v1174
    %v1178 = vmul.f32 %v1169, %v1174
    %v1180 = vlaneseq
    %v1181 = vshrl.u32 %v1180, 7
    %v1182 = vsub.s32 0, %v1181
    %v1183 = vrot.slane %v431, %v1182
    %v1185 = vadd.f32 %v1176, %v1183
    %v1186 = vadd.f32 %v1177, %v1183
    %v1187 = vadd.f32 %v1178, %v1183
    %v1189 = vlaneseq
    %v1190 = vshrl.u32 %v1189, 7
    %v1191 = vsub.s32 0, %v1190
    %v1192 = vrot.slane %v436, %v1191
    %v1195 = vsel %vm177, %v1185, 0
    %v1198 = vsel %vm177, %v1186, 0
    %v1201 = vsel %vm177, %v1187, 0
    %1203 = vmatprep.subr.mxu0 0.0
    %1204 = vmatpush1.msra.mxu0 %v432
    %1205 = vmatprep.subr.mxu0 0.0
    %1206 = vmatpush1.msra.mxu0 %v433
    %1207 = vmatprep.subr.mxu0 0.0
    %1208 = vmatpush1.msra.mxu0 %v434
    %1209 = vmatprep.subr.mxu0 0.0
    %1210 = vmatpush1.msra.mxu0 %v435
    %1211 = vmatprep.subr.mxu0 0.0
    %1212 = vmatpush1.msra.mxu0 0.0
    %1213 = vmatprep.subr.mxu0 0.0
    %1214 = vmatpush1.msra.mxu0 0.0
    %1215 = vmatprep.subr.mxu0 0.0
    %1216 = vmatpush1.msra.mxu0 0.0
    %1217 = vmatprep.subr.mxu0 0.0
    %1218 = vmatpush1.msra.mxu0 0.0
    %1219 = vmatprep.subr.mxu0 0.0
    %1220 = vmatpush1.msra.mxu0 0.0
    %1221 = vmatprep.subr.mxu0 0.0
    %1222 = vmatpush1.msra.mxu0 0.0
    %1223 = vmatprep.subr.mxu0 0.0
    %1224 = vmatpush1.msra.mxu0 0.0
    %1225 = vmatprep.subr.mxu0 0.0
    %1226 = vmatpush1.msra.mxu0 0.0
    %1227 = vmatprep.subr.mxu0 0.0
    %1228 = vmatpush1.msra.mxu0 0.0
    %1229 = vmatprep.subr.mxu0 0.0
    %1230 = vmatpush1.msra.mxu0 0.0
    %1231 = vmatprep.subr.mxu0 0.0
    %1232 = vmatpush1.msra.mxu0 0.0
    %1233 = vmatprep.subr.mxu0 0.0
    %1234 = vmatpush1.msra.mxu0 0.0
    %1235 = vmatprep.subr.mxu0 0.0
    %1236 = vmatpush1.msra.mxu0 0.0
    %1237 = vmatprep.subr.mxu0 0.0
    %1238 = vmatpush1.msra.mxu0 0.0
    %1239 = vmatprep.subr.mxu0 0.0
    %1240 = vmatpush1.msra.mxu0 0.0
    %1241 = vmatprep.subr.mxu0 0.0
    %1242 = vmatpush1.msra.mxu0 0.0
    %1243 = vmatprep.subr.mxu0 0.0
    %1244 = vmatpush1.msra.mxu0 0.0
    %1245 = vmatprep.subr.mxu0 0.0
    %1246 = vmatpush1.msra.mxu0 0.0
    %1247 = vmatprep.subr.mxu0 0.0
    %1248 = vmatpush1.msra.mxu0 0.0
    %1249 = vmatprep.subr.mxu0 0.0
    %1250 = vmatpush1.msra.mxu0 0.0
    %1251 = vmatprep.subr.mxu0 0.0
    %1252 = vmatpush1.msra.mxu0 0.0
    %1253 = vmatprep.subr.mxu0 0.0
    %1254 = vmatpush1.msra.mxu0 0.0
    %1255 = vmatprep.subr.mxu0 0.0
    %1256 = vmatpush1.msra.mxu0 0.0
    %1257 = vmatprep.subr.mxu0 0.0
    %1258 = vmatpush1.msra.mxu0 0.0
    %1259 = vmatprep.subr.mxu0 0.0
    %1260 = vmatpush1.msra.mxu0 0.0
    %1261 = vmatprep.subr.mxu0 0.0
    %1262 = vmatpush1.msra.mxu0 0.0
    %1263 = vmatprep.subr.mxu0 0.0
    %1264 = vmatpush1.msra.mxu0 0.0
    %1265 = vmatprep.subr.mxu0 0.0
    %1266 = vmatpush1.msra.mxu0 0.0
    %1267 = vmatprep.mubr.f32.mxu0 0.0
    %1268 = vmatmul.mubr.f32.gmra.mrb[0].mxu0 %v1195
    %v1269 = vpop.f32.mrb[0].mxu0
    %v1270 = vadd.f32 %v1192, %v1269
    %v1271 = vpop.f32.mrb[0].mxu0
    %1272 = vmatprep.mubr.f32.mxu0 0.0
    %1273 = vmatmul.mubr.f32.gmra.mrb[0].mxu0 %v1198
    %v1274 = vpop.f32.mrb[0].mxu0
    %v1275 = vadd.f32 %v1192, %v1274
    %v1276 = vpop.f32.mrb[0].mxu0
    %1277 = vmatprep.mubr.f32.mxu0 0.0
    %1278 = vmatmul.mubr.f32.gmra.mrb[0].mxu0 %v1201
    %v1279 = vpop.f32.mrb[0].mxu0
    %v1280 = vadd.f32 %v1192, %v1279
    %v1281 = vpop.f32.mrb[0].mxu0
    %1282 = vdwg.mxu0
    %v1283 = vmax.f32 %v1270, 0.0
    %v1284 = vmax.f32 %v1275, 0.0
    %v1285 = vmax.f32 %v1280, 0.0
    %v1287 = vlaneseq
    %v1288 = vshrl.u32 %v1287, 7
    %v1289 = vsub.s32 0, %v1288
    %v1290 = vrot.slane %v445, %v1289
    %vm1292 = vcmask 523264
    %v1294 = vsel %vm1292, %v1283, 0
    %v1297 = vsel %vm1292, %v1284, 0
    %v1300 = vsel %vm1292, %v1285, 0
    %1302 = vmatprep.subr.mxu0 0.0
    %1303 = vmatpush1.msra.mxu0 %v437
    %1304 = vmatprep.subr.mxu0 0.0
    %1305 = vmatpush1.msra.mxu0 %v438
    %1306 = vmatprep.subr.mxu0 0.0
    %1307 = vmatpush1.msra.mxu0 %v439
    %1308 = vmatprep.subr.mxu0 0.0
    %1309 = vmatpush1.msra.mxu0 %v440
    %1310 = vmatprep.subr.mxu0 0.0
    %1311 = vmatpush1.msra.mxu0 %v441
    %1312 = vmatprep.subr.mxu0 0.0
    %1313 = vmatpush1.msra.mxu0 %v442
    %1314 = vmatprep.subr.mxu0 0.0
    %1315 = vmatpush1.msra.mxu0 %v443
    %1316 = vmatprep.subr.mxu0 0.0
    %1317 = vmatpush1.msra.mxu0 %v444
    %1318 = vmatprep.subr.mxu0 0.0
    %1319 = vmatpush1.msra.mxu0 0.0
    %1320 = vmatprep.subr.mxu0 0.0
    %1321 = vmatpush1.msra.mxu0 0.0
    %1322 = vmatprep.subr.mxu0 0.0
    %1323 = vmatpush1.msra.mxu0 0.0
    %1324 = vmatprep.subr.mxu0 0.0
    %1325 = vmatpush1.msra.mxu0 0.0
    %1326 = vmatprep.subr.mxu0 0.0
    %1327 = vmatpush1.msra.mxu0 0.0
    %1328 = vmatprep.subr.mxu0 0.0
    %1329 = vmatpush1.msra.mxu0 0.0
    %1330 = vmatprep.subr.mxu0 0.0
    %1331 = vmatpush1.msra.mxu0 0.0
    %1332 = vmatprep.subr.mxu0 0.0
    %1333 = vmatpush1.msra.mxu0 0.0
    %1334 = vmatprep.subr.mxu0 0.0
    %1335 = vmatpush1.msra.mxu0 0.0
    %1336 = vmatprep.subr.mxu0 0.0
    %1337 = vmatpush1.msra.mxu0 0.0
    %1338 = vmatprep.subr.mxu0 0.0
    %1339 = vmatpush1.msra.mxu0 0.0
    %1340 = vmatprep.subr.mxu0 0.0
    %1341 = vmatpush1.msra.mxu0 0.0
    %1342 = vmatprep.subr.mxu0 0.0
    %1343 = vmatpush1.msra.mxu0 0.0
    %1344 = vmatprep.subr.mxu0 0.0
    %1345 = vmatpush1.msra.mxu0 0.0
    %1346 = vmatprep.subr.mxu0 0.0
    %1347 = vmatpush1.msra.mxu0 0.0
    %1348 = vmatprep.subr.mxu0 0.0
    %1349 = vmatpush1.msra.mxu0 0.0
    %1350 = vmatprep.subr.mxu0 0.0
    %1351 = vmatpush1.msra.mxu0 0.0
    %1352 = vmatprep.subr.mxu0 0.0
    %1353 = vmatpush1.msra.mxu0 0.0
    %1354 = vmatprep.subr.mxu0 0.0
    %1355 = vmatpush1.msra.mxu0 0.0
    %1356 = vmatprep.subr.mxu0 0.0
    %1357 = vmatpush1.msra.mxu0 0.0
    %1358 = vmatprep.subr.mxu0 0.0
    %1359 = vmatpush1.msra.mxu0 0.0
    %1360 = vmatprep.subr.mxu0 0.0
    %1361 = vmatpush1.msra.mxu0 0.0
    %1362 = vmatprep.subr.mxu0 0.0
    %1363 = vmatpush1.msra.mxu0 0.0
    %1364 = vmatprep.subr.mxu0 0.0
    %1365 = vmatpush1.msra.mxu0 0.0
    %1366 = vmatprep.mubr.f32.mxu0 0.0
    %1367 = vmatmul.mubr.f32.gmra.mrb[0].mxu0 %v1294
    %v1368 = vpop.f32.mrb[0].mxu0
    %v1369 = vadd.f32 %v1290, %v1368
    %v1370 = vpop.f32.mrb[0].mxu0
    %1371 = vmatprep.mubr.f32.mxu0 0.0
    %1372 = vmatmul.mubr.f32.gmra.mrb[0].mxu0 %v1297
    %v1373 = vpop.f32.mrb[0].mxu0
    %v1374 = vadd.f32 %v1290, %v1373
    %v1375 = vpop.f32.mrb[0].mxu0
    %1376 = vmatprep.mubr.f32.mxu0 0.0
    %1377 = vmatmul.mubr.f32.gmra.mrb[0].mxu0 %v1300
    %v1378 = vpop.f32.mrb[0].mxu0
    %v1379 = vadd.f32 %v1290, %v1378
    %v1380 = vpop.f32.mrb[0].mxu0
    %1381 = vdwg.mxu0
    %v1382 = vadd.f32 %v1185, %v1369
    %v1383 = vadd.f32 %v1186, %v1374
    %v1384 = vadd.f32 %v1187, %v1379
    %v1385 = vsel %vm177, %v1382, 0.0
    %1386 = vadd.xlane.f32.xlu0 %v1385
    %v1387 = vpop.xlane.xlu0 %1386
    %v1388 = vsel %vm177, %v1383, 0.0
    %1389 = vadd.xlane.f32.xlu0 %v1388
    %v1390 = vpop.xlane.xlu0 %1389
    %v1391 = vsel %vm1135, %v1384, 0.0
    %1392 = vadd.xlane.f32.xlu0 %v1391
    %v1393 = vpop.xlane.xlu0 %1392
    %v1394 = vmul.f32 %v1387, %v1139
    %v1395 = vmul.f32 %v1390, %v1139
    %v1396 = vmul.f32 %v1393, %v1139
    %v1397 = vsub.f32 %v1382, %v1394
    %v1398 = vsub.f32 %v1383, %v1395
    %v1399 = vsub.f32 %v1384, %v1396
    %v1400 = vmul.f32 %v1397, %v1397
    %v1401 = vmul.f32 %v1398, %v1398
    %v1402 = vmul.f32 %v1399, %v1399
    %v1403 = vsel %vm177, %v1400, 0.0
    %1404 = vadd.xlane.f32.xlu0 %v1403
    %v1405 = vpop.xlane.xlu0 %1404
    %v1406 = vsel %vm177, %v1401, 0.0
    %1407 = vadd.xlane.f32.xlu0 %v1406
    %v1408 = vpop.xlane.xlu0 %1407
    %v1409 = vsel %vm1135, %v1402, 0.0
    %1410 = vadd.xlane.f32.xlu0 %v1409
    %v1411 = vpop.xlane.xlu0 %1410
    %v1412 = vmul.f32 %v1405, %v1139
    %v1413 = vmul.f32 %v1408, %v1139
    %v1414 = vmul.f32 %v1411, %v1139
    %v1415 = vadd.f32 %v1412, 1e-05
    %v1416 = vadd.f32 %v1413, 1e-05
    %v1417 = vadd.f32 %v1414, 1e-05
    %v1418 = vrsqrt.pop %v1415
    %v1419 = vrsqrt.pop %v1416
    %v1420 = vrsqrt.pop %v1417
    %v1421 = vmul.f32 %v1397, %v1418
    %v1422 = vmul.f32 %v1398, %v1419
    %v1423 = vmul.f32 %v1399, %v1420
    %v1425 = vlaneseq
    %v1426 = vshrl.u32 %v1425, 7
    %v1427 = vsub.s32 0, %v1426
    %v1428 = vrot.slane %v446, %v1427
    %v1430 = vmul.f32 %v1421, %v1428
    %v1431 = vmul.f32 %v1422, %v1428
    %v1432 = vmul.f32 %v1423, %v1428
    %v1434 = vlaneseq
    %v1435 = vshrl.u32 %v1434, 7
    %v1436 = vsub.s32 0, %v1435
    %v1437 = vrot.slane %v447, %v1436
    %v1439 = vadd.f32 %v1430, %v1437
    %v1440 = vadd.f32 %v1431, %v1437
    %v1441 = vadd.f32 %v1432, %v1437
    %v1442 = vld [vmem:[%s53] sm:$0xff]
    %v1443 = vld [vmem:[%s53 + $0x8] sm:$0xff]
    %v1444 = vld [vmem:[%s53 + $0x10] sm:$0xff]
    %v1445 = vld [vmem:[%s53 + $0x18] sm:$0xff]
    %v1446 = vld [vmem:[%s55] sm:$0x1]
    %v1447 = vld [vmem:[%s57] sm:$0xff]
    %v1448 = vld [vmem:[%s57 + $0x8] sm:$0xff]
    %v1449 = vld [vmem:[%s57 + $0x10] sm:$0xff]
    %v1450 = vld [vmem:[%s57 + $0x18] sm:$0xff]
    %v1451 = vld [vmem:[%s59] sm:$0x1]
    %v1452 = vld [vmem:[%s61] sm:$0x1]
    %v1453 = vld [vmem:[%s63] sm:$0x1]
    %v1454 = vld [vmem:[%s65] sm:$0xff]
    %v1455 = vld [vmem:[%s65 + $0x8] sm:$0xff]
    %v1456 = vld [vmem:[%s65 + $0x10] sm:$0xff]
    %v1457 = vld [vmem:[%s65 + $0x18] sm:$0xff]
    %v1458 = vld [vmem:[%s67] sm:$0x1]
    %v1459 = vld [vmem:[%s69] sm:$0xff]
    %v1460 = vld [vmem:[%s69 + $0x8] sm:$0xff]
    %v1461 = vld [vmem:[%s69 + $0x10] sm:$0xff]
    %v1462 = vld [vmem:[%s69 + $0x18] sm:$0xff]
    %v1463 = vld [vmem:[%s69 + $0x20] sm:$0xff]
    %v1464 = vld [vmem:[%s69 + $0x28] sm:$0xff]
    %v1465 = vld [vmem:[%s69 + $0x30] sm:$0xff]
    %v1466 = vld [vmem:[%s69 + $0x38] sm:$0xff]
    %v1467 = vld [vmem:[%s71] sm:$0x1]
    %v1468 = vld [vmem:[%s73] sm:$0x1]
    %v1469 = vld [vmem:[%s75] sm:$0x1]
    %v1471 = vlaneseq
    %v1472 = vshrl.u32 %v1471, 7
    %v1473 = vsub.s32 0, %v1472
    %v1474 = vrot.slane %v1446, %v1473
    %v1477 = vsel %vm177, %v1439, 0
    %v1480 = vsel %vm177, %v1440, 0
    %v1483 = vsel %vm177, %v1441, 0
    %1485 = vmatprep.subr.mxu0 0.0
    %1486 = vmatpush1.msra.mxu0 %v1442
    %1487 = vmatprep.subr.mxu0 0.0
    %1488 = vmatpush1.msra.mxu0 %v1443
    %1489 = vmatprep.subr.mxu0 0.0
    %1490 = vmatpush1.msra.mxu0 %v1444
    %1491 = vmatprep.subr.mxu0 0.0
    %1492 = vmatpush1.msra.mxu0 %v1445
    %1493 = vmatprep.subr.mxu0 0.0
    %1494 = vmatpush1.msra.mxu0 0.0
    %1495 = vmatprep.subr.mxu0 0.0
    %1496 = vmatpush1.msra.mxu0 0.0
    %1497 = vmatprep.subr.mxu0 0.0
    %1498 = vmatpush1.msra.mxu0 0.0
    %1499 = vmatprep.subr.mxu0 0.0
    %1500 = vmatpush1.msra.mxu0 0.0
    %1501 = vmatprep.subr.mxu0 0.0
    %1502 = vmatpush1.msra.mxu0 0.0
    %1503 = vmatprep.subr.mxu0 0.0
    %1504 = vmatpush1.msra.mxu0 0.0
    %1505 = vmatprep.subr.mxu0 0.0
    %1506 = vmatpush1.msra.mxu0 0.0
    %1507 = vmatprep.subr.mxu0 0.0
    %1508 = vmatpush1.msra.mxu0 0.0
    %1509 = vmatprep.subr.mxu0 0.0
    %1510 = vmatpush1.msra.mxu0 0.0
    %1511 = vmatprep.subr.mxu0 0.0
    %1512 = vmatpush1.msra.mxu0 0.0
    %1513 = vmatprep.subr.mxu0 0.0
    %1514 = vmatpush1.msra.mxu0 0.0
    %1515 = vmatprep.subr.mxu0 0.0
    %1516 = vmatpush1.msra.mxu0 0.0
    %1517 = vmatprep.subr.mxu0 0.0
    %1518 = vmatpush1.msra.mxu0 0.0
    %1519 = vmatprep.subr.mxu0 0.0
    %1520 = vmatpush1.msra.mxu0 0.0
    %1521 = vmatprep.subr.mxu0 0.0
    %1522 = vmatpush1.msra.mxu0 0.0
    %1523 = vmatprep.subr.mxu0 0.0
    %1524 = vmatpush1.msra.mxu0 0.0
    %1525 = vmatprep.subr.mxu0 0.0
    %1526 = vmatpush1.msra.mxu0 0.0
    %1527 = vmatprep.subr.mxu0 0.0
    %1528 = vmatpush1.msra.mxu0 0.0
    %1529 = vmatprep.subr.mxu0 0.0
    %1530 = vmatpush1.msra.mxu0 0.0
    %1531 = vmatprep.subr.mxu0 0.0
    %1532 = vmatpush1.msra.mxu0 0.0
    %1533 = vmatprep.subr.mxu0 0.0
    %1534 = vmatpush1.msra.mxu0 0.0
    %1535 = vmatprep.subr.mxu0 0.0
    %1536 = vmatpush1.msra.mxu0 0.0
    %1537 = vmatprep.subr.mxu0 0.0
    %1538 = vmatpush1.msra.mxu0 0.0
    %1539 = vmatprep.subr.mxu0 0.0
    %1540 = vmatpush1.msra.mxu0 0.0
    %1541 = vmatprep.subr.mxu0 0.0
    %1542 = vmatpush1.msra.mxu0 0.0
    %1543 = vmatprep.subr.mxu0 0.0
    %1544 = vmatpush1.msra.mxu0 0.0
    %1545 = vmatprep.subr.mxu0 0.0
    %1546 = vmatpush1.msra.mxu0 0.0
    %1547 = vmatprep.subr.mxu0 0.0
    %1548 = vmatpush1.msra.mxu0 0.0
    %1549 = vmatprep.mubr.f32.mxu0 0.0
    %1550 = vmatmul.mubr.f32.gmra.mrb[0].mxu0 %v1477
    %v1551 = vpop.f32.mrb[0].mxu0
    %v1552 = vadd.f32 %v1474, %v1551
    %v1553 = vpop.f32.mrb[0].mxu0
    %1554 = vmatprep.mubr.f32.mxu0 0.0
    %1555 = vmatmul.mubr.f32.gmra.mrb[0].mxu0 %v1480
    %v1556 = vpop.f32.mrb[0].mxu0
    %v1557 = vadd.f32 %v1474, %v1556
    %v1558 = vpop.f32.mrb[0].mxu0
    %1559 = vmatprep.mubr.f32.mxu0 0.0
    %1560 = vmatmul.mubr.f32.gmra.mrb[0].mxu0 %v1483
    %v1561 = vpop.f32.mrb[0].mxu0
    %v1562 = vadd.f32 %v1474, %v1561
    %v1563 = vpop.f32.mrb[0].mxu0
    %1564 = vdwg.mxu0
    %1568 = vrot.lane.b32.xlu0 %v1552, 112
    %v1569 = vpop.permute.xlu0 %1568
    %1570 = vrot.lane.b32.xlu0 %v1557, 112
    %v1571 = vpop.permute.xlu0 %1570
    %1572 = vrot.lane.b32.xlu0 %v1562, 112
    %v1573 = vpop.permute.xlu0 %1572
    %1574 = vrot.lane.b32.xlu0 %v1552, 96
    %v1575 = vpop.permute.xlu0 %1574
    %1576 = vrot.lane.b32.xlu0 %v1557, 96
    %v1577 = vpop.permute.xlu0 %1576
    %1578 = vrot.lane.b32.xlu0 %v1562, 96
    %v1579 = vpop.permute.xlu0 %1578
    %v1580 = vsel %vm558, %v1552, 0
    %v1582 = vsel %vm558, %v1557, 0
    %v1584 = vsel %vm558, %v1562, 0
    %v1586 = vsel %vm558, %v1575, 0
    %v1588 = vsel %vm558, %v1577, 0
    %v1590 = vsel %vm558, %v1579, 0
    %1592 = vmatprep.subr.mxu0 0.0
    %1593 = vmatpush1.xpose.msra.mxu0 %v1586
    %1594 = vmatprep.subr.mxu0 0.0
    %1595 = vmatpush1.xpose.msra.mxu0 %v1588
    %1596 = vmatprep.subr.mxu0 0.0
    %1597 = vmatpush1.xpose.msra.mxu0 %v1590
    %1598 = vmatprep.subr.mxu0 0.0
    %1599 = vmatpush1.xpose.msra.mxu0 0.0
    %1600 = vmatprep.subr.mxu0 0.0
    %1601 = vmatpush1.xpose.msra.mxu0 0.0
    %1602 = vmatprep.subr.mxu0 0.0
    %1603 = vmatpush1.xpose.msra.mxu0 0.0
    %1604 = vmatprep.subr.mxu0 0.0
    %1605 = vmatpush1.xpose.msra.mxu0 0.0
    %1606 = vmatprep.subr.mxu0 0.0
    %1607 = vmatpush1.xpose.msra.mxu0 0.0
    %1608 = vmatprep.subr.mxu0 0.0
    %1609 = vmatpush1.xpose.msra.mxu0 0.0
    %1610 = vmatprep.subr.mxu0 0.0
    %1611 = vmatpush1.xpose.msra.mxu0 0.0
    %1612 = vmatprep.subr.mxu0 0.0
    %1613 = vmatpush1.xpose.msra.mxu0 0.0
    %1614 = vmatprep.subr.mxu0 0.0
    %1615 = vmatpush1.xpose.msra.mxu0 0.0
    %1616 = vmatprep.subr.mxu0 0.0
    %1617 = vmatpush1.xpose.msra.mxu0 0.0
    %1618 = vmatprep.subr.mxu0 0.0
    %1619 = vmatpush1.xpose.msra.mxu0 0.0
    %1620 = vmatprep.subr.mxu0 0.0
    %1621 = vmatpush1.xpose.msra.mxu0 0.0
    %1622 = vmatprep.subr.mxu0 0.0
    %1623 = vmatpush1.xpose.msra.mxu0 0.0
    %1624 = vmatprep.subr.mxu0 0.0
    %1625 = vmatpush1.xpose.msra.mxu0 0.0
    %1626 = vmatprep.subr.mxu0 0.0
    %1627 = vmatpush1.xpose.msra.mxu0 0.0
    %1628 = vmatprep.subr.mxu0 0.0
    %1629 = vmatpush1.xpose.msra.mxu0 0.0
    %1630 = vmatprep.subr.mxu0 0.0
    %1631 = vmatpush1.xpose.msra.mxu0 0.0
    %1632 = vmatprep.subr.mxu0 0.0
    %1633 = vmatpush1.xpose.msra.mxu0 0.0
    %1634 = vmatprep.subr.mxu0 0.0
    %1635 = vmatpush1.xpose.msra.mxu0 0.0
    %1636 = vmatprep.subr.mxu0 0.0
    %1637 = vmatpush1.xpose.msra.mxu0 0.0
    %1638 = vmatprep.subr.mxu0 0.0
    %1639 = vmatpush1.xpose.msra.mxu0 0.0
    %1640 = vmatprep.subr.mxu0 0.0
    %1641 = vmatpush1.xpose.msra.mxu0 0.0
    %1642 = vmatprep.subr.mxu0 0.0
    %1643 = vmatpush1.xpose.msra.mxu0 0.0
    %1644 = vmatprep.subr.mxu0 0.0
    %1645 = vmatpush1.xpose.msra.mxu0 0.0
    %1646 = vmatprep.subr.mxu0 0.0
    %1647 = vmatpush1.xpose.msra.mxu0 0.0
    %1648 = vmatprep.subr.mxu0 0.0
    %1649 = vmatpush1.xpose.msra.mxu0 0.0
    %1650 = vmatprep.subr.mxu0 0.0
    %1651 = vmatpush1.xpose.msra.mxu0 0.0
    %1652 = vmatprep.subr.mxu0 0.0
    %1653 = vmatpush1.xpose.msra.mxu0 0.0
    %1654 = vmatprep.subr.mxu0 0.0
    %1655 = vmatpush1.xpose.msra.mxu0 0.0
    %1656 = vmatprep.mubr.f32.mxu0 0.0
    %1657 = vmatmul.mubr.f32.gmra.mrb[0].mxu0 %v1580
    %v1658 = vpop.f32.mrb[0].mxu0
    %v1659 = vadd.f32 %v414, %v1658
    %v1660 = vpop.f32.mrb[0].mxu0
    %1661 = vmatprep.mubr.f32.mxu0 0.0
    %1662 = vmatmul.mubr.f32.gmra.mrb[0].mxu0 %v1582
    %v1663 = vpop.f32.mrb[0].mxu0
    %v1664 = vadd.f32 %v415, %v1663
    %v1665 = vpop.f32.mrb[0].mxu0
    %1666 = vmatprep.mubr.f32.mxu0 0.0
    %1667 = vmatmul.mubr.f32.gmra.mrb[0].mxu0 %v1584
    %v1668 = vpop.f32.mrb[0].mxu0
    %v1669 = vadd.f32 %v416, %v1668
    %v1670 = vpop.f32.mrb[0].mxu0
    %1671 = vdwg.mxu0
    %1672 = vrot.lane.b32.xlu0 %v1569, 96
    %v1673 = vpop.permute.xlu0 %1672
    %1674 = vrot.lane.b32.xlu0 %v1571, 96
    %v1675 = vpop.permute.xlu0 %1674
    %1676 = vrot.lane.b32.xlu0 %v1573, 96
    %v1677 = vpop.permute.xlu0 %1676
    %v1678 = vsel %vm558, %v1569, 0
    %v1680 = vsel %vm558, %v1571, 0
    %v1682 = vsel %vm558, %v1573, 0
    %v1684 = vsel %vm558, %v1673, 0
    %v1686 = vsel %vm558, %v1675, 0
    %v1688 = vsel %vm558, %v1677, 0
    %1690 = vmatprep.subr.mxu0 0.0
    %1691 = vmatpush1.xpose.msra.mxu0 %v1684
    %1692 = vmatprep.subr.mxu0 0.0
    %1693 = vmatpush1.xpose.msra.mxu0 %v1686
    %1694 = vmatprep.subr.mxu0 0.0
    %1695 = vmatpush1.xpose.msra.mxu0 %v1688
    %1696 = vmatprep.subr.mxu0 0.0
    %1697 = vmatpush1.xpose.msra.mxu0 0.0
    %1698 = vmatprep.subr.mxu0 0.0
    %1699 = vmatpush1.xpose.msra.mxu0 0.0
    %1700 = vmatprep.subr.mxu0 0.0
    %1701 = vmatpush1.xpose.msra.mxu0 0.0
    %1702 = vmatprep.subr.mxu0 0.0
    %1703 = vmatpush1.xpose.msra.mxu0 0.0
    %1704 = vmatprep.subr.mxu0 0.0
    %1705 = vmatpush1.xpose.msra.mxu0 0.0
    %1706 = vmatprep.subr.mxu0 0.0
    %1707 = vmatpush1.xpose.msra.mxu0 0.0
    %1708 = vmatprep.subr.mxu0 0.0
    %1709 = vmatpush1.xpose.msra.mxu0 0.0
    %1710 = vmatprep.subr.mxu0 0.0
    %1711 = vmatpush1.xpose.msra.mxu0 0.0
    %1712 = vmatprep.subr.mxu0 0.0
    %1713 = vmatpush1.xpose.msra.mxu0 0.0
    %1714 = vmatprep.subr.mxu0 0.0
    %1715 = vmatpush1.xpose.msra.mxu0 0.0
    %1716 = vmatprep.subr.mxu0 0.0
    %1717 = vmatpush1.xpose.msra.mxu0 0.0
    %1718 = vmatprep.subr.mxu0 0.0
    %1719 = vmatpush1.xpose.msra.mxu0 0.0
    %1720 = vmatprep.subr.mxu0 0.0
    %1721 = vmatpush1.xpose.msra.mxu0 0.0
    %1722 = vmatprep.subr.mxu0 0.0
    %1723 = vmatpush1.xpose.msra.mxu0 0.0
    %1724 = vmatprep.subr.mxu0 0.0
    %1725 = vmatpush1.xpose.msra.mxu0 0.0
    %1726 = vmatprep.subr.mxu0 0.0
    %1727 = vmatpush1.xpose.msra.mxu0 0.0
    %1728 = vmatprep.subr.mxu0 0.0
    %1729 = vmatpush1.xpose.msra.mxu0 0.0
    %1730 = vmatprep.subr.mxu0 0.0
    %1731 = vmatpush1.xpose.msra.mxu0 0.0
    %1732 = vmatprep.subr.mxu0 0.0
    %1733 = vmatpush1.xpose.msra.mxu0 0.0
    %1734 = vmatprep.subr.mxu0 0.0
    %1735 = vmatpush1.xpose.msra.mxu0 0.0
    %1736 = vmatprep.subr.mxu0 0.0
    %1737 = vmatpush1.xpose.msra.mxu0 0.0
    %1738 = vmatprep.subr.mxu0 0.0
    %1739 = vmatpush1.xpose.msra.mxu0 0.0
    %1740 = vmatprep.subr.mxu0 0.0
    %1741 = vmatpush1.xpose.msra.mxu0 0.0
    %1742 = vmatprep.subr.mxu0 0.0
    %1743 = vmatpush1.xpose.msra.mxu0 0.0
    %1744 = vmatprep.subr.mxu0 0.0
    %1745 = vmatpush1.xpose.msra.mxu0 0.0
    %1746 = vmatprep.subr.mxu0 0.0
    %1747 = vmatpush1.xpose.msra.mxu0 0.0
    %1748 = vmatprep.subr.mxu0 0.0
    %1749 = vmatpush1.xpose.msra.mxu0 0.0
    %1750 = vmatprep.subr.mxu0 0.0
    %1751 = vmatpush1.xpose.msra.mxu0 0.0
    %1752 = vmatprep.subr.mxu0 0.0
    %1753 = vmatpush1.xpose.msra.mxu0 0.0
    %1754 = vmatprep.mubr.f32.mxu0 0.0
    %1755 = vmatmul.mubr.f32.gmra.mrb[0].mxu0 %v1678
    %v1756 = vpop.f32.mrb[0].mxu0
    %v1757 = vadd.f32 %v417, %v1756
    %v1758 = vpop.f32.mrb[0].mxu0
    %1759 = vmatprep.mubr.f32.mxu0 0.0
    %1760 = vmatmul.mubr.f32.gmra.mrb[0].mxu0 %v1680
    %v1761 = vpop.f32.mrb[0].mxu0
    %v1762 = vadd.f32 %v418, %v1761
    %v1763 = vpop.f32.mrb[0].mxu0
    %1764 = vmatprep.mubr.f32.mxu0 0.0
    %1765 = vmatmul.mubr.f32.gmra.mrb[0].mxu0 %v1682
    %v1766 = vpop.f32.mrb[0].mxu0
    %v1767 = vadd.f32 %v419, %v1766
    %v1768 = vpop.f32.mrb[0].mxu0
    %1769 = vdwg.mxu0
    %v1770 = vsel %vm749, %v1659, -inf
    %1771 = vmax.xlane.f32.xlu0 %v1770
    %v1772 = vpop.xlane.xlu0 %1771
    %v1773 = vsel %vm749, %v1664, -inf
    %1774 = vmax.xlane.f32.xlu0 %v1773
    %v1775 = vpop.xlane.xlu0 %1774
    %v1776 = vsel %vm756, %v1669, -inf
    %1777 = vmax.xlane.f32.xlu0 %v1776
    %v1778 = vpop.xlane.xlu0 %1777
    %v1779 = vsel %vm749, %v1757, -inf
    %1780 = vmax.xlane.f32.xlu0 %v1779
    %v1781 = vpop.xlane.xlu0 %1780
    %v1782 = vsel %vm749, %v1762, -inf
    %1783 = vmax.xlane.f32.xlu0 %v1782
    %v1784 = vpop.xlane.xlu0 %1783
    %v1785 = vsel %vm756, %v1767, -inf
    %1786 = vmax.xlane.f32.xlu0 %v1785
    %v1787 = vpop.xlane.xlu0 %1786
    %v1788 = vsub.f32 %v1659, %v1772
    %v1789 = vsub.f32 %v1664, %v1775
    %v1790 = vsub.f32 %v1669, %v1778
    %v1791 = vsub.f32 %v1757, %v1781
    %v1792 = vsub.f32 %v1762, %v1784
    %v1793 = vsub.f32 %v1767, %v1787
    %v1794 = vmul.f32 %v1788, 1.442695
    %v1795 = vpow.pop %v1794
    %v1796 = vmul.f32 %v1789, 1.442695
    %v1797 = vpow.pop %v1796
    %v1798 = vmul.f32 %v1790, 1.442695
    %v1799 = vpow.pop %v1798
    %v1800 = vmul.f32 %v1791, 1.442695
    %v1801 = vpow.pop %v1800
    %v1802 = vmul.f32 %v1792, 1.442695
    %v1803 = vpow.pop %v1802
    %v1804 = vmul.f32 %v1793, 1.442695
    %v1805 = vpow.pop %v1804
    %v1806 = vsel %vm749, %v1795, 0.0
    %1807 = vadd.xlane.f32.xlu0 %v1806
    %v1808 = vpop.xlane.xlu0 %1807
    %v1809 = vsel %vm749, %v1797, 0.0
    %1810 = vadd.xlane.f32.xlu0 %v1809
    %v1811 = vpop.xlane.xlu0 %1810
    %v1812 = vsel %vm756, %v1799, 0.0
    %1813 = vadd.xlane.f32.xlu0 %v1812
    %v1814 = vpop.xlane.xlu0 %1813
    %v1815 = vsel %vm749, %v1801, 0.0
    %1816 = vadd.xlane.f32.xlu0 %v1815
    %v1817 = vpop.xlane.xlu0 %1816
    %v1818 = vsel %vm749, %v1803, 0.0
    %1819 = vadd.xlane.f32.xlu0 %v1818
    %v1820 = vpop.xlane.xlu0 %1819
    %v1821 = vsel %vm756, %v1805, 0.0
    %1822 = vadd.xlane.f32.xlu0 %v1821
    %v1823 = vpop.xlane.xlu0 %1822
    %v1824 = vrcp.pop %v1808
    %v1825 = vrcp.pop %v1811
    %v1826 = vrcp.pop %v1814
    %v1827 = vrcp.pop %v1817
    %v1828 = vrcp.pop %v1820
    %v1829 = vrcp.pop %v1823
    %v1830 = vmul.f32 %v1795, %v1824
    %v1831 = vmul.f32 %v1797, %v1825
    %v1832 = vmul.f32 %v1799, %v1826
    %v1833 = vmul.f32 %v1801, %v1827
    %v1834 = vmul.f32 %v1803, %v1828
    %v1835 = vmul.f32 %v1805, %v1829
    %1836 = vrot.lane.b32.xlu0 %v1552, 64
    %v1837 = vpop.permute.xlu0 %1836
    %1838 = vrot.lane.b32.xlu0 %v1557, 64
    %v1839 = vpop.permute.xlu0 %1838
    %1840 = vrot.lane.b32.xlu0 %v1562, 64
    %v1841 = vpop.permute.xlu0 %1840
    %v1845 = vsel %vm749, %v1830, 0
    %v1848 = vsel %vm749, %v1831, 0
    %v1851 = vsel %vm749, %v1832, 0
    %v1853 = vsel %vm834, %v1841, 0
    %1855 = vmatprep.subr.mxu0 0.0
    %1856 = vmatpush1.msra.mxu0 %v1837
    %1857 = vmatprep.subr.mxu0 0.0
    %1858 = vmatpush1.msra.mxu0 %v1839
    %1859 = vmatprep.subr.mxu0 0.0
    %1860 = vmatpush1.msra.mxu0 %v1853
    %1861 = vmatprep.subr.mxu0 0.0
    %1862 = vmatpush1.msra.mxu0 0.0
    %1863 = vmatprep.subr.mxu0 0.0
    %1864 = vmatpush1.msra.mxu0 0.0
    %1865 = vmatprep.subr.mxu0 0.0
    %1866 = vmatpush1.msra.mxu0 0.0
    %1867 = vmatprep.subr.mxu0 0.0
    %1868 = vmatpush1.msra.mxu0 0.0
    %1869 = vmatprep.subr.mxu0 0.0
    %1870 = vmatpush1.msra.mxu0 0.0
    %1871 = vmatprep.subr.mxu0 0.0
    %1872 = vmatpush1.msra.mxu0 0.0
    %1873 = vmatprep.subr.mxu0 0.0
    %1874 = vmatpush1.msra.mxu0 0.0
    %1875 = vmatprep.subr.mxu0 0.0
    %1876 = vmatpush1.msra.mxu0 0.0
    %1877 = vmatprep.subr.mxu0 0.0
    %1878 = vmatpush1.msra.mxu0 0.0
    %1879 = vmatprep.subr.mxu0 0.0
    %1880 = vmatpush1.msra.mxu0 0.0
    %1881 = vmatprep.subr.mxu0 0.0
    %1882 = vmatpush1.msra.mxu0 0.0
    %1883 = vmatprep.subr.mxu0 0.0
    %1884 = vmatpush1.msra.mxu0 0.0
    %1885 = vmatprep.subr.mxu0 0.0
    %1886 = vmatpush1.msra.mxu0 0.0
    %1887 = vmatprep.subr.mxu0 0.0
    %1888 = vmatpush1.msra.mxu0 0.0
    %1889 = vmatprep.subr.mxu0 0.0
    %1890 = vmatpush1.msra.mxu0 0.0
    %1891 = vmatprep.subr.mxu0 0.0
    %1892 = vmatpush1.msra.mxu0 0.0
    %1893 = vmatprep.subr.mxu0 0.0
    %1894 = vmatpush1.msra.mxu0 0.0
    %1895 = vmatprep.subr.mxu0 0.0
    %1896 = vmatpush1.msra.mxu0 0.0
    %1897 = vmatprep.subr.mxu0 0.0
    %1898 = vmatpush1.msra.mxu0 0.0
    %1899 = vmatprep.subr.mxu0 0.0
    %1900 = vmatpush1.msra.mxu0 0.0
    %1901 = vmatprep.subr.mxu0 0.0
    %1902 = vmatpush1.msra.mxu0 0.0
    %1903 = vmatprep.subr.mxu0 0.0
    %1904 = vmatpush1.msra.mxu0 0.0
    %1905 = vmatprep.subr.mxu0 0.0
    %1906 = vmatpush1.msra.mxu0 0.0
    %1907 = vmatprep.subr.mxu0 0.0
    %1908 = vmatpush1.msra.mxu0 0.0
    %1909 = vmatprep.subr.mxu0 0.0
    %1910 = vmatpush1.msra.mxu0 0.0
    %1911 = vmatprep.subr.mxu0 0.0
    %1912 = vmatpush1.msra.mxu0 0.0
    %1913 = vmatprep.subr.mxu0 0.0
    %1914 = vmatpush1.msra.mxu0 0.0
    %1915 = vmatprep.subr.mxu0 0.0
    %1916 = vmatpush1.msra.mxu0 0.0
    %1917 = vmatprep.subr.mxu0 0.0
    %1918 = vmatpush1.msra.mxu0 0.0
    %1919 = vmatprep.mubr.f32.mxu0 0.0
    %1920 = vmatmul.mubr.f32.gmra.mrb[0].mxu0 %v1845
    %v1921 = vpop.f32.mrb[0].mxu0
    %v1922 = vadd.f32 0.0, %v1921
    %v1923 = vpop.f32.mrb[0].mxu0
    %1924 = vmatprep.mubr.f32.mxu0 0.0
    %1925 = vmatmul.mubr.f32.gmra.mrb[0].mxu0 %v1848
    %v1926 = vpop.f32.mrb[0].mxu0
    %v1927 = vadd.f32 0.0, %v1926
    %v1928 = vpop.f32.mrb[0].mxu0
    %1929 = vmatprep.mubr.f32.mxu0 0.0
    %1930 = vmatmul.mubr.f32.gmra.mrb[0].mxu0 %v1851
    %v1931 = vpop.f32.mrb[0].mxu0
    %v1932 = vadd.f32 0.0, %v1931
    %v1933 = vpop.f32.mrb[0].mxu0
    %1934 = vdwg.mxu0
    %1935 = vrot.lane.b32.xlu0 %v1569, 64
    %v1936 = vpop.permute.xlu0 %1935
    %1937 = vrot.lane.b32.xlu0 %v1571, 64
    %v1938 = vpop.permute.xlu0 %1937
    %1939 = vrot.lane.b32.xlu0 %v1573, 64
    %v1940 = vpop.permute.xlu0 %1939
    %v1944 = vsel %vm749, %v1833, 0
    %v1947 = vsel %vm749, %v1834, 0
    %v1950 = vsel %vm749, %v1835, 0
    %v1952 = vsel %vm834, %v1940, 0
    %1954 = vmatprep.subr.mxu0 0.0
    %1955 = vmatpush1.msra.mxu0 %v1936
    %1956 = vmatprep.subr.mxu0 0.0
    %1957 = vmatpush1.msra.mxu0 %v1938
    %1958 = vmatprep.subr.mxu0 0.0
    %1959 = vmatpush1.msra.mxu0 %v1952
    %1960 = vmatprep.subr.mxu0 0.0
    %1961 = vmatpush1.msra.mxu0 0.0
    %1962 = vmatprep.subr.mxu0 0.0
    %1963 = vmatpush1.msra.mxu0 0.0
    %1964 = vmatprep.subr.mxu0 0.0
    %1965 = vmatpush1.msra.mxu0 0.0
    %1966 = vmatprep.subr.mxu0 0.0
    %1967 = vmatpush1.msra.mxu0 0.0
    %1968 = vmatprep.subr.mxu0 0.0
    %1969 = vmatpush1.msra.mxu0 0.0
    %1970 = vmatprep.subr.mxu0 0.0
    %1971 = vmatpush1.msra.mxu0 0.0
    %1972 = vmatprep.subr.mxu0 0.0
    %1973 = vmatpush1.msra.mxu0 0.0
    %1974 = vmatprep.subr.mxu0 0.0
    %1975 = vmatpush1.msra.mxu0 0.0
    %1976 = vmatprep.subr.mxu0 0.0
    %1977 = vmatpush1.msra.mxu0 0.0
    %1978 = vmatprep.subr.mxu0 0.0
    %1979 = vmatpush1.msra.mxu0 0.0
    %1980 = vmatprep.subr.mxu0 0.0
    %1981 = vmatpush1.msra.mxu0 0.0
    %1982 = vmatprep.subr.mxu0 0.0
    %1983 = vmatpush1.msra.mxu0 0.0
    %1984 = vmatprep.subr.mxu0 0.0
    %1985 = vmatpush1.msra.mxu0 0.0
    %1986 = vmatprep.subr.mxu0 0.0
    %1987 = vmatpush1.msra.mxu0 0.0
    %1988 = vmatprep.subr.mxu0 0.0
    %1989 = vmatpush1.msra.mxu0 0.0
    %1990 = vmatprep.subr.mxu0 0.0
    %1991 = vmatpush1.msra.mxu0 0.0
    %1992 = vmatprep.subr.mxu0 0.0
    %1993 = vmatpush1.msra.mxu0 0.0
    %1994 = vmatprep.subr.mxu0 0.0
    %1995 = vmatpush1.msra.mxu0 0.0
    %1996 = vmatprep.subr.mxu0 0.0
    %1997 = vmatpush1.msra.mxu0 0.0
    %1998 = vmatprep.subr.mxu0 0.0
    %1999 = vmatpush1.msra.mxu0 0.0
    %2000 = vmatprep.subr.mxu0 0.0
    %2001 = vmatpush1.msra.mxu0 0.0
    %2002 = vmatprep.subr.mxu0 0.0
    %2003 = vmatpush1.msra.mxu0 0.0
    %2004 = vmatprep.subr.mxu0 0.0
    %2005 = vmatpush1.msra.mxu0 0.0
    %2006 = vmatprep.subr.mxu0 0.0
    %2007 = vmatpush1.msra.mxu0 0.0
    %2008 = vmatprep.subr.mxu0 0.0
    %2009 = vmatpush1.msra.mxu0 0.0
    %2010 = vmatprep.subr.mxu0 0.0
    %2011 = vmatpush1.msra.mxu0 0.0
    %2012 = vmatprep.subr.mxu0 0.0
    %2013 = vmatpush1.msra.mxu0 0.0
    %2014 = vmatprep.subr.mxu0 0.0
    %2015 = vmatpush1.msra.mxu0 0.0
    %2016 = vmatprep.subr.mxu0 0.0
    %2017 = vmatpush1.msra.mxu0 0.0
    %2018 = vmatprep.mubr.f32.mxu0 0.0
    %2019 = vmatmul.mubr.f32.gmra.mrb[0].mxu0 %v1944
    %v2020 = vpop.f32.mrb[0].mxu0
    %v2021 = vadd.f32 0.0, %v2020
    %v2022 = vpop.f32.mrb[0].mxu0
    %2023 = vmatprep.mubr.f32.mxu0 0.0
    %2024 = vmatmul.mubr.f32.gmra.mrb[0].mxu0 %v1947
    %v2025 = vpop.f32.mrb[0].mxu0
    %v2026 = vadd.f32 0.0, %v2025
    %v2027 = vpop.f32.mrb[0].mxu0
    %2028 = vmatprep.mubr.f32.mxu0 0.0
    %2029 = vmatmul.mubr.f32.gmra.mrb[0].mxu0 %v1950
    %v2030 = vpop.f32.mrb[0].mxu0
    %v2031 = vadd.f32 0.0, %v2030
    %v2032 = vpop.f32.mrb[0].mxu0
    %2033 = vdwg.mxu0
    %2037 = vrot.lane.b32.xlu0 %v2021, 16
    %v2038 = vpop.permute.xlu0 %2037
    %2039 = vrot.lane.b32.xlu0 %v2026, 16
    %v2040 = vpop.permute.xlu0 %2039
    %2041 = vrot.lane.b32.xlu0 %v2031, 16
    %v2042 = vpop.permute.xlu0 %2041
    %v2046 = vsel %vm558, %v1922, %v2038
    %v2047 = vsel %vm558, %v1927, %v2040
    %v2048 = vsel %vm558, %v1932, %v2042
    %v2050 = vlaneseq
    %v2051 = vshrl.u32 %v2050, 7
    %v2052 = vsub.s32 0, %v2051
    %v2053 = vrot.slane %v1451, %v2052
    %v2056 = vsel %vm177, %v2046, 0
    %v2059 = vsel %vm177, %v2047, 0
    %v2062 = vsel %vm177, %v2048, 0
    %2064 = vmatprep.subr.mxu0 0.0
    %2065 = vmatpush1.msra.mxu0 %v1447
    %2066 = vmatprep.subr.mxu0 0.0
    %2067 = vmatpush1.msra.mxu0 %v1448
    %2068 = vmatprep.subr.mxu0 0.0
    %2069 = vmatpush1.msra.mxu0 %v1449
    %2070 = vmatprep.subr.mxu0 0.0
    %2071 = vmatpush1.msra.mxu0 %v1450
    %2072 = vmatprep.subr.mxu0 0.0
    %2073 = vmatpush1.msra.mxu0 0.0
    %2074 = vmatprep.subr.mxu0 0.0
    %2075 = vmatpush1.msra.mxu0 0.0
    %2076 = vmatprep.subr.mxu0 0.0
    %2077 = vmatpush1.msra.mxu0 0.0
    %2078 = vmatprep.subr.mxu0 0.0
    %2079 = vmatpush1.msra.mxu0 0.0
    %2080 = vmatprep.subr.mxu0 0.0
    %2081 = vmatpush1.msra.mxu0 0.0
    %2082 = vmatprep.subr.mxu0 0.0
    %2083 = vmatpush1.msra.mxu0 0.0
    %2084 = vmatprep.subr.mxu0 0.0
    %2085 = vmatpush1.msra.mxu0 0.0
    %2086 = vmatprep.subr.mxu0 0.0
    %2087 = vmatpush1.msra.mxu0 0.0
    %2088 = vmatprep.subr.mxu0 0.0
    %2089 = vmatpush1.msra.mxu0 0.0
    %2090 = vmatprep.subr.mxu0 0.0
    %2091 = vmatpush1.msra.mxu0 0.0
    %2092 = vmatprep.subr.mxu0 0.0
    %2093 = vmatpush1.msra.mxu0 0.0
    %2094 = vmatprep.subr.mxu0 0.0
    %2095 = vmatpush1.msra.mxu0 0.0
    %2096 = vmatprep.subr.mxu0 0.0
    %2097 = vmatpush1.msra.mxu0 0.0
    %2098 = vmatprep.subr.mxu0 0.0
    %2099 = vmatpush1.msra.mxu0 0.0
    %2100 = vmatprep.subr.mxu0 0.0
    %2101 = vmatpush1.msra.mxu0 0.0
    %2102 = vmatprep.subr.mxu0 0.0
    %2103 = vmatpush1.msra.mxu0 0.0
    %2104 = vmatprep.subr.mxu0 0.0
    %2105 = vmatpush1.msra.mxu0 0.0
    %2106 = vmatprep.subr.mxu0 0.0
    %2107 = vmatpush1.msra.mxu0 0.0
    %2108 = vmatprep.subr.mxu0 0.0
    %2109 = vmatpush1.msra.mxu0 0.0
    %2110 = vmatprep.subr.mxu0 0.0
    %2111 = vmatpush1.msra.mxu0 0.0
    %2112 = vmatprep.subr.mxu0 0.0
    %2113 = vmatpush1.msra.mxu0 0.0
    %2114 = vmatprep.subr.mxu0 0.0
    %2115 = vmatpush1.msra.mxu0 0.0
    %2116 = vmatprep.subr.mxu0 0.0
    %2117 = vmatpush1.msra.mxu0 0.0
    %2118 = vmatprep.subr.mxu0 0.0
    %2119 = vmatpush1.msra.mxu0 0.0
    %2120 = vmatprep.subr.mxu0 0.0
    %2121 = vmatpush1.msra.mxu0 0.0
    %2122 = vmatprep.subr.mxu0 0.0
    %2123 = vmatpush1.msra.mxu0 0.0
    %2124 = vmatprep.subr.mxu0 0.0
    %2125 = vmatpush1.msra.mxu0 0.0
    %2126 = vmatprep.subr.mxu0 0.0
    %2127 = vmatpush1.msra.mxu0 0.0
    %2128 = vmatprep.mubr.f32.mxu0 0.0
    %2129 = vmatmul.mubr.f32.gmra.mrb[0].mxu0 %v2056
    %v2130 = vpop.f32.mrb[0].mxu0
    %v2131 = vadd.f32 %v2053, %v2130
    %v2132 = vpop.f32.mrb[0].mxu0
    %2133 = vmatprep.mubr.f32.mxu0 0.0
    %2134 = vmatmul.mubr.f32.gmra.mrb[0].mxu0 %v2059
    %v2135 = vpop.f32.mrb[0].mxu0
    %v2136 = vadd.f32 %v2053, %v2135
    %v2137 = vpop.f32.mrb[0].mxu0
    %2138 = vmatprep.mubr.f32.mxu0 0.0
    %2139 = vmatmul.mubr.f32.gmra.mrb[0].mxu0 %v2062
    %v2140 = vpop.f32.mrb[0].mxu0
    %v2141 = vadd.f32 %v2053, %v2140
    %v2142 = vpop.f32.mrb[0].mxu0
    %2143 = vdwg.mxu0
    %v2144 = vadd.f32 %v1439, %v2131
    %v2145 = vadd.f32 %v1440, %v2136
    %v2146 = vadd.f32 %v1441, %v2141
    %v2147 = vsel %vm177, %v2144, 0.0
    %2148 = vadd.xlane.f32.xlu0 %v2147
    %v2149 = vpop.xlane.xlu0 %2148
    %v2150 = vsel %vm177, %v2145, 0.0
    %2151 = vadd.xlane.f32.xlu0 %v2150
    %v2152 = vpop.xlane.xlu0 %2151
    %v2153 = vsel %vm1135, %v2146, 0.0
    %2154 = vadd.xlane.f32.xlu0 %v2153
    %v2155 = vpop.xlane.xlu0 %2154
    %v2156 = vmul.f32 %v2149, %v1139
    %v2157 = vmul.f32 %v2152, %v1139
    %v2158 = vmul.f32 %v2155, %v1139
    %v2159 = vsub.f32 %v2144, %v2156
    %v2160 = vsub.f32 %v2145, %v2157
    %v2161 = vsub.f32 %v2146, %v2158
    %v2162 = vmul.f32 %v2159, %v2159
    %v2163 = vmul.f32 %v2160, %v2160
    %v2164 = vmul.f32 %v2161, %v2161
    %v2165 = vsel %vm177, %v2162, 0.0
    %2166 = vadd.xlane.f32.xlu0 %v2165
    %v2167 = vpop.xlane.xlu0 %2166
    %v2168 = vsel %vm177, %v2163, 0.0
    %2169 = vadd.xlane.f32.xlu0 %v2168
    %v2170 = vpop.xlane.xlu0 %2169
    %v2171 = vsel %vm1135, %v2164, 0.0
    %2172 = vadd.xlane.f32.xlu0 %v2171
    %v2173 = vpop.xlane.xlu0 %2172
    %v2174 = vmul.f32 %v2167, %v1139
    %v2175 = vmul.f32 %v2170, %v1139
    %v2176 = vmul.f32 %v2173, %v1139
    %v2177 = vadd.f32 %v2174, 1e-05
    %v2178 = vadd.f32 %v2175, 1e-05
    %v2179 = vadd.f32 %v2176, 1e-05
    %v2180 = vrsqrt.pop %v2177
    %v2181 = vrsqrt.pop %v2178
    %v2182 = vrsqrt.pop %v2179
    %v2183 = vmul.f32 %v2159, %v2180
    %v2184 = vmul.f32 %v2160, %v2181
    %v2185 = vmul.f32 %v2161, %v2182
    %v2187 = vlaneseq
    %v2188 = vshrl.u32 %v2187, 7
    %v2189 = vsub.s32 0, %v2188
    %v2190 = vrot.slane %v1452, %v2189
    %v2192 = vmul.f32 %v2183, %v2190
    %v2193 = vmul.f32 %v2184, %v2190
    %v2194 = vmul.f32 %v2185, %v2190
    %v2196 = vlaneseq
    %v2197 = vshrl.u32 %v2196, 7
    %v2198 = vsub.s32 0, %v2197
    %v2199 = vrot.slane %v1453, %v2198
    %v2201 = vadd.f32 %v2192, %v2199
    %v2202 = vadd.f32 %v2193, %v2199
    %v2203 = vadd.f32 %v2194, %v2199
    %v2205 = vlaneseq
    %v2206 = vshrl.u32 %v2205, 7
    %v2207 = vsub.s32 0, %v2206
    %v2208 = vrot.slane %v1458, %v2207
    %v2211 = vsel %vm177, %v2201, 0
    %v2214 = vsel %vm177, %v2202, 0
    %v2217 = vsel %vm177, %v2203, 0
    %2219 = vmatprep.subr.mxu0 0.0
    %2220 = vmatpush1.msra.mxu0 %v1454
    %2221 = vmatprep.subr.mxu0 0.0
    %2222 = vmatpush1.msra.mxu0 %v1455
    %2223 = vmatprep.subr.mxu0 0.0
    %2224 = vmatpush1.msra.mxu0 %v1456
    %2225 = vmatprep.subr.mxu0 0.0
    %2226 = vmatpush1.msra.mxu0 %v1457
    %2227 = vmatprep.subr.mxu0 0.0
    %2228 = vmatpush1.msra.mxu0 0.0
    %2229 = vmatprep.subr.mxu0 0.0
    %2230 = vmatpush1.msra.mxu0 0.0
    %2231 = vmatprep.subr.mxu0 0.0
    %2232 = vmatpush1.msra.mxu0 0.0
    %2233 = vmatprep.subr.mxu0 0.0
    %2234 = vmatpush1.msra.mxu0 0.0
    %2235 = vmatprep.subr.mxu0 0.0
    %2236 = vmatpush1.msra.mxu0 0.0
    %2237 = vmatprep.subr.mxu0 0.0
    %2238 = vmatpush1.msra.mxu0 0.0
    %2239 = vmatprep.subr.mxu0 0.0
    %2240 = vmatpush1.msra.mxu0 0.0
    %2241 = vmatprep.subr.mxu0 0.0
    %2242 = vmatpush1.msra.mxu0 0.0
    %2243 = vmatprep.subr.mxu0 0.0
    %2244 = vmatpush1.msra.mxu0 0.0
    %2245 = vmatprep.subr.mxu0 0.0
    %2246 = vmatpush1.msra.mxu0 0.0
    %2247 = vmatprep.subr.mxu0 0.0
    %2248 = vmatpush1.msra.mxu0 0.0
    %2249 = vmatprep.subr.mxu0 0.0
    %2250 = vmatpush1.msra.mxu0 0.0
    %2251 = vmatprep.subr.mxu0 0.0
    %2252 = vmatpush1.msra.mxu0 0.0
    %2253 = vmatprep.subr.mxu0 0.0
    %2254 = vmatpush1.msra.mxu0 0.0
    %2255 = vmatprep.subr.mxu0 0.0
    %2256 = vmatpush1.msra.mxu0 0.0
    %2257 = vmatprep.subr.mxu0 0.0
    %2258 = vmatpush1.msra.mxu0 0.0
    %2259 = vmatprep.subr.mxu0 0.0
    %2260 = vmatpush1.msra.mxu0 0.0
    %2261 = vmatprep.subr.mxu0 0.0
    %2262 = vmatpush1.msra.mxu0 0.0
    %2263 = vmatprep.subr.mxu0 0.0
    %2264 = vmatpush1.msra.mxu0 0.0
    %2265 = vmatprep.subr.mxu0 0.0
    %2266 = vmatpush1.msra.mxu0 0.0
    %2267 = vmatprep.subr.mxu0 0.0
    %2268 = vmatpush1.msra.mxu0 0.0
    %2269 = vmatprep.subr.mxu0 0.0
    %2270 = vmatpush1.msra.mxu0 0.0
    %2271 = vmatprep.subr.mxu0 0.0
    %2272 = vmatpush1.msra.mxu0 0.0
    %2273 = vmatprep.subr.mxu0 0.0
    %2274 = vmatpush1.msra.mxu0 0.0
    %2275 = vmatprep.subr.mxu0 0.0
    %2276 = vmatpush1.msra.mxu0 0.0
    %2277 = vmatprep.subr.mxu0 0.0
    %2278 = vmatpush1.msra.mxu0 0.0
    %2279 = vmatprep.subr.mxu0 0.0
    %2280 = vmatpush1.msra.mxu0 0.0
    %2281 = vmatprep.subr.mxu0 0.0
    %2282 = vmatpush1.msra.mxu0 0.0
    %2283 = vmatprep.mubr.f32.mxu0 0.0
    %2284 = vmatmul.mubr.f32.gmra.mrb[0].mxu0 %v2211
    %v2285 = vpop.f32.mrb[0].mxu0
    %v2286 = vadd.f32 %v2208, %v2285
    %v2287 = vpop.f32.mrb[0].mxu0
    %2288 = vmatprep.mubr.f32.mxu0 0.0
    %2289 = vmatmul.mubr.f32.gmra.mrb[0].mxu0 %v2214
    %v2290 = vpop.f32.mrb[0].mxu0
    %v2291 = vadd.f32 %v2208, %v2290
    %v2292 = vpop.f32.mrb[0].mxu0
    %2293 = vmatprep.mubr.f32.mxu0 0.0
    %2294 = vmatmul.mubr.f32.gmra.mrb[0].mxu0 %v2217
    %v2295 = vpop.f32.mrb[0].mxu0
    %v2296 = vadd.f32 %v2208, %v2295
    %v2297 = vpop.f32.mrb[0].mxu0
    %2298 = vdwg.mxu0
    %v2299 = vmax.f32 %v2286, 0.0
    %v2300 = vmax.f32 %v2291, 0.0
    %v2301 = vmax.f32 %v2296, 0.0
    %v2303 = vlaneseq
    %v2304 = vshrl.u32 %v2303, 7
    %v2305 = vsub.s32 0, %v2304
    %v2306 = vrot.slane %v1467, %v2305
    %v2309 = vsel %vm1292, %v2299, 0
    %v2312 = vsel %vm1292, %v2300, 0
    %v2315 = vsel %vm1292, %v2301, 0
    %2317 = vmatprep.subr.mxu0 0.0
    %2318 = vmatpush1.msra.mxu0 %v1459
    %2319 = vmatprep.subr.mxu0 0.0
    %2320 = vmatpush1.msra.mxu0 %v1460
    %2321 = vmatprep.subr.mxu0 0.0
    %2322 = vmatpush1.msra.mxu0 %v1461
    %2323 = vmatprep.subr.mxu0 0.0
    %2324 = vmatpush1.msra.mxu0 %v1462
    %2325 = vmatprep.subr.mxu0 0.0
    %2326 = vmatpush1.msra.mxu0 %v1463
    %2327 = vmatprep.subr.mxu0 0.0
    %2328 = vmatpush1.msra.mxu0 %v1464
    %2329 = vmatprep.subr.mxu0 0.0
    %2330 = vmatpush1.msra.mxu0 %v1465
    %2331 = vmatprep.subr.mxu0 0.0
    %2332 = vmatpush1.msra.mxu0 %v1466
    %2333 = vmatprep.subr.mxu0 0.0
    %2334 = vmatpush1.msra.mxu0 0.0
    %2335 = vmatprep.subr.mxu0 0.0
    %2336 = vmatpush1.msra.mxu0 0.0
    %2337 = vmatprep.subr.mxu0 0.0
    %2338 = vmatpush1.msra.mxu0 0.0
    %2339 = vmatprep.subr.mxu0 0.0
    %2340 = vmatpush1.msra.mxu0 0.0
    %2341 = vmatprep.subr.mxu0 0.0
    %2342 = vmatpush1.msra.mxu0 0.0
    %2343 = vmatprep.subr.mxu0 0.0
    %2344 = vmatpush1.msra.mxu0 0.0
    %2345 = vmatprep.subr.mxu0 0.0
    %2346 = vmatpush1.msra.mxu0 0.0
    %2347 = vmatprep.subr.mxu0 0.0
    %2348 = vmatpush1.msra.mxu0 0.0
    %2349 = vmatprep.subr.mxu0 0.0
    %2350 = vmatpush1.msra.mxu0 0.0
    %2351 = vmatprep.subr.mxu0 0.0
    %2352 = vmatpush1.msra.mxu0 0.0
    %2353 = vmatprep.subr.mxu0 0.0
    %2354 = vmatpush1.msra.mxu0 0.0
    %2355 = vmatprep.subr.mxu0 0.0
    %2356 = vmatpush1.msra.mxu0 0.0
    %2357 = vmatprep.subr.mxu0 0.0
    %2358 = vmatpush1.msra.mxu0 0.0
    %2359 = vmatprep.subr.mxu0 0.0
    %2360 = vmatpush1.msra.mxu0 0.0
    %2361 = vmatprep.subr.mxu0 0.0
    %2362 = vmatpush1.msra.mxu0 0.0
    %2363 = vmatprep.subr.mxu0 0.0
    %2364 = vmatpush1.msra.mxu0 0.0
    %2365 = vmatprep.subr.mxu0 0.0
    %2366 = vmatpush1.msra.mxu0 0.0
    %2367 = vmatprep.subr.mxu0 0.0
    %2368 = vmatpush1.msra.mxu0 0.0
    %2369 = vmatprep.subr.mxu0 0.0
    %2370 = vmatpush1.msra.mxu0 0.0
    %2371 = vmatprep.subr.mxu0 0.0
    %2372 = vmatpush1.msra.mxu0 0.0
    %2373 = vmatprep.subr.mxu0 0.0
    %2374 = vmatpush1.msra.mxu0 0.0
    %2375 = vmatprep.subr.mxu0 0.0
    %2376 = vmatpush1.msra.mxu0 0.0
    %2377 = vmatprep.subr.mxu0 0.0
    %2378 = vmatpush1.msra.mxu0 0.0
    %2379 = vmatprep.subr.mxu0 0.0
    %2380 = vmatpush1.msra.mxu0 0.0
    %2381 = vmatprep.mubr.f32.mxu0 0.0
    %2382 = vmatmul.mubr.f32.gmra.mrb[0].mxu0 %v2309
    %v2383 = vpop.f32.mrb[0].mxu0
    %v2384 = vadd.f32 %v2306, %v2383
    %v2385 = vpop.f32.mrb[0].mxu0
    %2386 = vmatprep.mubr.f32.mxu0 0.0
    %2387 = vmatmul.mubr.f32.gmra.mrb[0].mxu0 %v2312
    %v2388 = vpop.f32.mrb[0].mxu0
    %v2389 = vadd.f32 %v2306, %v2388
    %v2390 = vpop.f32.mrb[0].mxu0
    %2391 = vmatprep.mubr.f32.mxu0 0.0
    %2392 = vmatmul.mubr.f32.gmra.mrb[0].mxu0 %v2315
    %v2393 = vpop.f32.mrb[0].mxu0
    %v2394 = vadd.f32 %v2306, %v2393
    %v2395 = vpop.f32.mrb[0].mxu0
    %2396 = vdwg.mxu0
    %v2397 = vadd.f32 %v2201, %v2384
    %v2398 = vadd.f32 %v2202, %v2389
    %v2399 = vadd.f32 %v2203, %v2394
    %v2400 = vsel %vm177, %v2397, 0.0
    %2401 = vadd.xlane.f32.xlu0 %v2400
    %v2402 = vpop.xlane.xlu0 %2401
    %v2403 = vsel %vm177, %v2398, 0.0
    %2404 = vadd.xlane.f32.xlu0 %v2403
    %v2405 = vpop.xlane.xlu0 %2404
    %v2406 = vsel %vm1135, %v2399, 0.0
    %2407 = vadd.xlane.f32.xlu0 %v2406
    %v2408 = vpop.xlane.xlu0 %2407
    %v2409 = vmul.f32 %v2402, %v1139
    %v2410 = vmul.f32 %v2405, %v1139
    %v2411 = vmul.f32 %v2408, %v1139
    %v2412 = vsub.f32 %v2397, %v2409
    %v2413 = vsub.f32 %v2398, %v2410
    %v2414 = vsub.f32 %v2399, %v2411
    %v2415 = vmul.f32 %v2412, %v2412
    %v2416 = vmul.f32 %v2413, %v2413
    %v2417 = vmul.f32 %v2414, %v2414
    %v2418 = vsel %vm177, %v2415, 0.0
    %2419 = vadd.xlane.f32.xlu0 %v2418
    %v2420 = vpop.xlane.xlu0 %2419
    %v2421 = vsel %vm177, %v2416, 0.0
    %2422 = vadd.xlane.f32.xlu0 %v2421
    %v2423 = vpop.xlane.xlu0 %2422
    %v2424 = vsel %vm1135, %v2417, 0.0
    %2425 = vadd.xlane.f32.xlu0 %v2424
    %v2426 = vpop.xlane.xlu0 %2425
    %v2427 = vmul.f32 %v2420, %v1139
    %v2428 = vmul.f32 %v2423, %v1139
    %v2429 = vmul.f32 %v2426, %v1139
    %v2430 = vadd.f32 %v2427, 1e-05
    %v2431 = vadd.f32 %v2428, 1e-05
    %v2432 = vadd.f32 %v2429, 1e-05
    %v2433 = vrsqrt.pop %v2430
    %v2434 = vrsqrt.pop %v2431
    %v2435 = vrsqrt.pop %v2432
    %v2436 = vmul.f32 %v2412, %v2433
    %v2437 = vmul.f32 %v2413, %v2434
    %v2438 = vmul.f32 %v2414, %v2435
    %v2440 = vlaneseq
    %v2441 = vshrl.u32 %v2440, 7
    %v2442 = vsub.s32 0, %v2441
    %v2443 = vrot.slane %v1468, %v2442
    %v2445 = vmul.f32 %v2436, %v2443
    %v2446 = vmul.f32 %v2437, %v2443
    %v2447 = vmul.f32 %v2438, %v2443
    %v2449 = vlaneseq
    %v2450 = vshrl.u32 %v2449, 7
    %v2451 = vsub.s32 0, %v2450
    %v2452 = vrot.slane %v1469, %v2451
    %v2454 = vadd.f32 %v2445, %v2452
    %v2455 = vadd.f32 %v2446, %v2452
    %v2456 = vadd.f32 %v2447, %v2452
    %v2457 = vld [vmem:[%s21] sm:$0x3]
    %v2459 = vsel %vm749, %v2457, 0
    %v2462 = vsel %vm834, %v2456, 0
    %2464 = vmatprep.subr.mxu0 0.0
    %2465 = vmatpush1.msra.mxu0 %v2454
    %2466 = vmatprep.subr.mxu0 0.0
    %2467 = vmatpush1.msra.mxu0 %v2455
    %2468 = vmatprep.subr.mxu0 0.0
    %2469 = vmatpush1.msra.mxu0 %v2462
    %2470 = vmatprep.subr.mxu0 0.0
    %2471 = vmatpush1.msra.mxu0 0.0
    %2472 = vmatprep.subr.mxu0 0.0
    %2473 = vmatpush1.msra.mxu0 0.0
    %2474 = vmatprep.subr.mxu0 0.0
    %2475 = vmatpush1.msra.mxu0 0.0
    %2476 = vmatprep.subr.mxu0 0.0
    %2477 = vmatpush1.msra.mxu0 0.0
    %2478 = vmatprep.subr.mxu0 0.0
    %2479 = vmatpush1.msra.mxu0 0.0
    %2480 = vmatprep.subr.mxu0 0.0
    %2481 = vmatpush1.msra.mxu0 0.0
    %2482 = vmatprep.subr.mxu0 0.0
    %2483 = vmatpush1.msra.mxu0 0.0
    %2484 = vmatprep.subr.mxu0 0.0
    %2485 = vmatpush1.msra.mxu0 0.0
    %2486 = vmatprep.subr.mxu0 0.0
    %2487 = vmatpush1.msra.mxu0 0.0
    %2488 = vmatprep.subr.mxu0 0.0
    %2489 = vmatpush1.msra.mxu0 0.0
    %2490 = vmatprep.subr.mxu0 0.0
    %2491 = vmatpush1.msra.mxu0 0.0
    %2492 = vmatprep.subr.mxu0 0.0
    %2493 = vmatpush1.msra.mxu0 0.0
    %2494 = vmatprep.subr.mxu0 0.0
    %2495 = vmatpush1.msra.mxu0 0.0
    %2496 = vmatprep.subr.mxu0 0.0
    %2497 = vmatpush1.msra.mxu0 0.0
    %2498 = vmatprep.subr.mxu0 0.0
    %2499 = vmatpush1.msra.mxu0 0.0
    %2500 = vmatprep.subr.mxu0 0.0
    %2501 = vmatpush1.msra.mxu0 0.0
    %2502 = vmatprep.subr.mxu0 0.0
    %2503 = vmatpush1.msra.mxu0 0.0
    %2504 = vmatprep.subr.mxu0 0.0
    %2505 = vmatpush1.msra.mxu0 0.0
    %2506 = vmatprep.subr.mxu0 0.0
    %2507 = vmatpush1.msra.mxu0 0.0
    %2508 = vmatprep.subr.mxu0 0.0
    %2509 = vmatpush1.msra.mxu0 0.0
    %2510 = vmatprep.subr.mxu0 0.0
    %2511 = vmatpush1.msra.mxu0 0.0
    %2512 = vmatprep.subr.mxu0 0.0
    %2513 = vmatpush1.msra.mxu0 0.0
    %2514 = vmatprep.subr.mxu0 0.0
    %2515 = vmatpush1.msra.mxu0 0.0
    %2516 = vmatprep.subr.mxu0 0.0
    %2517 = vmatpush1.msra.mxu0 0.0
    %2518 = vmatprep.subr.mxu0 0.0
    %2519 = vmatpush1.msra.mxu0 0.0
    %2520 = vmatprep.subr.mxu0 0.0
    %2521 = vmatpush1.msra.mxu0 0.0
    %2522 = vmatprep.subr.mxu0 0.0
    %2523 = vmatpush1.msra.mxu0 0.0
    %2524 = vmatprep.subr.mxu0 0.0
    %2525 = vmatpush1.msra.mxu0 0.0
    %2526 = vmatprep.subr.mxu0 0.0
    %2527 = vmatpush1.msra.mxu0 0.0
    %2528 = vmatprep.mubr.f32.mxu0 0.0
    %2529 = vmatmul.mubr.f32.gmra.mrb[0].mxu0 %v2459
    %v2530 = vpop.f32.mrb[0].mxu0
    %v2531 = vadd.f32 0.0, %v2530
    %v2532 = vpop.f32.mrb[0].mxu0
    %2533 = vdwg.mxu0
    %v2534 = vld [vmem:[%s23] sm:$0xff]
    %v2535 = vld [vmem:[%s23 + $0x8] sm:$0xff]
    %v2536 = vld [vmem:[%s23 + $0x10] sm:$0xff]
    %v2537 = vld [vmem:[%s23 + $0x18] sm:$0xff]
    %v2538 = vld [vmem:[%s25] sm:$0x1]
    %v2540 = vlaneseq
    %v2541 = vshrl.u32 %v2540, 7
    %v2542 = vsub.s32 0, %v2541
    %v2543 = vrot.slane %v2538, %v2542
    %v2546 = vsel %vm177, %v2531, 0
    %2548 = vmatprep.subr.mxu0 0.0
    %2549 = vmatpush1.msra.mxu0 %v2534
    %2550 = vmatprep.subr.mxu0 0.0
    %2551 = vmatpush1.msra.mxu0 %v2535
    %2552 = vmatprep.subr.mxu0 0.0
    %2553 = vmatpush1.msra.mxu0 %v2536
    %2554 = vmatprep.subr.mxu0 0.0
    %2555 = vmatpush1.msra.mxu0 %v2537
    %2556 = vmatprep.subr.mxu0 0.0
    %2557 = vmatpush1.msra.mxu0 0.0
    %2558 = vmatprep.subr.mxu0 0.0
    %2559 = vmatpush1.msra.mxu0 0.0
    %2560 = vmatprep.subr.mxu0 0.0
    %2561 = vmatpush1.msra.mxu0 0.0
    %2562 = vmatprep.subr.mxu0 0.0
    %2563 = vmatpush1.msra.mxu0 0.0
    %2564 = vmatprep.subr.mxu0 0.0
    %2565 = vmatpush1.msra.mxu0 0.0
    %2566 = vmatprep.subr.mxu0 0.0
    %2567 = vmatpush1.msra.mxu0 0.0
    %2568 = vmatprep.subr.mxu0 0.0
    %2569 = vmatpush1.msra.mxu0 0.0
    %2570 = vmatprep.subr.mxu0 0.0
    %2571 = vmatpush1.msra.mxu0 0.0
    %2572 = vmatprep.subr.mxu0 0.0
    %2573 = vmatpush1.msra.mxu0 0.0
    %2574 = vmatprep.subr.mxu0 0.0
    %2575 = vmatpush1.msra.mxu0 0.0
    %2576 = vmatprep.subr.mxu0 0.0
    %2577 = vmatpush1.msra.mxu0 0.0
    %2578 = vmatprep.subr.mxu0 0.0
    %2579 = vmatpush1.msra.mxu0 0.0
    %2580 = vmatprep.subr.mxu0 0.0
    %2581 = vmatpush1.msra.mxu0 0.0
    %2582 = vmatprep.subr.mxu0 0.0
    %2583 = vmatpush1.msra.mxu0 0.0
    %2584 = vmatprep.subr.mxu0 0.0
    %2585 = vmatpush1.msra.mxu0 0.0
    %2586 = vmatprep.subr.mxu0 0.0
    %2587 = vmatpush1.msra.mxu0 0.0
    %2588 = vmatprep.subr.mxu0 0.0
    %2589 = vmatpush1.msra.mxu0 0.0
    %2590 = vmatprep.subr.mxu0 0.0
    %2591 = vmatpush1.msra.mxu0 0.0
    %2592 = vmatprep.subr.mxu0 0.0
    %2593 = vmatpush1.msra.mxu0 0.0
    %2594 = vmatprep.subr.mxu0 0.0
    %2595 = vmatpush1.msra.mxu0 0.0
    %2596 = vmatprep.subr.mxu0 0.0
    %2597 = vmatpush1.msra.mxu0 0.0
    %2598 = vmatprep.subr.mxu0 0.0
    %2599 = vmatpush1.msra.mxu0 0.0
    %2600 = vmatprep.subr.mxu0 0.0
    %2601 = vmatpush1.msra.mxu0 0.0
    %2602 = vmatprep.subr.mxu0 0.0
    %2603 = vmatpush1.msra.mxu0 0.0
    %2604 = vmatprep.subr.mxu0 0.0
    %2605 = vmatpush1.msra.mxu0 0.0
    %2606 = vmatprep.subr.mxu0 0.0
    %2607 = vmatpush1.msra.mxu0 0.0
    %2608 = vmatprep.subr.mxu0 0.0
    %2609 = vmatpush1.msra.mxu0 0.0
    %2610 = vmatprep.subr.mxu0 0.0
    %2611 = vmatpush1.msra.mxu0 0.0
    %2612 = vmatprep.mubr.f32.mxu0 0.0
    %2613 = vmatmul.mubr.f32.gmra.mrb[0].mxu0 %v2546
    %v2614 = vpop.f32.mrb[0].mxu0
    %v2615 = vadd.f32 %v2543, %v2614
    %v2616 = vpop.f32.mrb[0].mxu0
    %2617 = vdwg.mxu0
    %2618 = vst [vmem:[#allocation2] sm:$0x3] %v2615
    %v2619 = vsub.f32 0.0, %v2615
    %v2620 = vmul.f32 %v2619, 1.442695
    %v2621 = vpow.pop %v2620
    %v2622 = vadd.f32 %v2621, 1.0
    %v2623 = vrcp.pop %v2622
    %v2624 = vmul.f32 1.0, %v2623
    %v2625 = vld [vmem:[%s27] sm:$0xff]
    %v2626 = vld [vmem:[%s27 + $0x8] sm:$0xff]
    %v2627 = vld [vmem:[%s27 + $0x10] sm:$0xff]
    %v2628 = vld [vmem:[%s27 + $0x18] sm:$0xff]
    %v2629 = vld [vmem:[%s27 + $0x20] sm:$0xff]
    %v2630 = vld [vmem:[%s27 + $0x28] sm:$0xff]
    %v2631 = vld [vmem:[%s27 + $0x30] sm:$0xff]
    %v2632 = vld [vmem:[%s27 + $0x38] sm:$0xff]
    %v2633 = vld [vmem:[%s27 + $0x40] sm:$0xff]
    %v2634 = vld [vmem:[%s27 + $0x48] sm:$0xff]
    %v2635 = vld [vmem:[%s27 + $0x50] sm:$0xff]
    %v2636 = vld [vmem:[%s27 + $0x58] sm:$0xff]
    %v2637 = vld [vmem:[%s27 + $0x60] sm:$0xff]
    %v2638 = vld [vmem:[%s27 + $0x68] sm:$0xff]
    %v2639 = vld [vmem:[%s27 + $0x70] sm:$0xff]
    %v2640 = vld [vmem:[%s27 + $0x78] sm:$0xff]
    %2641 = vmatprep.subr.mxu0 0.0
    %2642 = vmatpush1.msra.mxu0 %v2625
    %2643 = vmatprep.subr.mxu0 0.0
    %2644 = vmatpush1.msra.mxu0 %v2626
    %2645 = vmatprep.subr.mxu0 0.0
    %2646 = vmatpush1.msra.mxu0 %v2627
    %2647 = vmatprep.subr.mxu0 0.0
    %2648 = vmatpush1.msra.mxu0 %v2628
    %2649 = vmatprep.subr.mxu0 0.0
    %2650 = vmatpush1.msra.mxu0 %v2629
    %2651 = vmatprep.subr.mxu0 0.0
    %2652 = vmatpush1.msra.mxu0 %v2630
    %2653 = vmatprep.subr.mxu0 0.0
    %2654 = vmatpush1.msra.mxu0 %v2631
    %2655 = vmatprep.subr.mxu0 0.0
    %2656 = vmatpush1.msra.mxu0 %v2632
    %2657 = vmatprep.subr.mxu0 0.0
    %2658 = vmatpush1.msra.mxu0 %v2633
    %2659 = vmatprep.subr.mxu0 0.0
    %2660 = vmatpush1.msra.mxu0 %v2634
    %2661 = vmatprep.subr.mxu0 0.0
    %2662 = vmatpush1.msra.mxu0 %v2635
    %2663 = vmatprep.subr.mxu0 0.0
    %2664 = vmatpush1.msra.mxu0 %v2636
    %2665 = vmatprep.subr.mxu0 0.0
    %2666 = vmatpush1.msra.mxu0 %v2637
    %2667 = vmatprep.subr.mxu0 0.0
    %2668 = vmatpush1.msra.mxu0 %v2638
    %2669 = vmatprep.subr.mxu0 0.0
    %2670 = vmatpush1.msra.mxu0 %v2639
    %2671 = vmatprep.subr.mxu0 0.0
    %2672 = vmatpush1.msra.mxu0 %v2640
    %2673 = vmatprep.subr.mxu0 0.0
    %2674 = vmatpush1.msra.mxu0 0.0
    %2675 = vmatprep.subr.mxu0 0.0
    %2676 = vmatpush1.msra.mxu0 0.0
    %2677 = vmatprep.subr.mxu0 0.0
    %2678 = vmatpush1.msra.mxu0 0.0
    %2679 = vmatprep.subr.mxu0 0.0
    %2680 = vmatpush1.msra.mxu0 0.0
    %2681 = vmatprep.subr.mxu0 0.0
    %2682 = vmatpush1.msra.mxu0 0.0
    %2683 = vmatprep.subr.mxu0 0.0
    %2684 = vmatpush1.msra.mxu0 0.0
    %2685 = vmatprep.subr.mxu0 0.0
    %2686 = vmatpush1.msra.mxu0 0.0
    %2687 = vmatprep.subr.mxu0 0.0
    %2688 = vmatpush1.msra.mxu0 0.0
    %2689 = vmatprep.subr.mxu0 0.0
    %2690 = vmatpush1.msra.mxu0 0.0
    %2691 = vmatprep.subr.mxu0 0.0
    %2692 = vmatpush1.msra.mxu0 0.0
    %2693 = vmatprep.subr.mxu0 0.0
    %2694 = vmatpush1.msra.mxu0 0.0
    %2695 = vmatprep.subr.mxu0 0.0
    %2696 = vmatpush1.msra.mxu0 0.0
    %2697 = vmatprep.subr.mxu0 0.0
    %2698 = vmatpush1.msra.mxu0 0.0
    %2699 = vmatprep.subr.mxu0 0.0
    %2700 = vmatpush1.msra.mxu0 0.0
    %2701 = vmatprep.subr.mxu0 0.0
    %2702 = vmatpush1.msra.mxu0 0.0
    %2703 = vmatprep.subr.mxu0 0.0
    %2704 = vmatpush1.msra.mxu0 0.0
    %2705 = vmatprep.mubr.f32.mxu0 0.0
    %2706 = vmatmul.mubr.f32.gmra.mrb[0].mxu0 %v2624
    %v2707 = vpop.f32.mrb[0].mxu0
    %v2708 = vadd.f32 0.0, %v2707
    %v2709 = vpop.f32.mrb[0].mxu0
    %2710 = vdwg.mxu0
    %v2711 = vmul.f32 %v2708, %v2624
    %vm2712 = vcmask 1041408
    %v2713 = vsel %vm2712, %v2711, 0.0
    %2714 = vadd.xlane.f32.xlu0 %v2713
    %v2715 = vpop.xlane.xlu0 %2714
    %v2716 = vrot.slane %v2715, 4
    %v2717 = vadd.f32 %v2715, %v2716
    %v2718 = vrot.slane %v2717, 2
    %v2719 = vadd.f32 %v2717, %v2718
    %v2720 = vrot.slane %v2719, 1
    %v2721 = vadd.f32 %v2719, %v2720
    %s2722 = vtos %v2721
    %v2723 = vstv %s2722
    %v2724 = vmul.f32 %v2723, 0.0005
    %vm2725 = vcmask 0
    %2726 = vst.msk [vmem:[#allocation4] sm:$0x1] %vm2725, %v2724
    // Predicated region
    $region154: #{raremed_forward.1} parent=1 // pred_check
      _
    $region155: #{raremed_forward.1} parent=1 // pred_check_branch
      %2728 = sbr.rel (0) target = $region157
    $region156: #{raremed_forward.1} parent=1 // pred_region
      %s2730 = ssub.s32 32, 32
      %2731 = vsyncadd [#allocation3], %s2730
      %s2733 = sshll.u32 [#allocation2], 4
      %s2734 = int_to_ptr.vmem [resolvable:$true] %s2733
      %2736 = dma.vmem_to_hbm [thread:$0]  %s2734, 32, %s77, [#allocation3]
    $region157: #{raremed_forward.1} parent=1 // pred_fallthru
      _
    // Predicated region
    $region158: #{raremed_forward.1} parent=1 // pred_check
      _
    $region159: #{raremed_forward.1} parent=1 // pred_check_branch
      %2738 = sbr.rel (0) target = $region161
    $region160: #{raremed_forward.1} parent=1 // pred_region
      %s2740 = ssub.s32 16, 16
      %2741 = vsyncadd [#allocation5], %s2740
      %s2743 = sshll.u32 [#allocation4], 4
      %s2744 = int_to_ptr.vmem [resolvable:$true] %s2743
      %2746 = dma.vmem_to_hbm [thread:$0]  %s2744, 16, %s79, [#allocation5]
    $region161: #{raremed_forward.1} parent=1 // pred_fallthru
      _
    // Predicated region
    $region162: #{raremed_forward.1} parent=1 // pred_check
      _
    $region163: #{raremed_forward.1} parent=1 // pred_check_branch
      %2748 = sbr.rel (0) target = $region165
    $region164: #{raremed_forward.1} parent=1 // pred_region
      %2749 = dma.done [#allocation3], 32
    $region165: #{raremed_forward.1} parent=1 // pred_fallthru
      _
    // Predicated region
    $region166: #{raremed_forward.1} parent=1 // pred_check
      _
    $region167: #{raremed_forward.1} parent=1 // pred_check_branch
      %2751 = sbr.rel (0) target = $region169
    $region168: #{raremed_forward.1} parent=1 // pred_region
      %2752 = dma.done [#allocation5], 16
    $region169: #{raremed_forward.1} parent=1 // pred_fallthru
      _
    %2753 = vsyncpa [#allocation3], 1
    %2754 = vsyncpa [#allocation5], 1

</llo_original>
